<compile_context>
chip_gen: v5e
topology: v5e:2x2
jax: 0.10.0
libtpu: 0.0.40
codegen_flags: <defaults>
</compile_context>

<pallas_src>
import functools

import jax
import jax.numpy as jnp
from jax.experimental import pallas as pl
from jax.experimental.pallas import tpu as pltpu

_GN_GROUPS = 8
_GN_EPS = 1e-5


# ------------------------------ Pallas kernel --------------------------------

def _conv3_fused_kernel(x_ref, wb0_ref, wb1_ref, wb2_ref, par_ref, pool_ref,
                        o_ref, xbuf, hbuf, ybuf, *, is_res):
    """Three fused (3x3 conv + bias + GroupNorm(8) + ReLU) layers, one sample.

    Activations live in the folded (rows=H, lanes=W*C) layout the whole time.
    """
    H = x_ref.shape[1]
    WCin = x_ref.shape[2]
    WC = o_ref.shape[2]

    pool = pool_ref[...]                                   # (WC, WC), hoisted

    def conv_gn_relu(inbuf, wb_ref, layer):
        # 3x3 conv == 3 row-shifted MXU matmuls against banded weights (the dx
        # taps and the W-direction zero padding are folded into the weights;
        # the H-direction zero padding is rows 0 / H+1 of `inbuf`).
        y = jnp.dot(inbuf[0:H, :], wb_ref[0],
                    preferred_element_type=jnp.float32)
        y = y + jnp.dot(inbuf[1:H + 1, :], wb_ref[1],
                        preferred_element_type=jnp.float32)
        y = y + jnp.dot(inbuf[2:H + 2, :], wb_ref[2],
                        preferred_element_type=jnp.float32)
        par = par_ref[layer]                               # (3, WC): b / g / be
        y = y + par[0:1, :]                                # bias

        # GroupNorm(8): two-pass, lane-dense. Column sums (sublane reduce),
        # then a group-pool matmul (pre-scaled by 1/count) broadcasts the
        # group statistics back to every (w, c) lane.
        mean = jnp.dot(jnp.sum(y, axis=0, keepdims=True), pool,
                       preferred_element_type=jnp.float32)
        d = y - mean
        var = jnp.dot(jnp.sum(d * d, axis=0, keepdims=True), pool,
                      preferred_element_type=jnp.float32)
        yn = d * jax.lax.rsqrt(var + _GN_EPS) * par[1:2, :] + par[2:3, :]
        return jnp.maximum(yn, 0.0)                        # ReLU

    def stage(buf, val, width):
        # Place a (H, width) activation into an H-padded VMEM buffer.
        zrow = jnp.zeros((1, width), jnp.float32)
        buf[0:1, :] = zrow
        buf[H + 1:H + 2, :] = zrow
        buf[1:H + 1, :] = val

    stage(xbuf, x_ref[0], WCin)
    h = conv_gn_relu(xbuf, wb0_ref, 0)        # main: conv1 + GN + ReLU
    stage(hbuf, h, WC)
    y = conv_gn_relu(hbuf, wb1_ref, 1)        # conv2 + GN + ReLU
    stage(ybuf, y, WC)
    y = conv_gn_relu(ybuf, wb2_ref, 2)        # conv3 + GN + ReLU
    if is_res:
        y = (h + y) * (1.0 / 1.414)           # residual + scale (multiply, not divide)
    o_ref[0] = y                              # single lane-dense (H, W*Cout) store


# --------------------------------- Wrapper ------------------------------------

def _banded_weights(w, W):
    """Torch-layout (Cout, Cin, 3, 3) -> (3, W*Cin, W*Cout) banded matrices.

    wb[dy][iw*Cin + ci, ow*Cout + co] = w[co, ci, dy, dx] with iw = ow + dx - 1;
    out-of-range taps are omitted, which implements zero padding along W.
    """
    Cout, Cin, KH, KW = w.shape
    k = jnp.transpose(w, (2, 3, 1, 0)).astype(jnp.float32)      # (KH, KW, Cin, Cout)
    iw = jnp.arange(W)
    shift = (iw[None, :, None] ==
             iw[None, None, :] + jnp.arange(KW)[:, None, None] - 1)
    shift = shift.astype(jnp.float32)                           # (KW, Win, Wout)
    wb = jnp.einsum('xio,kxce->kicoe', shift, k)                # (KH,Win,Cin,Wout,Cout)
    return wb.reshape(KH, W * Cin, W * Cout)


def conv3_forward(x, params, *, is_res=False):
    """Faithful to Conv3.forward. x: (N, H, W, Cin) f32 -> (N, H, W, Cout)."""
    N, H, W, Cin = x.shape
    Cout = params['w0'].shape[0]
    assert Cout % _GN_GROUPS == 0, "GroupNorm(8, C) needs C % 8 == 0"
    cg = Cout // _GN_GROUPS
    WC = W * Cout

    wb0 = _banded_weights(params['w0'], W)                      # (3, W*Cin, WC)
    wb1 = _banded_weights(params['w1'], W)                      # (3, WC, WC)
    wb2 = _banded_weights(params['w2'], W)                      # (3, WC, WC)

    def lane(v):                                                # (C,) -> (W*C,)
        return jnp.tile(v.astype(jnp.float32), (W,))

    par = jnp.stack([
        jnp.stack([lane(params['b0']), lane(params['g0']), lane(params['be0'])]),
        jnp.stack([lane(params['b1']), lane(params['g1']), lane(params['be1'])]),
        jnp.stack([lane(params['b2']), lane(params['g2']), lane(params['be2'])]),
    ])                                                          # (3, 3, WC)

    grp = jnp.tile(jnp.arange(Cout) // cg, (W,))                # lane -> group id
    pool = (grp[:, None] == grp[None, :]).astype(jnp.float32) / float(H * W * cg)

    x2 = x.reshape(N, H, W * Cin)                               # folded lanes (free)

    out = pl.pallas_call(
        functools.partial(_conv3_fused_kernel, is_res=is_res),
        out_shape=jax.ShapeDtypeStruct((N, H, WC), jnp.float32),
        grid=(N,),
        in_specs=[
            pl.BlockSpec((1, H, W * Cin), lambda n: (n, 0, 0)),
            pl.BlockSpec((3, W * Cin, WC), lambda n: (0, 0, 0)),
            pl.BlockSpec((3, WC, WC), lambda n: (0, 0, 0)),
            pl.BlockSpec((3, WC, WC), lambda n: (0, 0, 0)),
            pl.BlockSpec((3, 3, WC), lambda n: (0, 0, 0)),
            pl.BlockSpec((WC, WC), lambda n: (0, 0)),
        ],
        out_specs=pl.BlockSpec((1, H, WC), lambda n: (n, 0, 0)),
        scratch_shapes=[
            pltpu.VMEM((H + 2, W * Cin), jnp.float32),   # padded layer-1 input
            pltpu.VMEM((H + 2, WC), jnp.float32),        # padded h (also residual)
            pltpu.VMEM((H + 2, WC), jnp.float32),        # padded layer-2 output
        ],
        compiler_params=pltpu.CompilerParams(
            dimension_semantics=("parallel",)),
    )(x2, wb0, wb1, wb2, par, pool)
    return out.reshape(N, H, W, Cout)


# ------------------------- Pure-JAX reference (check) -------------------------

def _ref_conv_gn_relu(x, w, b, gamma, beta):
    y = jax.lax.conv_general_dilated(
        x, w, window_strides=(1, 1), padding=((1, 1), (1, 1)),
        dimension_numbers=('NHWC', 'OIHW', 'NHWC'))
    y = y + b.reshape(1, 1, 1, -1)
    N, H, W, C = y.shape
    cg = C // _GN_GROUPS
    yg = y.reshape(N, H, W, _GN_GROUPS, cg)
    mu = jnp.mean(yg, axis=(1, 2, 4), keepdims=True)
    var = jnp.mean((yg - mu) ** 2, axis=(1, 2, 4), keepdims=True)
    yn = ((yg - mu) / jnp.sqrt(var + _GN_EPS)).reshape(N, H, W, C)
    return jnp.maximum(yn * gamma.reshape(1, 1, 1, -1)
                       + beta.reshape(1, 1, 1, -1), 0.0)


def _reference_conv3(x, p, *, is_res):
    h = _ref_conv_gn_relu(x, p['w0'], p['b0'], p['g0'], p['be0'])
    y = _ref_conv_gn_relu(h, p['w1'], p['b1'], p['g1'], p['be1'])
    y = _ref_conv_gn_relu(y, p['w2'], p['b2'], p['g2'], p['be2'])
    return (h + y) / 1.414 if is_res else y


# ------------------------------------ Main -------------------------------------

if __name__ == "__main__":
    # Small shapes consistent with the module: GroupNorm(8, C) needs C % 8 == 0.
    N, C_IN, C_OUT, H, W = 2, 3, 16, 16, 16

    keys = jax.random.split(jax.random.PRNGKey(0), 13)
    x_nchw = jax.random.normal(keys[0], (N, C_IN, H, W), jnp.float32)

    def conv_w(k, cout, cin):
        return 0.1 * jax.random.normal(k, (cout, cin, 3, 3), jnp.float32)

    params = dict(
        w0=conv_w(keys[1], C_OUT, C_IN),
        b0=0.05 * jax.random.normal(keys[2], (C_OUT,), jnp.float32),
        g0=1.0 + 0.1 * jax.random.normal(keys[3], (C_OUT,), jnp.float32),
        be0=0.05 * jax.random.normal(keys[4], (C_OUT,), jnp.float32),
        w1=conv_w(keys[5], C_OUT, C_OUT),
        b1=0.05 * jax.random.normal(keys[6], (C_OUT,), jnp.float32),
        g1=1.0 + 0.1 * jax.random.normal(keys[7], (C_OUT,), jnp.float32),
        be1=0.05 * jax.random.normal(keys[8], (C_OUT,), jnp.float32),
        w2=conv_w(keys[9], C_OUT, C_OUT),
        b2=0.05 * jax.random.normal(keys[10], (C_OUT,), jnp.float32),
        g2=1.0 + 0.1 * jax.random.normal(keys[11], (C_OUT,), jnp.float32),
        be2=0.05 * jax.random.normal(keys[12], (C_OUT,), jnp.float32),
    )

    x = jnp.transpose(x_nchw, (0, 2, 3, 1))          # NCHW -> NHWC

    fwd_res = jax.jit(functools.partial(conv3_forward, is_res=True))
    fwd_plain = jax.jit(functools.partial(conv3_forward, is_res=False))

    out_res = fwd_res(x, params)
    out_plain = fwd_plain(x, params)
    jax.block_until_ready((out_res, out_plain))

    # Correctness against a pure-JAX reference of the PyTorch module.
    ref_res = _reference_conv3(x, params, is_res=True)
    ref_plain = _reference_conv3(x, params, is_res=False)
    err_res = float(jnp.max(jnp.abs(out_res - ref_res)))
    err_plain = float(jnp.max(jnp.abs(out_plain - ref_plain)))

    out_nchw = jnp.transpose(out_res, (0, 3, 1, 2))  # back to NCHW interface
    assert out_nchw.shape == (N, C_OUT, H, W)
    assert out_res.dtype == jnp.float32 and out_plain.dtype == jnp.float32
    assert bool(jnp.all(jnp.isfinite(out_res)))
    assert bool(jnp.all(jnp.isfinite(out_plain)))
    assert err_res < 2e-3 and err_plain < 2e-3, (err_res, err_plain)
    print("KERNEL_OK")
</pallas_src>

<mosaic_0001>
module attributes {stable_mosaic.version = 11 : i64} {
  func.func @_conv3_fused_kernel(%arg0: i32, %arg1: memref<1x16x48xf32, #tpu.memory_space<vmem>>, %arg2: memref<3x48x256xf32, #tpu.memory_space<vmem>>, %arg3: memref<3x256x256xf32, #tpu.memory_space<vmem>>, %arg4: memref<3x256x256xf32, #tpu.memory_space<vmem>>, %arg5: memref<3x3x256xf32, #tpu.memory_space<vmem>>, %arg6: memref<256x256xf32, #tpu.memory_space<vmem>>, %arg7: memref<1x16x256xf32, #tpu.memory_space<vmem>>, %arg8: memref<18x48xf32, #tpu.memory_space<vmem>>, %arg9: memref<18x256xf32, #tpu.memory_space<vmem>>, %arg10: memref<18x256xf32, #tpu.memory_space<vmem>>) attributes {dimension_semantics = [#tpu.dimension_semantics<parallel>], iteration_bounds = array<i64: 2>, scalar_prefetch = 0 : i64, scratch_operands = 3 : i64, tpu.core_type = #tpu.core_type<tc>, window_params = [{transform_indices = @transform_0, window_bounds = array<i64: 1, 16, 48>}, {pipeline_mode = #tpu.pipeline_mode<synchronous>, transform_indices = @transform_1, window_bounds = array<i64: 3, 48, 256>}, {pipeline_mode = #tpu.pipeline_mode<synchronous>, transform_indices = @transform_2, window_bounds = array<i64: 3, 256, 256>}, {pipeline_mode = #tpu.pipeline_mode<synchronous>, transform_indices = @transform_3, window_bounds = array<i64: 3, 256, 256>}, {pipeline_mode = #tpu.pipeline_mode<synchronous>, transform_indices = @transform_4, window_bounds = array<i64: 3, 3, 256>}, {pipeline_mode = #tpu.pipeline_mode<synchronous>, transform_indices = @transform_5, window_bounds = array<i64: 256, 256>}, {transform_indices = @transform_6, window_bounds = array<i64: 1, 16, 256>}]} {
    %c0 = arith.constant 0 : index
    %c0_0 = arith.constant 0 : index
    %0 = vector.load %arg6[%c0, %c0_0] : memref<256x256xf32, #tpu.memory_space<vmem>>, vector<256x256xf32>
    %c0_1 = arith.constant 0 : index
    %c0_2 = arith.constant 0 : index
    %c0_3 = arith.constant 0 : index
    %1 = vector.load %arg1[%c0_1, %c0_2, %c0_3] : memref<1x16x48xf32, #tpu.memory_space<vmem>>, vector<1x16x48xf32>
    %2 = vector.shape_cast %1 : vector<1x16x48xf32> to vector<16x48xf32>
    %cst = arith.constant 0.000000e+00 : f32
    %3 = vector.broadcast %cst : f32 to vector<1x48xf32>
    %c0_4 = arith.constant 0 : index
    %c0_5 = arith.constant 0 : index
    %4 = vector.load %arg8[%c0_4, %c0_5] : memref<18x48xf32, #tpu.memory_space<vmem>>, vector<1x48xf32>
    tpu.vector_store %arg8[%c0_4, %c0_5], %3 {strides = array<i32>} : memref<18x48xf32, #tpu.memory_space<vmem>>, vector<1x48xf32>,
    %c17 = arith.constant 17 : index
    %c0_6 = arith.constant 0 : index
    %5 = vector.load %arg8[%c17, %c0_6] : memref<18x48xf32, #tpu.memory_space<vmem>>, vector<1x48xf32>
    tpu.vector_store %arg8[%c17, %c0_6], %3 {strides = array<i32>} : memref<18x48xf32, #tpu.memory_space<vmem>>, vector<1x48xf32>,
    %c1 = arith.constant 1 : index
    %c0_7 = arith.constant 0 : index
    %6 = vector.load %arg8[%c1, %c0_7] : memref<18x48xf32, #tpu.memory_space<vmem>>, vector<16x48xf32>
    tpu.vector_store %arg8[%c1, %c0_7], %2 {strides = array<i32>} : memref<18x48xf32, #tpu.memory_space<vmem>>, vector<16x48xf32>,
    %c0_8 = arith.constant 0 : index
    %c0_9 = arith.constant 0 : index
    %7 = vector.load %arg8[%c0_8, %c0_9] : memref<18x48xf32, #tpu.memory_space<vmem>>, vector<16x48xf32>
    %c0_10 = arith.constant 0 : index
    %c0_11 = arith.constant 0 : index
    %c0_12 = arith.constant 0 : index
    %8 = vector.load %arg2[%c0_10, %c0_11, %c0_12] : memref<3x48x256xf32, #tpu.memory_space<vmem>>, vector<1x48x256xf32>
    %9 = vector.shape_cast %8 : vector<1x48x256xf32> to vector<48x256xf32>
    %cst_13 = arith.constant dense<0.000000e+00> : vector<16x256xf32>
    %10 = tpu.matmul %7, %9, %cst_13 {dimension_numbers = #tpu.dot_dimension_numbers<[1], [0], [0], [1], [0, 0, 1, 1], [], []>} : vector<16x48xf32>, vector<48x256xf32>, vector<16x256xf32> -> vector<16x256xf32>
    %c1_14 = arith.constant 1 : index
    %c0_15 = arith.constant 0 : index
    %11 = vector.load %arg8[%c1_14, %c0_15] : memref<18x48xf32, #tpu.memory_space<vmem>>, vector<16x48xf32>
    %c1_16 = arith.constant 1 : index
    %c0_17 = arith.constant 0 : index
    %c0_18 = arith.constant 0 : index
    %12 = vector.load %arg2[%c1_16, %c0_17, %c0_18] : memref<3x48x256xf32, #tpu.memory_space<vmem>>, vector<1x48x256xf32>
    %13 = vector.shape_cast %12 : vector<1x48x256xf32> to vector<48x256xf32>
    %cst_19 = arith.constant dense<0.000000e+00> : vector<16x256xf32>
    %14 = tpu.matmul %11, %13, %cst_19 {dimension_numbers = #tpu.dot_dimension_numbers<[1], [0], [0], [1], [0, 0, 1, 1], [], []>} : vector<16x48xf32>, vector<48x256xf32>, vector<16x256xf32> -> vector<16x256xf32>
    %15 = arith.addf %10, %14 : vector<16x256xf32>
    %c2 = arith.constant 2 : index
    %c0_20 = arith.constant 0 : index
    %16 = vector.load %arg8[%c2, %c0_20] : memref<18x48xf32, #tpu.memory_space<vmem>>, vector<16x48xf32>
    %c2_21 = arith.constant 2 : index
    %c0_22 = arith.constant 0 : index
    %c0_23 = arith.constant 0 : index
    %17 = vector.load %arg2[%c2_21, %c0_22, %c0_23] : memref<3x48x256xf32, #tpu.memory_space<vmem>>, vector<1x48x256xf32>
    %18 = vector.shape_cast %17 : vector<1x48x256xf32> to vector<48x256xf32>
    %cst_24 = arith.constant dense<0.000000e+00> : vector<16x256xf32>
    %19 = tpu.matmul %16, %18, %cst_24 {dimension_numbers = #tpu.dot_dimension_numbers<[1], [0], [0], [1], [0, 0, 1, 1], [], []>} : vector<16x48xf32>, vector<48x256xf32>, vector<16x256xf32> -> vector<16x256xf32>
    %20 = arith.addf %15, %19 : vector<16x256xf32>
    %c0_25 = arith.constant 0 : index
    %c0_26 = arith.constant 0 : index
    %c0_27 = arith.constant 0 : index
    %21 = vector.load %arg5[%c0_25, %c0_26, %c0_27] : memref<3x3x256xf32, #tpu.memory_space<vmem>>, vector<1x3x256xf32>
    %22 = vector.shape_cast %21 : vector<1x3x256xf32> to vector<3x256xf32>
    %23 = vector.extract_strided_slice %22 {offsets = [0, 0], sizes = [1, 256], strides = [1, 1]} : vector<3x256xf32> to vector<1x256xf32>
    %24 = vector.broadcast %23 : vector<1x256xf32> to vector<16x256xf32>
    %25 = arith.addf %20, %24 : vector<16x256xf32>
    %cst_28 = arith.constant dense<0.000000e+00> : vector<256xf32>
    %26 = vector.multi_reduction <add>, %25, %cst_28 [0] : vector<16x256xf32> to vector<256xf32>
    %27 = vector.shape_cast %26 : vector<256xf32> to vector<1x256xf32>
    %cst_29 = arith.constant dense<0.000000e+00> : vector<1x256xf32>
    %28 = tpu.matmul %27, %0, %cst_29 {dimension_numbers = #tpu.dot_dimension_numbers<[1], [0], [0], [1], [0, 0, 1, 1], [], []>} : vector<1x256xf32>, vector<256x256xf32>, vector<1x256xf32> -> vector<1x256xf32>
    %29 = vector.broadcast %28 : vector<1x256xf32> to vector<16x256xf32>
    %30 = arith.subf %25, %29 : vector<16x256xf32>
    %31 = arith.mulf %30, %30 : vector<16x256xf32>
    %cst_30 = arith.constant dense<0.000000e+00> : vector<256xf32>
    %32 = vector.multi_reduction <add>, %31, %cst_30 [0] : vector<16x256xf32> to vector<256xf32>
    %33 = vector.shape_cast %32 : vector<256xf32> to vector<1x256xf32>
    %cst_31 = arith.constant dense<0.000000e+00> : vector<1x256xf32>
    %34 = tpu.matmul %33, %0, %cst_31 {dimension_numbers = #tpu.dot_dimension_numbers<[1], [0], [0], [1], [0, 0, 1, 1], [], []>} : vector<1x256xf32>, vector<256x256xf32>, vector<1x256xf32> -> vector<1x256xf32>
    %cst_32 = arith.constant 9.99999974E-6 : f32
    %35 = vector.broadcast %cst_32 : f32 to vector<1x256xf32>
    %36 = arith.addf %34, %35 : vector<1x256xf32>
    %37 = math.rsqrt %36 : vector<1x256xf32>
    %38 = vector.broadcast %37 : vector<1x256xf32> to vector<16x256xf32>
    %39 = arith.mulf %30, %38 : vector<16x256xf32>
    %40 = vector.extract_strided_slice %22 {offsets = [1, 0], sizes = [1, 256], strides = [1, 1]} : vector<3x256xf32> to vector<1x256xf32>
    %41 = vector.broadcast %40 : vector<1x256xf32> to vector<16x256xf32>
    %42 = arith.mulf %39, %41 : vector<16x256xf32>
    %43 = vector.extract_strided_slice %22 {offsets = [2, 0], sizes = [1, 256], strides = [1, 1]} : vector<3x256xf32> to vector<1x256xf32>
    %44 = vector.broadcast %43 : vector<1x256xf32> to vector<16x256xf32>
    %45 = arith.addf %42, %44 : vector<16x256xf32>
    %cst_33 = arith.constant 0.000000e+00 : f32
    %46 = vector.broadcast %cst_33 : f32 to vector<16x256xf32>
    %47 = arith.maximumf %45, %46 : vector<16x256xf32>
    %cst_34 = arith.constant 0.000000e+00 : f32
    %48 = vector.broadcast %cst_34 : f32 to vector<1x256xf32>
    %c0_35 = arith.constant 0 : index
    %c0_36 = arith.constant 0 : index
    %49 = vector.load %arg9[%c0_35, %c0_36] : memref<18x256xf32, #tpu.memory_space<vmem>>, vector<1x256xf32>
    tpu.vector_store %arg9[%c0_35, %c0_36], %48 {strides = array<i32>} : memref<18x256xf32, #tpu.memory_space<vmem>>, vector<1x256xf32>,
    %c17_37 = arith.constant 17 : index
    %c0_38 = arith.constant 0 : index
    %50 = vector.load %arg9[%c17_37, %c0_38] : memref<18x256xf32, #tpu.memory_space<vmem>>, vector<1x256xf32>
    tpu.vector_store %arg9[%c17_37, %c0_38], %48 {strides = array<i32>} : memref<18x256xf32, #tpu.memory_space<vmem>>, vector<1x256xf32>,
    %c1_39 = arith.constant 1 : index
    %c0_40 = arith.constant 0 : index
    %51 = vector.load %arg9[%c1_39, %c0_40] : memref<18x256xf32, #tpu.memory_space<vmem>>, vector<16x256xf32>
    tpu.vector_store %arg9[%c1_39, %c0_40], %47 {strides = array<i32>} : memref<18x256xf32, #tpu.memory_space<vmem>>, vector<16x256xf32>,
    %c0_41 = arith.constant 0 : index
    %c0_42 = arith.constant 0 : index
    %52 = vector.load %arg9[%c0_41, %c0_42] : memref<18x256xf32, #tpu.memory_space<vmem>>, vector<16x256xf32>
    %c0_43 = arith.constant 0 : index
    %c0_44 = arith.constant 0 : index
    %c0_45 = arith.constant 0 : index
    %53 = vector.load %arg3[%c0_43, %c0_44, %c0_45] : memref<3x256x256xf32, #tpu.memory_space<vmem>>, vector<1x256x256xf32>
    %54 = vector.shape_cast %53 : vector<1x256x256xf32> to vector<256x256xf32>
    %cst_46 = arith.constant dense<0.000000e+00> : vector<16x256xf32>
    %55 = tpu.matmul %52, %54, %cst_46 {dimension_numbers = #tpu.dot_dimension_numbers<[1], [0], [0], [1], [0, 0, 1, 1], [], []>} : vector<16x256xf32>, vector<256x256xf32>, vector<16x256xf32> -> vector<16x256xf32>
    %c1_47 = arith.constant 1 : index
    %c0_48 = arith.constant 0 : index
    %56 = vector.load %arg9[%c1_47, %c0_48] : memref<18x256xf32, #tpu.memory_space<vmem>>, vector<16x256xf32>
    %c1_49 = arith.constant 1 : index
    %c0_50 = arith.constant 0 : index
    %c0_51 = arith.constant 0 : index
    %57 = vector.load %arg3[%c1_49, %c0_50, %c0_51] : memref<3x256x256xf32, #tpu.memory_space<vmem>>, vector<1x256x256xf32>
    %58 = vector.shape_cast %57 : vector<1x256x256xf32> to vector<256x256xf32>
    %cst_52 = arith.constant dense<0.000000e+00> : vector<16x256xf32>
    %59 = tpu.matmul %56, %58, %cst_52 {dimension_numbers = #tpu.dot_dimension_numbers<[1], [0], [0], [1], [0, 0, 1, 1], [], []>} : vector<16x256xf32>, vector<256x256xf32>, vector<16x256xf32> -> vector<16x256xf32>
    %60 = arith.addf %55, %59 : vector<16x256xf32>
    %c2_53 = arith.constant 2 : index
    %c0_54 = arith.constant 0 : index
    %61 = vector.load %arg9[%c2_53, %c0_54] : memref<18x256xf32, #tpu.memory_space<vmem>>, vector<16x256xf32>
    %c2_55 = arith.constant 2 : index
    %c0_56 = arith.constant 0 : index
    %c0_57 = arith.constant 0 : index
    %62 = vector.load %arg3[%c2_55, %c0_56, %c0_57] : memref<3x256x256xf32, #tpu.memory_space<vmem>>, vector<1x256x256xf32>
    %63 = vector.shape_cast %62 : vector<1x256x256xf32> to vector<256x256xf32>
    %cst_58 = arith.constant dense<0.000000e+00> : vector<16x256xf32>
    %64 = tpu.matmul %61, %63, %cst_58 {dimension_numbers = #tpu.dot_dimension_numbers<[1], [0], [0], [1], [0, 0, 1, 1], [], []>} : vector<16x256xf32>, vector<256x256xf32>, vector<16x256xf32> -> vector<16x256xf32>
    %65 = arith.addf %60, %64 : vector<16x256xf32>
    %c1_59 = arith.constant 1 : index
    %c0_60 = arith.constant 0 : index
    %c0_61 = arith.constant 0 : index
    %66 = vector.load %arg5[%c1_59, %c0_60, %c0_61] : memref<3x3x256xf32, #tpu.memory_space<vmem>>, vector<1x3x256xf32>
    %67 = vector.shape_cast %66 : vector<1x3x256xf32> to vector<3x256xf32>
    %68 = vector.extract_strided_slice %67 {offsets = [0, 0], sizes = [1, 256], strides = [1, 1]} : vector<3x256xf32> to vector<1x256xf32>
    %69 = vector.broadcast %68 : vector<1x256xf32> to vector<16x256xf32>
    %70 = arith.addf %65, %69 : vector<16x256xf32>
    %cst_62 = arith.constant dense<0.000000e+00> : vector<256xf32>
    %71 = vector.multi_reduction <add>, %70, %cst_62 [0] : vector<16x256xf32> to vector<256xf32>
    %72 = vector.shape_cast %71 : vector<256xf32> to vector<1x256xf32>
    %cst_63 = arith.constant dense<0.000000e+00> : vector<1x256xf32>
    %73 = tpu.matmul %72, %0, %cst_63 {dimension_numbers = #tpu.dot_dimension_numbers<[1], [0], [0], [1], [0, 0, 1, 1], [], []>} : vector<1x256xf32>, vector<256x256xf32>, vector<1x256xf32> -> vector<1x256xf32>
    %74 = vector.broadcast %73 : vector<1x256xf32> to vector<16x256xf32>
    %75 = arith.subf %70, %74 : vector<16x256xf32>
    %76 = arith.mulf %75, %75 : vector<16x256xf32>
    %cst_64 = arith.constant dense<0.000000e+00> : vector<256xf32>
    %77 = vector.multi_reduction <add>, %76, %cst_64 [0] : vector<16x256xf32> to vector<256xf32>
    %78 = vector.shape_cast %77 : vector<256xf32> to vector<1x256xf32>
    %cst_65 = arith.constant dense<0.000000e+00> : vector<1x256xf32>
    %79 = tpu.matmul %78, %0, %cst_65 {dimension_numbers = #tpu.dot_dimension_numbers<[1], [0], [0], [1], [0, 0, 1, 1], [], []>} : vector<1x256xf32>, vector<256x256xf32>, vector<1x256xf32> -> vector<1x256xf32>
    %cst_66 = arith.constant 9.99999974E-6 : f32
    %80 = vector.broadcast %cst_66 : f32 to vector<1x256xf32>
    %81 = arith.addf %79, %80 : vector<1x256xf32>
    %82 = math.rsqrt %81 : vector<1x256xf32>
    %83 = vector.broadcast %82 : vector<1x256xf32> to vector<16x256xf32>
    %84 = arith.mulf %75, %83 : vector<16x256xf32>
    %85 = vector.extract_strided_slice %67 {offsets = [1, 0], sizes = [1, 256], strides = [1, 1]} : vector<3x256xf32> to vector<1x256xf32>
    %86 = vector.broadcast %85 : vector<1x256xf32> to vector<16x256xf32>
    %87 = arith.mulf %84, %86 : vector<16x256xf32>
    %88 = vector.extract_strided_slice %67 {offsets = [2, 0], sizes = [1, 256], strides = [1, 1]} : vector<3x256xf32> to vector<1x256xf32>
    %89 = vector.broadcast %88 : vector<1x256xf32> to vector<16x256xf32>
    %90 = arith.addf %87, %89 : vector<16x256xf32>
    %cst_67 = arith.constant 0.000000e+00 : f32
    %91 = vector.broadcast %cst_67 : f32 to vector<16x256xf32>
    %92 = arith.maximumf %90, %91 : vector<16x256xf32>
    %cst_68 = arith.constant 0.000000e+00 : f32
    %93 = vector.broadcast %cst_68 : f32 to vector<1x256xf32>
    %c0_69 = arith.constant 0 : index
    %c0_70 = arith.constant 0 : index
    %94 = vector.load %arg10[%c0_69, %c0_70] : memref<18x256xf32, #tpu.memory_space<vmem>>, vector<1x256xf32>
    tpu.vector_store %arg10[%c0_69, %c0_70], %93 {strides = array<i32>} : memref<18x256xf32, #tpu.memory_space<vmem>>, vector<1x256xf32>,
    %c17_71 = arith.constant 17 : index
    %c0_72 = arith.constant 0 : index
    %95 = vector.load %arg10[%c17_71, %c0_72] : memref<18x256xf32, #tpu.memory_space<vmem>>, vector<1x256xf32>
    tpu.vector_store %arg10[%c17_71, %c0_72], %93 {strides = array<i32>} : memref<18x256xf32, #tpu.memory_space<vmem>>, vector<1x256xf32>,
    %c1_73 = arith.constant 1 : index
    %c0_74 = arith.constant 0 : index
    %96 = vector.load %arg10[%c1_73, %c0_74] : memref<18x256xf32, #tpu.memory_space<vmem>>, vector<16x256xf32>
    tpu.vector_store %arg10[%c1_73, %c0_74], %92 {strides = array<i32>} : memref<18x256xf32, #tpu.memory_space<vmem>>, vector<16x256xf32>,
    %c0_75 = arith.constant 0 : index
    %c0_76 = arith.constant 0 : index
    %97 = vector.load %arg10[%c0_75, %c0_76] : memref<18x256xf32, #tpu.memory_space<vmem>>, vector<16x256xf32>
    %c0_77 = arith.constant 0 : index
    %c0_78 = arith.constant 0 : index
    %c0_79 = arith.constant 0 : index
    %98 = vector.load %arg4[%c0_77, %c0_78, %c0_79] : memref<3x256x256xf32, #tpu.memory_space<vmem>>, vector<1x256x256xf32>
    %99 = vector.shape_cast %98 : vector<1x256x256xf32> to vector<256x256xf32>
    %cst_80 = arith.constant dense<0.000000e+00> : vector<16x256xf32>
    %100 = tpu.matmul %97, %99, %cst_80 {dimension_numbers = #tpu.dot_dimension_numbers<[1], [0], [0], [1], [0, 0, 1, 1], [], []>} : vector<16x256xf32>, vector<256x256xf32>, vector<16x256xf32> -> vector<16x256xf32>
    %c1_81 = arith.constant 1 : index
    %c0_82 = arith.constant 0 : index
    %101 = vector.load %arg10[%c1_81, %c0_82] : memref<18x256xf32, #tpu.memory_space<vmem>>, vector<16x256xf32>
    %c1_83 = arith.constant 1 : index
    %c0_84 = arith.constant 0 : index
    %c0_85 = arith.constant 0 : index
    %102 = vector.load %arg4[%c1_83, %c0_84, %c0_85] : memref<3x256x256xf32, #tpu.memory_space<vmem>>, vector<1x256x256xf32>
    %103 = vector.shape_cast %102 : vector<1x256x256xf32> to vector<256x256xf32>
    %cst_86 = arith.constant dense<0.000000e+00> : vector<16x256xf32>
    %104 = tpu.matmul %101, %103, %cst_86 {dimension_numbers = #tpu.dot_dimension_numbers<[1], [0], [0], [1], [0, 0, 1, 1], [], []>} : vector<16x256xf32>, vector<256x256xf32>, vector<16x256xf32> -> vector<16x256xf32>
    %105 = arith.addf %100, %104 : vector<16x256xf32>
    %c2_87 = arith.constant 2 : index
    %c0_88 = arith.constant 0 : index
    %106 = vector.load %arg10[%c2_87, %c0_88] : memref<18x256xf32, #tpu.memory_space<vmem>>, vector<16x256xf32>
    %c2_89 = arith.constant 2 : index
    %c0_90 = arith.constant 0 : index
    %c0_91 = arith.constant 0 : index
    %107 = vector.load %arg4[%c2_89, %c0_90, %c0_91] : memref<3x256x256xf32, #tpu.memory_space<vmem>>, vector<1x256x256xf32>
    %108 = vector.shape_cast %107 : vector<1x256x256xf32> to vector<256x256xf32>
    %cst_92 = arith.constant dense<0.000000e+00> : vector<16x256xf32>
    %109 = tpu.matmul %106, %108, %cst_92 {dimension_numbers = #tpu.dot_dimension_numbers<[1], [0], [0], [1], [0, 0, 1, 1], [], []>} : vector<16x256xf32>, vector<256x256xf32>, vector<16x256xf32> -> vector<16x256xf32>
    %110 = arith.addf %105, %109 : vector<16x256xf32>
    %c2_93 = arith.constant 2 : index
    %c0_94 = arith.constant 0 : index
    %c0_95 = arith.constant 0 : index
    %111 = vector.load %arg5[%c2_93, %c0_94, %c0_95] : memref<3x3x256xf32, #tpu.memory_space<vmem>>, vector<1x3x256xf32>
    %112 = vector.shape_cast %111 : vector<1x3x256xf32> to vector<3x256xf32>
    %113 = vector.extract_strided_slice %112 {offsets = [0, 0], sizes = [1, 256], strides = [1, 1]} : vector<3x256xf32> to vector<1x256xf32>
    %114 = vector.broadcast %113 : vector<1x256xf32> to vector<16x256xf32>
    %115 = arith.addf %110, %114 : vector<16x256xf32>
    %cst_96 = arith.constant dense<0.000000e+00> : vector<256xf32>
    %116 = vector.multi_reduction <add>, %115, %cst_96 [0] : vector<16x256xf32> to vector<256xf32>
    %117 = vector.shape_cast %116 : vector<256xf32> to vector<1x256xf32>
    %cst_97 = arith.constant dense<0.000000e+00> : vector<1x256xf32>
    %118 = tpu.matmul %117, %0, %cst_97 {dimension_numbers = #tpu.dot_dimension_numbers<[1], [0], [0], [1], [0, 0, 1, 1], [], []>} : vector<1x256xf32>, vector<256x256xf32>, vector<1x256xf32> -> vector<1x256xf32>
    %119 = vector.broadcast %118 : vector<1x256xf32> to vector<16x256xf32>
    %120 = arith.subf %115, %119 : vector<16x256xf32>
    %121 = arith.mulf %120, %120 : vector<16x256xf32>
    %cst_98 = arith.constant dense<0.000000e+00> : vector<256xf32>
    %122 = vector.multi_reduction <add>, %121, %cst_98 [0] : vector<16x256xf32> to vector<256xf32>
    %123 = vector.shape_cast %122 : vector<256xf32> to vector<1x256xf32>
    %cst_99 = arith.constant dense<0.000000e+00> : vector<1x256xf32>
    %124 = tpu.matmul %123, %0, %cst_99 {dimension_numbers = #tpu.dot_dimension_numbers<[1], [0], [0], [1], [0, 0, 1, 1], [], []>} : vector<1x256xf32>, vector<256x256xf32>, vector<1x256xf32> -> vector<1x256xf32>
    %cst_100 = arith.constant 9.99999974E-6 : f32
    %125 = vector.broadcast %cst_100 : f32 to vector<1x256xf32>
    %126 = arith.addf %124, %125 : vector<1x256xf32>
    %127 = math.rsqrt %126 : vector<1x256xf32>
    %128 = vector.broadcast %127 : vector<1x256xf32> to vector<16x256xf32>
    %129 = arith.mulf %120, %128 : vector<16x256xf32>
    %130 = vector.extract_strided_slice %112 {offsets = [1, 0], sizes = [1, 256], strides = [1, 1]} : vector<3x256xf32> to vector<1x256xf32>
    %131 = vector.broadcast %130 : vector<1x256xf32> to vector<16x256xf32>
    %132 = arith.mulf %129, %131 : vector<16x256xf32>
    %133 = vector.extract_strided_slice %112 {offsets = [2, 0], sizes = [1, 256], strides = [1, 1]} : vector<3x256xf32> to vector<1x256xf32>
    %134 = vector.broadcast %133 : vector<1x256xf32> to vector<16x256xf32>
    %135 = arith.addf %132, %134 : vector<16x256xf32>
    %cst_101 = arith.constant 0.000000e+00 : f32
    %136 = vector.broadcast %cst_101 : f32 to vector<16x256xf32>
    %137 = arith.maximumf %135, %136 : vector<16x256xf32>
    %138 = arith.addf %47, %137 : vector<16x256xf32>
    %cst_102 = arith.constant 0.70721358 : f32
    %139 = vector.broadcast %cst_102 : f32 to vector<16x256xf32>
    %140 = arith.mulf %138, %139 : vector<16x256xf32>
    %c0_103 = arith.constant 0 : index
    %c0_104 = arith.constant 0 : index
    %c0_105 = arith.constant 0 : index
    %141 = vector.load %arg7[%c0_103, %c0_104, %c0_105] : memref<1x16x256xf32, #tpu.memory_space<vmem>>, vector<1x16x256xf32>
    %142 = vector.shape_cast %141 : vector<1x16x256xf32> to vector<16x256xf32>
    %143 = vector.shape_cast %140 : vector<16x256xf32> to vector<1x16x256xf32>
    tpu.vector_store %arg7[%c0_103, %c0_104, %c0_105], %143 {strides = array<i32>} : memref<1x16x256xf32, #tpu.memory_space<vmem>>, vector<1x16x256xf32>,
    return
  }
  func.func @transform_0(%arg0: i32) -> (i32, i32, i32) {
    %c0_i32 = arith.constant 0 : i32
    %c0_i32_0 = arith.constant 0 : i32
    %c0_i32_1 = arith.constant 0 : i32
    return %arg0, %c0_i32, %c0_i32_0 : i32, i32, i32
  }
  func.func @transform_1(%arg0: i32) -> (i32, i32, i32) {
    %c0_i32 = arith.constant 0 : i32
    %c0_i32_0 = arith.constant 0 : i32
    %c0_i32_1 = arith.constant 0 : i32
    %c0_i32_2 = arith.constant 0 : i32
    return %c0_i32, %c0_i32_0, %c0_i32_1 : i32, i32, i32
  }
  func.func @transform_2(%arg0: i32) -> (i32, i32, i32) {
    %c0_i32 = arith.constant 0 : i32
    %c0_i32_0 = arith.constant 0 : i32
    %c0_i32_1 = arith.constant 0 : i32
    %c0_i32_2 = arith.constant 0 : i32
    return %c0_i32, %c0_i32_0, %c0_i32_1 : i32, i32, i32
  }
  func.func @transform_3(%arg0: i32) -> (i32, i32, i32) {
    %c0_i32 = arith.constant 0 : i32
    %c0_i32_0 = arith.constant 0 : i32
    %c0_i32_1 = arith.constant 0 : i32
    %c0_i32_2 = arith.constant 0 : i32
    return %c0_i32, %c0_i32_0, %c0_i32_1 : i32, i32, i32
  }
  func.func @transform_4(%arg0: i32) -> (i32, i32, i32) {
    %c0_i32 = arith.constant 0 : i32
    %c0_i32_0 = arith.constant 0 : i32
    %c0_i32_1 = arith.constant 0 : i32
    %c0_i32_2 = arith.constant 0 : i32
    return %c0_i32, %c0_i32_0, %c0_i32_1 : i32, i32, i32
  }
  func.func @transform_5(%arg0: i32) -> (i32, i32) {
    %c0_i32 = arith.constant 0 : i32
    %c0_i32_0 = arith.constant 0 : i32
    %c0_i32_1 = arith.constant 0 : i32
    return %c0_i32, %c0_i32_0 : i32, i32
  }
  func.func @transform_6(%arg0: i32) -> (i32, i32, i32) {
    %c0_i32 = arith.constant 0 : i32
    %c0_i32_0 = arith.constant 0 : i32
    %c0_i32_1 = arith.constant 0 : i32
    return %arg0, %c0_i32, %c0_i32_0 : i32, i32, i32
  }
}

</mosaic_0001>

<llo_original>
// kernel: tile.99
$region0: #{tile.99}
  #allocation0 [shape = 's32[1]{0}', space=sflag, size = 0x4, scoped, tag = 'scoped memory for tile.99']
  %s0 = inlined_call_operand.vmem [shape: s32[16], index: 0, kind: input, shape index: {}]
  %s1 = inlined_call_operand.vmem [shape: s32[16,16], index: 1, kind: output, shape index: {}]
  // Predicated region
  $region2: #{tile.99} parent=0 // pred_check
    _
  $region3: #{tile.99} parent=0 // pred_check_branch
    %3 = sbr.rel (0) target = $region5
  $region4: #{tile.99} parent=0 // pred_region
    _
  $region5: #{tile.99} parent=0 // pred_fallthru
    _
  %v4 = vld [vmem:[%s0] ss:$0 sm:$0xff]
  %5 = vst [vmem:[%s1] sm:$0xff] %v4
  %s6 = scalar_lea.vmem %s1, 8
  %7 = vst [vmem:[%s6] sm:$0xff] %v4

// kernel: eq.50
$region0: #{eq.50}
  %s0 = inlined_call_operand.vmem [shape: s32[16,16], index: 0, kind: input, shape index: {}]
  %s1 = inlined_call_operand.vmem [shape: s32[256], index: 1, kind: output, shape index: {}]
  $region1: #{eq.50} parent=0
    #allocation0 [shape = 'u8[4096]{0}', space=vmem, size = 0x1000, scoped, tag = 'scoped mem for output reshape']
    %s2 = smov 3
    %v3 = vld [vmem:[%s0] ss:$8 sm:%s2]
    %vm4 = vcmask 130048
    %5 = vst.msk [vmem:[#allocation0] sm:$0x3] %vm4, %v3
    %s6 = scalar_lea.vmem %s0, 7
    %s7 = smov 3
    %v8 = vld [vmem:[%s6] ss:$8 sm:%s7]
    %9 = vrot.lane.b32.xlu0 %v8, 112
    %v10 = vpop.permute.xlu0 %9
    %vm11 = vcmask 1048448
    %12 = vst.msk [vmem:[#allocation0] sm:$0x3] %vm11, %v10
    %s13 = scalar_lea.vmem %s0, 6
    %s14 = smov 3
    %v15 = vld [vmem:[%s13] ss:$8 sm:%s14]
    %16 = vrot.lane.b32.xlu0 %v15, 96
    %v17 = vpop.permute.xlu0 %16
    %vm18 = vcmask 917248
    %19 = vst.msk [vmem:[#allocation0] sm:$0x3] %vm18, %v17
    %s20 = scalar_lea.vmem %s0, 5
    %s21 = smov 3
    %v22 = vld [vmem:[%s20] ss:$8 sm:%s21]
    %23 = vrot.lane.b32.xlu0 %v22, 80
    %v24 = vpop.permute.xlu0 %23
    %vm25 = vcmask 786048
    %26 = vst.msk [vmem:[#allocation0] sm:$0x3] %vm25, %v24
    %s27 = scalar_lea.vmem %s0, 4
    %s28 = smov 3
    %v29 = vld [vmem:[%s27] ss:$8 sm:%s28]
    %30 = vrot.lane.b32.xlu0 %v29, 64
    %v31 = vpop.permute.xlu0 %30
    %vm32 = vcmask 654848
    %33 = vst.msk [vmem:[#allocation0] sm:$0x3] %vm32, %v31
    %s34 = scalar_lea.vmem %s0, 3
    %s35 = smov 3
    %v36 = vld [vmem:[%s34] ss:$8 sm:%s35]
    %37 = vrot.lane.b32.xlu0 %v36, 48
    %v38 = vpop.permute.xlu0 %37
    %vm39 = vcmask 523648
    %40 = vst.msk [vmem:[#allocation0] sm:$0x3] %vm39, %v38
    %s41 = scalar_lea.vmem %s0, 2
    %s42 = smov 3
    %v43 = vld [vmem:[%s41] ss:$8 sm:%s42]
    %44 = vrot.lane.b32.xlu0 %v43, 32
    %v45 = vpop.permute.xlu0 %44
    %vm46 = vcmask 392448
    %47 = vst.msk [vmem:[#allocation0] sm:$0x3] %vm46, %v45
    %s48 = scalar_lea.vmem %s0, 1
    %s49 = smov 3
    %v50 = vld [vmem:[%s48] ss:$8 sm:%s49]
    %51 = vrot.lane.b32.xlu0 %v50, 16
    %v52 = vpop.permute.xlu0 %51
    %vm53 = vcmask 261248
    %54 = vst.msk [vmem:[#allocation0] sm:$0x3] %vm53, %v52
    %s56 = ssub.s32 4, 1
    %v57 = vld [vmem:[#allocation0] sm:%s56]
    %s59 = ssub.s32 4, 1
    %60 = vst [vmem:[%s1] sm:%s59] %v57

// kernel: tile.54
$region0: #{tile.54}
  #allocation0 [shape = 's32[1]{0}', space=sflag, size = 0x4, scoped, tag = 'scoped memory for tile.54']
  %s0 = inlined_call_operand.vmem [shape: f32[16], index: 0, kind: input, shape index: {}]
  %s1 = inlined_call_operand.vmem [shape: f32[16,16], index: 1, kind: output, shape index: {}]
  // Predicated region
  $region2: #{tile.54} parent=0 // pred_check
    _
  $region3: #{tile.54} parent=0 // pred_check_branch
    %3 = sbr.rel (0) target = $region5
  $region4: #{tile.54} parent=0 // pred_region
    _
  $region5: #{tile.54} parent=0 // pred_fallthru
    _
  %v4 = vld [vmem:[%s0] ss:$0 sm:$0xff]
  %5 = vst [vmem:[%s1] sm:$0xff] %v4
  %s6 = scalar_lea.vmem %s1, 8
  %7 = vst [vmem:[%s6] sm:$0xff] %v4

// kernel: tile.63
$region0: #{tile.63}
  %s0 = inlined_call_operand.vmem [shape: f32[16,16], index: 0, kind: input, shape index: {}]
  %s1 = inlined_call_operand.vmem [shape: f32[1,256], index: 1, kind: output, shape index: {}]
  $region1: #{tile.63} parent=0
    #allocation0 [shape = 'u8[8192]{0}', space=vmem, size = 0x2000, scoped, tag = 'scoped mem for output reshape']
    %s2 = smov 3
    %v3 = vld [vmem:[%s0] ss:$8 sm:%s2]
    %vm4 = vcmask 130048
    %5 = vst.msk [vmem:[#allocation0] ss:$8 sm:$0x3] %vm4, %v3
    %s6 = scalar_lea.vmem %s0, 7
    %s7 = smov 3
    %v8 = vld [vmem:[%s6] ss:$8 sm:%s7]
    %9 = vrot.lane.b32.xlu0 %v8, 112
    %v10 = vpop.permute.xlu0 %9
    %vm11 = vcmask 1048448
    %12 = vst.msk [vmem:[#allocation0] ss:$8 sm:$0x3] %vm11, %v10
    %s13 = scalar_lea.vmem %s0, 6
    %s14 = smov 3
    %v15 = vld [vmem:[%s13] ss:$8 sm:%s14]
    %16 = vrot.lane.b32.xlu0 %v15, 96
    %v17 = vpop.permute.xlu0 %16
    %vm18 = vcmask 917248
    %19 = vst.msk [vmem:[#allocation0] ss:$8 sm:$0x3] %vm18, %v17
    %s20 = scalar_lea.vmem %s0, 5
    %s21 = smov 3
    %v22 = vld [vmem:[%s20] ss:$8 sm:%s21]
    %23 = vrot.lane.b32.xlu0 %v22, 80
    %v24 = vpop.permute.xlu0 %23
    %vm25 = vcmask 786048
    %26 = vst.msk [vmem:[#allocation0] ss:$8 sm:$0x3] %vm25, %v24
    %s27 = scalar_lea.vmem %s0, 4
    %s28 = smov 3
    %v29 = vld [vmem:[%s27] ss:$8 sm:%s28]
    %30 = vrot.lane.b32.xlu0 %v29, 64
    %v31 = vpop.permute.xlu0 %30
    %vm32 = vcmask 654848
    %33 = vst.msk [vmem:[#allocation0] ss:$8 sm:$0x3] %vm32, %v31
    %s34 = scalar_lea.vmem %s0, 3
    %s35 = smov 3
    %v36 = vld [vmem:[%s34] ss:$8 sm:%s35]
    %37 = vrot.lane.b32.xlu0 %v36, 48
    %v38 = vpop.permute.xlu0 %37
    %vm39 = vcmask 523648
    %40 = vst.msk [vmem:[#allocation0] ss:$8 sm:$0x3] %vm39, %v38
    %s41 = scalar_lea.vmem %s0, 2
    %s42 = smov 3
    %v43 = vld [vmem:[%s41] ss:$8 sm:%s42]
    %44 = vrot.lane.b32.xlu0 %v43, 32
    %v45 = vpop.permute.xlu0 %44
    %vm46 = vcmask 392448
    %47 = vst.msk [vmem:[#allocation0] ss:$8 sm:$0x3] %vm46, %v45
    %s48 = scalar_lea.vmem %s0, 1
    %s49 = smov 3
    %v50 = vld [vmem:[%s48] ss:$8 sm:%s49]
    %51 = vrot.lane.b32.xlu0 %v50, 16
    %v52 = vpop.permute.xlu0 %51
    %vm53 = vcmask 261248
    %54 = vst.msk [vmem:[#allocation0] ss:$8 sm:$0x3] %vm53, %v52
    %s56 = ssub.s32 2, 1
    %v57 = vld [vmem:[#allocation0] sm:%s56]
    %s59 = ssub.s32 2, 1
    %60 = vst [vmem:[%s1] sm:%s59] %v57
    %s61 = scalar_lea.vmem [#allocation0], 8
    %v62 = vld [vmem:[%s61] sm:%s56]
    %s64 = ssub.s32 2, 1
    %s65 = scalar_lea.vmem %s1, 1
    %66 = vst [vmem:[%s65] sm:%s64] %v62

// kernel: conv3_forward.1
$region0: #{conv3_forward.1}
  #allocation0 [shape = 'u32[]', space=smem, size = 0x4, offset = 0x4, fixed_abs, tag = 'smem constant byte address 0x4 - core index']
  #allocation1 [shape = 'u32[72,128]{1,0:T(1,128)}', space=vmem, size = 0x9000, scoped, tag = 'internal scratch']
  #allocation2 [shape = 'f32[18,48]{1,0:T(8,128)}', space=vmem, size = 0x3000, scoped, tag = 'scratch operand']
  #allocation3 [shape = 'f32[18,256]{1,0:T(8,128)}', space=vmem, size = 0x6000, scoped, tag = 'scratch operand']
  #allocation4 [shape = 'f32[18,256]{1,0:T(8,128)}', space=vmem, size = 0x6000, scoped, tag = 'scratch operand']
  %s0 = inlined_call_operand.vmem [shape: f32[2,16,48], index: 0, kind: input, shape index: {}]
  %s1 = inlined_call_operand.vmem [shape: f32[3,48,256], index: 1, kind: input, shape index: {}]
  %s2 = inlined_call_operand.vmem [shape: f32[3,256,256], index: 2, kind: input, shape index: {}]
  %s3 = inlined_call_operand.vmem [shape: f32[3,256,256], index: 3, kind: input, shape index: {}]
  %s4 = inlined_call_operand.vmem [shape: f32[3,3,256], index: 4, kind: input, shape index: {}]
  %s5 = inlined_call_operand.vmem [shape: f32[256,256], index: 5, kind: input, shape index: {}]
  %s6 = inlined_call_operand.vmem [shape: f32[2,16,256], index: 6, kind: output, shape index: {}]
  %s7 = sld [smem:[#allocation0]]
  $region57: #{conv3_forward.1} parent=0
    _
  %s9 = ssub.s32 1, %s7
  %s10 = scalar_select 0, %s9, %s7
  loop: start=0, step=1, limit=4
  $region2: #{conv3_forward.1} parent=0 // loop_pre_header
    _
  $region3: #{conv3_forward.1} parent=0 // loop_header
    %s12 = sphi 0, %s16
    %p13 = scmp.ge.s32.totalorder %s12, 4
    %s22 = sphi 0, %s24
    %s25 = sphi 0, %s22
    %s26 = sphi 0, %s25
    %s42 = sphi 0, %s26
    %s46 = sphi 0, %s46
    %s48 = sphi 0, %s46
    %s49 = sphi 0, %s48
    %s63 = sphi 0, %s49
    %s67 = sphi 0, %s67
    %s69 = sphi 0, %s67
    %s70 = sphi 0, %s69
    %s84 = sphi 0, %s70
    %s88 = sphi 0, %s88
    %s90 = sphi 0, %s88
    %s91 = sphi 0, %s90
    %s105 = sphi 0, %s91
    %s109 = sphi 0, %s109
    %s111 = sphi 0, %s109
    %s112 = sphi 0, %s111
    %s126 = sphi 0, %s112
    %s130 = sphi 0, %s130
    %s132 = sphi 0, %s130
    %s133 = sphi 0, %s132
    %s147 = sphi 0, %s133
    %s153 = sphi 0, %s155
    %s156 = sphi 0, %s153
    %s157 = sphi 0, %s156
    %s173 = sphi 0, %s157
  $region4: #{conv3_forward.1} parent=0 // loop_header_branch
    %15 = sbr.rel (%p13) target = $region8
  $region5: #{conv3_forward.1} parent=0 // loop_body
    %s17 = ssub.s32 %s12, 1
    %s18 = ssub.s32 %s12, 2
    %s19 = sadd.s32 %s12, 1
    %s20 = ssub.s32 %s12, %s19
    %p21 = scmp.eq.s32.totalorder %s20, 0
    %s23 = sadd.s32 %s22, 1
    %s24 = scalar_select %p21, %s22, %s23
    %p27 = pneg %p21
    %p28 = scmp.eq.s32.totalorder %s12, 1
    %p29 = por %p27, %p28
    %p30 = scmp.ne.s32.totalorder %s22, %s25
    %p31 = scmp.eq.s32.totalorder %s12, 0
    %p32 = por %p30, %p31
    %p33 = scmp.ne.s32.totalorder %s22, %s25
    %p34 = scmp.eq.s32.totalorder %s17, 1
    %p35 = por %p33, %p34
    %p36 = scmp.ne.s32.totalorder %s25, %s26
    %p37 = scmp.eq.s32.totalorder %s17, 0
    %p38 = por %p36, %p37
    %p39 = scmp.ne.s32.totalorder %s25, %s26
    %p40 = scmp.eq.s32.totalorder %s18, 1
    %p41 = por %p39, %p40
    %p43 = scmp.ne.s32.totalorder %s26, %s42
    %p44 = scmp.eq.s32.totalorder %s18, 0
    %p45 = por %p43, %p44
    %s47 = sadd.s32 %s46, 1
    %p50 = scmp.eq.s32.totalorder %s12, 1
    %p51 = scmp.ne.s32.totalorder %s46, %s48
    %p52 = scmp.eq.s32.totalorder %s12, 0
    %p53 = por %p51, %p52
    %p54 = scmp.ne.s32.totalorder %s46, %s48
    %p55 = scmp.eq.s32.totalorder %s17, 1
    %p56 = por %p54, %p55
    %p57 = scmp.ne.s32.totalorder %s48, %s49
    %p58 = scmp.eq.s32.totalorder %s17, 0
    %p59 = por %p57, %p58
    %p60 = scmp.ne.s32.totalorder %s48, %s49
    %p61 = scmp.eq.s32.totalorder %s18, 1
    %p62 = por %p60, %p61
    %p64 = scmp.ne.s32.totalorder %s49, %s63
    %p65 = scmp.eq.s32.totalorder %s18, 0
    %p66 = por %p64, %p65
    %s68 = sadd.s32 %s67, 1
    %p71 = scmp.eq.s32.totalorder %s12, 1
    %p72 = scmp.ne.s32.totalorder %s67, %s69
    %p73 = scmp.eq.s32.totalorder %s12, 0
    %p74 = por %p72, %p73
    %p75 = scmp.ne.s32.totalorder %s67, %s69
    %p76 = scmp.eq.s32.totalorder %s17, 1
    %p77 = por %p75, %p76
    %p78 = scmp.ne.s32.totalorder %s69, %s70
    %p79 = scmp.eq.s32.totalorder %s17, 0
    %p80 = por %p78, %p79
    %p81 = scmp.ne.s32.totalorder %s69, %s70
    %p82 = scmp.eq.s32.totalorder %s18, 1
    %p83 = por %p81, %p82
    %p85 = scmp.ne.s32.totalorder %s70, %s84
    %p86 = scmp.eq.s32.totalorder %s18, 0
    %p87 = por %p85, %p86
    %s89 = sadd.s32 %s88, 1
    %p92 = scmp.eq.s32.totalorder %s12, 1
    %p93 = scmp.ne.s32.totalorder %s88, %s90
    %p94 = scmp.eq.s32.totalorder %s12, 0
    %p95 = por %p93, %p94
    %p96 = scmp.ne.s32.totalorder %s88, %s90
    %p97 = scmp.eq.s32.totalorder %s17, 1
    %p98 = por %p96, %p97
    %p99 = scmp.ne.s32.totalorder %s90, %s91
    %p100 = scmp.eq.s32.totalorder %s17, 0
    %p101 = por %p99, %p100
    %p102 = scmp.ne.s32.totalorder %s90, %s91
    %p103 = scmp.eq.s32.totalorder %s18, 1
    %p104 = por %p102, %p103
    %p106 = scmp.ne.s32.totalorder %s91, %s105
    %p107 = scmp.eq.s32.totalorder %s18, 0
    %p108 = por %p106, %p107
    %s110 = sadd.s32 %s109, 1
    %p113 = scmp.eq.s32.totalorder %s12, 1
    %p114 = scmp.ne.s32.totalorder %s109, %s111
    %p115 = scmp.eq.s32.totalorder %s12, 0
    %p116 = por %p114, %p115
    %p117 = scmp.ne.s32.totalorder %s109, %s111
    %p118 = scmp.eq.s32.totalorder %s17, 1
    %p119 = por %p117, %p118
    %p120 = scmp.ne.s32.totalorder %s111, %s112
    %p121 = scmp.eq.s32.totalorder %s17, 0
    %p122 = por %p120, %p121
    %p123 = scmp.ne.s32.totalorder %s111, %s112
    %p124 = scmp.eq.s32.totalorder %s18, 1
    %p125 = por %p123, %p124
    %p127 = scmp.ne.s32.totalorder %s112, %s126
    %p128 = scmp.eq.s32.totalorder %s18, 0
    %p129 = por %p127, %p128
    %s131 = sadd.s32 %s130, 1
    %p134 = scmp.eq.s32.totalorder %s12, 1
    %p135 = scmp.ne.s32.totalorder %s130, %s132
    %p136 = scmp.eq.s32.totalorder %s12, 0
    %p137 = por %p135, %p136
    %p138 = scmp.ne.s32.totalorder %s130, %s132
    %p139 = scmp.eq.s32.totalorder %s17, 1
    %p140 = por %p138, %p139
    %p141 = scmp.ne.s32.totalorder %s132, %s133
    %p142 = scmp.eq.s32.totalorder %s17, 0
    %p143 = por %p141, %p142
    %p144 = scmp.ne.s32.totalorder %s132, %s133
    %p145 = scmp.eq.s32.totalorder %s18, 1
    %p146 = por %p144, %p145
    %p148 = scmp.ne.s32.totalorder %s133, %s147
    %p149 = scmp.eq.s32.totalorder %s18, 0
    %p150 = por %p148, %p149
    %s151 = ssub.s32 %s12, %s19
    %p152 = scmp.eq.s32.totalorder %s151, 0
    %s154 = sadd.s32 %s153, 1
    %s155 = scalar_select %p152, %s153, %s154
    %p158 = pneg %p152
    %p159 = scmp.eq.s32.totalorder %s12, 1
    %p160 = por %p158, %p159
    %p161 = scmp.ne.s32.totalorder %s153, %s156
    %p162 = scmp.eq.s32.totalorder %s12, 0
    %p163 = por %p161, %p162
    %p164 = scmp.ne.s32.totalorder %s153, %s156
    %p165 = scmp.eq.s32.totalorder %s17, 1
    %p166 = por %p164, %p165
    %p167 = scmp.ne.s32.totalorder %s156, %s157
    %p168 = scmp.eq.s32.totalorder %s17, 0
    %p169 = por %p167, %p168
    %p170 = scmp.ne.s32.totalorder %s156, %s157
    %p171 = scmp.eq.s32.totalorder %s18, 1
    %p172 = por %p170, %p171
    %p174 = scmp.ne.s32.totalorder %s157, %s173
    %p175 = scmp.eq.s32.totalorder %s18, 0
    %p176 = por %p174, %p175
    %p177 = scmp.le.s32.totalorder 1, %s12
    %p178 = scmp.lt.s32.totalorder %s12, 3
    %p179 = pnand %p177, %p178
    %p180 = pneg %p179
    // Predicated region
    $region9: #{conv3_forward.1} parent=5 // pred_check
      _
    $region10: #{conv3_forward.1} parent=5 // pred_check_branch
      %182 = sbr.rel (%p179) target = $region12
    $region11: #{conv3_forward.1} parent=5 // pred_region
      %s183 = ssub.s32 %s12, 1
      // Predicated region
      $region13: #{conv3_forward.1} parent=11 // pred_check
        %p184 = pneg %p59
      $region14: #{conv3_forward.1} parent=11 // pred_check_branch
        %186 = sbr.rel (%p184) target = $region16
      $region15: #{conv3_forward.1} parent=11 // pred_region
        _
      $region16: #{conv3_forward.1} parent=11 // pred_fallthru
        _
      // Predicated region
      $region17: #{conv3_forward.1} parent=11 // pred_check
        %p187 = pneg %p80
      $region18: #{conv3_forward.1} parent=11 // pred_check_branch
        %189 = sbr.rel (%p187) target = $region20
      $region19: #{conv3_forward.1} parent=11 // pred_region
        _
      $region20: #{conv3_forward.1} parent=11 // pred_fallthru
        _
      // Predicated region
      $region21: #{conv3_forward.1} parent=11 // pred_check
        %p190 = pneg %p101
      $region22: #{conv3_forward.1} parent=11 // pred_check_branch
        %192 = sbr.rel (%p190) target = $region24
      $region23: #{conv3_forward.1} parent=11 // pred_region
        _
      $region24: #{conv3_forward.1} parent=11 // pred_fallthru
        _
      // Predicated region
      $region25: #{conv3_forward.1} parent=11 // pred_check
        %p193 = pneg %p122
      $region26: #{conv3_forward.1} parent=11 // pred_check_branch
        %195 = sbr.rel (%p193) target = $region28
      $region27: #{conv3_forward.1} parent=11 // pred_region
        _
      $region28: #{conv3_forward.1} parent=11 // pred_fallthru
        _
      // Predicated region
      $region29: #{conv3_forward.1} parent=11 // pred_check
        %p196 = pneg %p143
      $region30: #{conv3_forward.1} parent=11 // pred_check_branch
        %198 = sbr.rel (%p196) target = $region32
      $region31: #{conv3_forward.1} parent=11 // pred_region
        _
      $region32: #{conv3_forward.1} parent=11 // pred_fallthru
        _
    $region12: #{conv3_forward.1} parent=5 // pred_fallthru
      _
    %p199 = scmp.lt.s32.totalorder %s12, 2
    // Predicated region
    $region33: #{conv3_forward.1} parent=5 // pred_check
      %p200 = pneg %p199
    $region34: #{conv3_forward.1} parent=5 // pred_check_branch
      %202 = sbr.rel (%p200) target = $region36
    $region35: #{conv3_forward.1} parent=5 // pred_region
      // Predicated region
      $region37: #{conv3_forward.1} parent=35 // pred_check
        %p203 = pneg %p32
      $region38: #{conv3_forward.1} parent=35 // pred_check_branch
        %205 = sbr.rel (%p203) target = $region40
      $region39: #{conv3_forward.1} parent=35 // pred_region
        %p206 = scmp.lt.s32.totalorder %s12, 1
        %s207 = scalar_select %p206, %s12, 1
        %s208 = smul.addr %s207, 2
        %s209 = smul.addr %s208, 8
        %s210 = scalar_lea.vmem %s0, %s209
      $region40: #{conv3_forward.1} parent=35 // pred_fallthru
        _
    $region36: #{conv3_forward.1} parent=5 // pred_fallthru
      _
    %p211 = scmp.le.s32.totalorder 1, %s12
    %p212 = scmp.lt.s32.totalorder %s12, 3
    %p213 = pnand %p211, %p212
    %p214 = pneg %p213
    // Predicated region
    $region41: #{conv3_forward.1} parent=5 // pred_check
      _
    $region42: #{conv3_forward.1} parent=5 // pred_check_branch
      %216 = sbr.rel (%p213) target = $region44
    $region43: #{conv3_forward.1} parent=5 // pred_region
      %s217 = ssub.s32 %s12, 1
      %p218 = scmp.lt.s32.totalorder %s17, 1
      %s219 = scalar_select %p218, %s17, 1
      %s220 = smul.addr %s219, 2
      %s221 = smul.addr %s220, 8
      %s222 = scalar_lea.vmem %s0, %s221
      %p223 = pneg %p38
      %p224 = pneg %p35
      %p225 = pneg %p59
      %p226 = pneg %p56
      %p227 = pneg %p80
      %p228 = pneg %p77
      %p229 = pneg %p101
      %p230 = pneg %p98
      %p231 = pneg %p122
      %p232 = pneg %p119
      %p233 = pneg %p143
      %p234 = pneg %p140
      %p235 = pneg %p169
      %p236 = pneg %p166
      %p237 = scmp.lt.s32.totalorder %s17, 1
      %s238 = scalar_select %p237, %s17, 1
      %s239 = smul.addr %s238, 4
      %s240 = smul.addr %s239, 8
      %s241 = scalar_lea.vmem %s6, %s240
      %p242 = scmp.lt.s32.totalorder %s17, 1
      %s243 = scalar_select %p242, %s17, 1
      %s244 = smul.addr %s243, 2
      %s245 = smul.addr %s244, 8
      %s246 = scalar_lea.vmem %s0, %s245
      %p247 = scmp.lt.s32.totalorder %s17, 1
      %s248 = scalar_select %p247, %s17, 1
      %s249 = smul.addr %s248, 4
      %s250 = smul.addr %s249, 8
      %s251 = scalar_lea.vmem %s6, %s250
      %v252 = vld [vmem:[%s5] sm:$0xff]
      %v253 = vld [vmem:[%s5 + $0x8] sm:$0xff]
      %v254 = vld [vmem:[%s5 + $0x10] sm:$0xff]
      %v255 = vld [vmem:[%s5 + $0x18] sm:$0xff]
      %v256 = vld [vmem:[%s5 + $0x20] sm:$0xff]
      %v257 = vld [vmem:[%s5 + $0x28] sm:$0xff]
      %v258 = vld [vmem:[%s5 + $0x30] sm:$0xff]
      %v259 = vld [vmem:[%s5 + $0x38] sm:$0xff]
      %v260 = vld [vmem:[%s5 + $0x40] sm:$0xff]
      %v261 = vld [vmem:[%s5 + $0x48] sm:$0xff]
      %v262 = vld [vmem:[%s5 + $0x50] sm:$0xff]
      %v263 = vld [vmem:[%s5 + $0x58] sm:$0xff]
      %v264 = vld [vmem:[%s5 + $0x60] sm:$0xff]
      %v265 = vld [vmem:[%s5 + $0x68] sm:$0xff]
      %v266 = vld [vmem:[%s5 + $0x70] sm:$0xff]
      %v267 = vld [vmem:[%s5 + $0x78] sm:$0xff]
      %v268 = vld [vmem:[%s5 + $0x80] sm:$0xff]
      %v269 = vld [vmem:[%s5 + $0x88] sm:$0xff]
      %v270 = vld [vmem:[%s5 + $0x90] sm:$0xff]
      %v271 = vld [vmem:[%s5 + $0x98] sm:$0xff]
      %v272 = vld [vmem:[%s5 + $0xa0] sm:$0xff]
      %v273 = vld [vmem:[%s5 + $0xa8] sm:$0xff]
      %v274 = vld [vmem:[%s5 + $0xb0] sm:$0xff]
      %v275 = vld [vmem:[%s5 + $0xb8] sm:$0xff]
      %v276 = vld [vmem:[%s5 + $0xc0] sm:$0xff]
      %v277 = vld [vmem:[%s5 + $0xc8] sm:$0xff]
      %v278 = vld [vmem:[%s5 + $0xd0] sm:$0xff]
      %v279 = vld [vmem:[%s5 + $0xd8] sm:$0xff]
      %v280 = vld [vmem:[%s5 + $0xe0] sm:$0xff]
      %v281 = vld [vmem:[%s5 + $0xe8] sm:$0xff]
      %v282 = vld [vmem:[%s5 + $0xf0] sm:$0xff]
      %v283 = vld [vmem:[%s5 + $0xf8] sm:$0xff]
      %v284 = vld [vmem:[%s5 + $0x100] sm:$0xff]
      %v285 = vld [vmem:[%s5 + $0x108] sm:$0xff]
      %v286 = vld [vmem:[%s5 + $0x110] sm:$0xff]
      %v287 = vld [vmem:[%s5 + $0x118] sm:$0xff]
      %v288 = vld [vmem:[%s5 + $0x120] sm:$0xff]
      %v289 = vld [vmem:[%s5 + $0x128] sm:$0xff]
      %v290 = vld [vmem:[%s5 + $0x130] sm:$0xff]
      %v291 = vld [vmem:[%s5 + $0x138] sm:$0xff]
      %v292 = vld [vmem:[%s5 + $0x140] sm:$0xff]
      %v293 = vld [vmem:[%s5 + $0x148] sm:$0xff]
      %v294 = vld [vmem:[%s5 + $0x150] sm:$0xff]
      %v295 = vld [vmem:[%s5 + $0x158] sm:$0xff]
      %v296 = vld [vmem:[%s5 + $0x160] sm:$0xff]
      %v297 = vld [vmem:[%s5 + $0x168] sm:$0xff]
      %v298 = vld [vmem:[%s5 + $0x170] sm:$0xff]
      %v299 = vld [vmem:[%s5 + $0x178] sm:$0xff]
      %v300 = vld [vmem:[%s5 + $0x180] sm:$0xff]
      %v301 = vld [vmem:[%s5 + $0x188] sm:$0xff]
      %v302 = vld [vmem:[%s5 + $0x190] sm:$0xff]
      %v303 = vld [vmem:[%s5 + $0x198] sm:$0xff]
      %v304 = vld [vmem:[%s5 + $0x1a0] sm:$0xff]
      %v305 = vld [vmem:[%s5 + $0x1a8] sm:$0xff]
      %v306 = vld [vmem:[%s5 + $0x1b0] sm:$0xff]
      %v307 = vld [vmem:[%s5 + $0x1b8] sm:$0xff]
      %v308 = vld [vmem:[%s5 + $0x1c0] sm:$0xff]
      %v309 = vld [vmem:[%s5 + $0x1c8] sm:$0xff]
      %v310 = vld [vmem:[%s5 + $0x1d0] sm:$0xff]
      %v311 = vld [vmem:[%s5 + $0x1d8] sm:$0xff]
      %v312 = vld [vmem:[%s5 + $0x1e0] sm:$0xff]
      %v313 = vld [vmem:[%s5 + $0x1e8] sm:$0xff]
      %v314 = vld [vmem:[%s5 + $0x1f0] sm:$0xff]
      %v315 = vld [vmem:[%s5 + $0x1f8] sm:$0xff]
      %v316 = vld [vmem:[%s246] sm:$0xff]
      %v317 = vld [vmem:[%s246 + $0x8] sm:$0xff]
      %vm318 = vcmask 385024
      %319 = vst.msk [vmem:[#allocation2] sm:$0x1] %vm318, 0.0
      %320 = vst.msk [vmem:[#allocation2 + $0x11] sm:$0x1] %vm318, 0.0
      %vm321 = vcmask 392192
      %322 = vst.msk [vmem:[#allocation2 + $0x1] sm:$0xff] %vm321, %v316
      %323 = vst.msk [vmem:[#allocation2 + $0x9] sm:$0xff] %vm321, %v317
      %v324 = vld [vmem:[#allocation2] sm:$0xff]
      %v325 = vld [vmem:[#allocation2 + $0x8] sm:$0xff]
      %v326 = vld [vmem:[%s1] sm:$0xff]
      %v327 = vld [vmem:[%s1 + $0x8] sm:$0xff]
      %v328 = vld [vmem:[%s1 + $0x10] sm:$0xff]
      %v329 = vld [vmem:[%s1 + $0x18] sm:$0xff]
      %v330 = vld [vmem:[%s1 + $0x20] sm:$0xff]
      %v331 = vld [vmem:[%s1 + $0x28] sm:$0xff]
      %v332 = vld [vmem:[%s1 + $0x30] sm:$0xff]
      %v333 = vld [vmem:[%s1 + $0x38] sm:$0xff]
      %v334 = vld [vmem:[%s1 + $0x40] sm:$0xff]
      %v335 = vld [vmem:[%s1 + $0x48] sm:$0xff]
      %v336 = vld [vmem:[%s1 + $0x50] sm:$0xff]
      %v337 = vld [vmem:[%s1 + $0x58] sm:$0xff]
      %v338 = vld [vmem:[#allocation2 + $0x1] sm:$0xff]
      %v339 = vld [vmem:[#allocation2 + $0x9] sm:$0xff]
      %s340 = scalar_lea.vmem %s1, 96
      %v341 = vld [vmem:[%s340] sm:$0xff]
      %v342 = vld [vmem:[%s340 + $0x8] sm:$0xff]
      %v343 = vld [vmem:[%s340 + $0x10] sm:$0xff]
      %v344 = vld [vmem:[%s340 + $0x18] sm:$0xff]
      %v345 = vld [vmem:[%s340 + $0x20] sm:$0xff]
      %v346 = vld [vmem:[%s340 + $0x28] sm:$0xff]
      %v347 = vld [vmem:[%s340 + $0x30] sm:$0xff]
      %v348 = vld [vmem:[%s340 + $0x38] sm:$0xff]
      %v349 = vld [vmem:[%s340 + $0x40] sm:$0xff]
      %v350 = vld [vmem:[%s340 + $0x48] sm:$0xff]
      %v351 = vld [vmem:[%s340 + $0x50] sm:$0xff]
      %v352 = vld [vmem:[%s340 + $0x58] sm:$0xff]
      %v354 = vsel %vm321, %v338, 0
      %v357 = vsel %vm321, %v339, 0
      %359 = vmatpush.msra.mxu0 0.0
      %360 = vmatpush.msra.mxu0 0.0
      %361 = vmatpush.msra.mxu0 0.0
      %362 = vmatpush.msra.mxu0 0.0
      %363 = vmatpush.msra.mxu0 0.0
      %364 = vmatpush.msra.mxu0 0.0
      %365 = vmatpush.msra.mxu0 0.0
      %366 = vmatpush.msra.mxu0 0.0
      %367 = vmatpush.msra.mxu0 0.0
      %368 = vmatpush.msra.mxu0 0.0
      %369 = vmatpush.msra.mxu0 %v351
      %370 = vmatpush.msra.mxu0 %v349
      %371 = vmatpush.msra.mxu0 %v347
      %372 = vmatpush.msra.mxu0 %v345
      %373 = vmatpush.msra.mxu0 %v343
      %374 = vmatpush.msra.mxu0 %v341
      %375 = vmatmul.f32.gmra.mxu0 %v354
      %v376 = vpop.f32.mrf.mxu0
      %v377 = vadd.f32 0.0, %v376
      %378 = vmatmul.f32.gmra.mxu0 %v357
      %v379 = vpop.f32.mrf.mxu0
      %v380 = vadd.f32 0.0, %v379
      %381 = vdwg.mxu0
      %382 = vmatpush.msra.mxu0 0.0
      %383 = vmatpush.msra.mxu0 0.0
      %384 = vmatpush.msra.mxu0 0.0
      %385 = vmatpush.msra.mxu0 0.0
      %386 = vmatpush.msra.mxu0 0.0
      %387 = vmatpush.msra.mxu0 0.0
      %388 = vmatpush.msra.mxu0 0.0
      %389 = vmatpush.msra.mxu0 0.0
      %390 = vmatpush.msra.mxu0 0.0
      %391 = vmatpush.msra.mxu0 0.0
      %392 = vmatpush.msra.mxu0 %v352
      %393 = vmatpush.msra.mxu0 %v350
      %394 = vmatpush.msra.mxu0 %v348
      %395 = vmatpush.msra.mxu0 %v346
      %396 = vmatpush.msra.mxu0 %v344
      %397 = vmatpush.msra.mxu0 %v342
      %398 = vmatmul.f32.gmra.mxu0 %v354
      %v399 = vpop.f32.mrf.mxu0
      %v400 = vadd.f32 0.0, %v399
      %401 = vmatmul.f32.gmra.mxu0 %v357
      %v402 = vpop.f32.mrf.mxu0
      %v403 = vadd.f32 0.0, %v402
      %404 = vdwg.mxu0
      %v406 = vsel %vm321, %v324, 0
      %v409 = vsel %vm321, %v325, 0
      %411 = vmatpush.msra.mxu0 0.0
      %412 = vmatpush.msra.mxu0 0.0
      %413 = vmatpush.msra.mxu0 0.0
      %414 = vmatpush.msra.mxu0 0.0
      %415 = vmatpush.msra.mxu0 0.0
      %416 = vmatpush.msra.mxu0 0.0
      %417 = vmatpush.msra.mxu0 0.0
      %418 = vmatpush.msra.mxu0 0.0
      %419 = vmatpush.msra.mxu0 0.0
      %420 = vmatpush.msra.mxu0 0.0
      %421 = vmatpush.msra.mxu0 %v336
      %422 = vmatpush.msra.mxu0 %v334
      %423 = vmatpush.msra.mxu0 %v332
      %424 = vmatpush.msra.mxu0 %v330
      %425 = vmatpush.msra.mxu0 %v328
      %426 = vmatpush.msra.mxu0 %v326
      %427 = vmatmul.f32.gmra.mxu0 %v406
      %v428 = vpop.f32.mrf.mxu0
      %v429 = vadd.f32 %v377, %v428
      %430 = vmatmul.f32.gmra.mxu0 %v409
      %v431 = vpop.f32.mrf.mxu0
      %v432 = vadd.f32 %v380, %v431
      %433 = vdwg.mxu0
      %434 = vmatpush.msra.mxu0 0.0
      %435 = vmatpush.msra.mxu0 0.0
      %436 = vmatpush.msra.mxu0 0.0
      %437 = vmatpush.msra.mxu0 0.0
      %438 = vmatpush.msra.mxu0 0.0
      %439 = vmatpush.msra.mxu0 0.0
      %440 = vmatpush.msra.mxu0 0.0
      %441 = vmatpush.msra.mxu0 0.0
      %442 = vmatpush.msra.mxu0 0.0
      %443 = vmatpush.msra.mxu0 0.0
      %444 = vmatpush.msra.mxu0 %v337
      %445 = vmatpush.msra.mxu0 %v335
      %446 = vmatpush.msra.mxu0 %v333
      %447 = vmatpush.msra.mxu0 %v331
      %448 = vmatpush.msra.mxu0 %v329
      %449 = vmatpush.msra.mxu0 %v327
      %450 = vmatmul.f32.gmra.mxu0 %v406
      %v451 = vpop.f32.mrf.mxu0
      %v452 = vadd.f32 %v400, %v451
      %453 = vmatmul.f32.gmra.mxu0 %v409
      %v454 = vpop.f32.mrf.mxu0
      %v455 = vadd.f32 %v403, %v454
      %456 = vdwg.mxu0
      %v457 = vld [vmem:[#allocation2 + $0x2] sm:$0xff]
      %v458 = vld [vmem:[#allocation2 + $0xa] sm:$0xff]
      %s459 = scalar_lea.vmem %s1, 192
      %v460 = vld [vmem:[%s459] sm:$0xff]
      %v461 = vld [vmem:[%s459 + $0x8] sm:$0xff]
      %v462 = vld [vmem:[%s459 + $0x10] sm:$0xff]
      %v463 = vld [vmem:[%s459 + $0x18] sm:$0xff]
      %v464 = vld [vmem:[%s459 + $0x20] sm:$0xff]
      %v465 = vld [vmem:[%s459 + $0x28] sm:$0xff]
      %v466 = vld [vmem:[%s459 + $0x30] sm:$0xff]
      %v467 = vld [vmem:[%s459 + $0x38] sm:$0xff]
      %v468 = vld [vmem:[%s459 + $0x40] sm:$0xff]
      %v469 = vld [vmem:[%s459 + $0x48] sm:$0xff]
      %v470 = vld [vmem:[%s459 + $0x50] sm:$0xff]
      %v471 = vld [vmem:[%s459 + $0x58] sm:$0xff]
      %v473 = vsel %vm321, %v457, 0
      %v476 = vsel %vm321, %v458, 0
      %478 = vmatpush.msra.mxu0 0.0
      %479 = vmatpush.msra.mxu0 0.0
      %480 = vmatpush.msra.mxu0 0.0
      %481 = vmatpush.msra.mxu0 0.0
      %482 = vmatpush.msra.mxu0 0.0
      %483 = vmatpush.msra.mxu0 0.0
      %484 = vmatpush.msra.mxu0 0.0
      %485 = vmatpush.msra.mxu0 0.0
      %486 = vmatpush.msra.mxu0 0.0
      %487 = vmatpush.msra.mxu0 0.0
      %488 = vmatpush.msra.mxu0 %v470
      %489 = vmatpush.msra.mxu0 %v468
      %490 = vmatpush.msra.mxu0 %v466
      %491 = vmatpush.msra.mxu0 %v464
      %492 = vmatpush.msra.mxu0 %v462
      %493 = vmatpush.msra.mxu0 %v460
      %494 = vmatmul.f32.gmra.mxu0 %v473
      %v495 = vpop.f32.mrf.mxu0
      %v496 = vadd.f32 0.0, %v495
      %497 = vmatmul.f32.gmra.mxu0 %v476
      %v498 = vpop.f32.mrf.mxu0
      %v499 = vadd.f32 0.0, %v498
      %500 = vdwg.mxu0
      %501 = vmatpush.msra.mxu0 0.0
      %502 = vmatpush.msra.mxu0 0.0
      %503 = vmatpush.msra.mxu0 0.0
      %504 = vmatpush.msra.mxu0 0.0
      %505 = vmatpush.msra.mxu0 0.0
      %506 = vmatpush.msra.mxu0 0.0
      %507 = vmatpush.msra.mxu0 0.0
      %508 = vmatpush.msra.mxu0 0.0
      %509 = vmatpush.msra.mxu0 0.0
      %510 = vmatpush.msra.mxu0 0.0
      %511 = vmatpush.msra.mxu0 %v471
      %512 = vmatpush.msra.mxu0 %v469
      %513 = vmatpush.msra.mxu0 %v467
      %514 = vmatpush.msra.mxu0 %v465
      %515 = vmatpush.msra.mxu0 %v463
      %516 = vmatpush.msra.mxu0 %v461
      %517 = vmatmul.f32.gmra.mxu0 %v473
      %v518 = vpop.f32.mrf.mxu0
      %v519 = vadd.f32 0.0, %v518
      %520 = vmatmul.f32.gmra.mxu0 %v476
      %v521 = vpop.f32.mrf.mxu0
      %v522 = vadd.f32 0.0, %v521
      %523 = vdwg.mxu0
      %v524 = vadd.f32 %v429, %v496
      %v525 = vadd.f32 %v452, %v519
      %v526 = vadd.f32 %v432, %v499
      %v527 = vadd.f32 %v455, %v522
      %v528 = vld [vmem:[%s4] sm:$0x77]
      %v530 = vperm.slane %v528, 0
      %v531 = vperm.slane %v528, 4
      %v534 = vperm.slane %v530, 0
      %v535 = vperm.slane %v531, 0
      %v536 = vadd.f32 %v524, %v534
      %v537 = vadd.f32 %v525, %v535
      %v538 = vadd.f32 %v526, %v534
      %v539 = vadd.f32 %v527, %v535
      %v540 = vadd.f32 %v536, %v538
      %v541 = vrot.slane %v540, 4
      %v542 = vadd.f32 %v540, %v541
      %v543 = vrot.slane %v542, 2
      %v544 = vadd.f32 %v542, %v543
      %v545 = vrot.slane %v544, 1
      %v546 = vadd.f32 %v544, %v545
      %v547 = vadd.f32 %v537, %v539
      %v548 = vrot.slane %v547, 4
      %v549 = vadd.f32 %v547, %v548
      %v550 = vrot.slane %v549, 2
      %v551 = vadd.f32 %v549, %v550
      %v552 = vrot.slane %v551, 1
      %v553 = vadd.f32 %v551, %v552
      %554 = vmatpush.msra.mxu0 %v282
      %555 = vmatpush.msra.mxu0 %v280
      %556 = vmatpush.msra.mxu0 %v278
      %557 = vmatpush.msra.mxu0 %v276
      %558 = vmatpush.msra.mxu0 %v274
      %559 = vmatpush.msra.mxu0 %v272
      %560 = vmatpush.msra.mxu0 %v270
      %561 = vmatpush.msra.mxu0 %v268
      %562 = vmatpush.msra.mxu0 %v266
      %563 = vmatpush.msra.mxu0 %v264
      %564 = vmatpush.msra.mxu0 %v262
      %565 = vmatpush.msra.mxu0 %v260
      %566 = vmatpush.msra.mxu0 %v258
      %567 = vmatpush.msra.mxu0 %v256
      %568 = vmatpush.msra.mxu0 %v254
      %569 = vmatpush.msra.mxu0 %v252
      %570 = vmatmul.f32.gmra.mxu0 %v546
      %v571 = vpop.f32.mrf.mxu0
      %v572 = vadd.f32 0.0, %v571
      %573 = vdwg.mxu0
      %574 = vmatpush.msra.mxu0 %v314
      %575 = vmatpush.msra.mxu0 %v312
      %576 = vmatpush.msra.mxu0 %v310
      %577 = vmatpush.msra.mxu0 %v308
      %578 = vmatpush.msra.mxu0 %v306
      %579 = vmatpush.msra.mxu0 %v304
      %580 = vmatpush.msra.mxu0 %v302
      %581 = vmatpush.msra.mxu0 %v300
      %582 = vmatpush.msra.mxu0 %v298
      %583 = vmatpush.msra.mxu0 %v296
      %584 = vmatpush.msra.mxu0 %v294
      %585 = vmatpush.msra.mxu0 %v292
      %586 = vmatpush.msra.mxu0 %v290
      %587 = vmatpush.msra.mxu0 %v288
      %588 = vmatpush.msra.mxu0 %v286
      %589 = vmatpush.msra.mxu0 %v284
      %590 = vmatmul.f32.gmra.mxu0 %v553
      %v591 = vpop.f32.mrf.mxu0
      %v592 = vadd.f32 %v572, %v591
      %593 = vdwg.mxu0
      %594 = vmatpush.msra.mxu0 %v283
      %595 = vmatpush.msra.mxu0 %v281
      %596 = vmatpush.msra.mxu0 %v279
      %597 = vmatpush.msra.mxu0 %v277
      %598 = vmatpush.msra.mxu0 %v275
      %599 = vmatpush.msra.mxu0 %v273
      %600 = vmatpush.msra.mxu0 %v271
      %601 = vmatpush.msra.mxu0 %v269
      %602 = vmatpush.msra.mxu0 %v267
      %603 = vmatpush.msra.mxu0 %v265
      %604 = vmatpush.msra.mxu0 %v263
      %605 = vmatpush.msra.mxu0 %v261
      %606 = vmatpush.msra.mxu0 %v259
      %607 = vmatpush.msra.mxu0 %v257
      %608 = vmatpush.msra.mxu0 %v255
      %609 = vmatpush.msra.mxu0 %v253
      %610 = vmatmul.f32.gmra.mxu0 %v546
      %v611 = vpop.f32.mrf.mxu0
      %v612 = vadd.f32 0.0, %v611
      %613 = vdwg.mxu0
      %614 = vmatpush.msra.mxu0 %v315
      %615 = vmatpush.msra.mxu0 %v313
      %616 = vmatpush.msra.mxu0 %v311
      %617 = vmatpush.msra.mxu0 %v309
      %618 = vmatpush.msra.mxu0 %v307
      %619 = vmatpush.msra.mxu0 %v305
      %620 = vmatpush.msra.mxu0 %v303
      %621 = vmatpush.msra.mxu0 %v301
      %622 = vmatpush.msra.mxu0 %v299
      %623 = vmatpush.msra.mxu0 %v297
      %624 = vmatpush.msra.mxu0 %v295
      %625 = vmatpush.msra.mxu0 %v293
      %626 = vmatpush.msra.mxu0 %v291
      %627 = vmatpush.msra.mxu0 %v289
      %628 = vmatpush.msra.mxu0 %v287
      %629 = vmatpush.msra.mxu0 %v285
      %630 = vmatmul.f32.gmra.mxu0 %v553
      %v631 = vpop.f32.mrf.mxu0
      %v632 = vadd.f32 %v612, %v631
      %633 = vdwg.mxu0
      %v634 = vperm.slane %v592, 0
      %v635 = vperm.slane %v632, 0
      %v636 = vsub.f32 %v536, %v634
      %v637 = vsub.f32 %v537, %v635
      %v638 = vsub.f32 %v538, %v634
      %v639 = vsub.f32 %v539, %v635
      %v640 = vmul.f32 %v636, %v636
      %v641 = vmul.f32 %v637, %v637
      %v642 = vmul.f32 %v638, %v638
      %v643 = vmul.f32 %v639, %v639
      %v644 = vadd.f32 %v640, %v642
      %v645 = vrot.slane %v644, 4
      %v646 = vadd.f32 %v644, %v645
      %v647 = vrot.slane %v646, 2
      %v648 = vadd.f32 %v646, %v647
      %v649 = vrot.slane %v648, 1
      %v650 = vadd.f32 %v648, %v649
      %v651 = vadd.f32 %v641, %v643
      %v652 = vrot.slane %v651, 4
      %v653 = vadd.f32 %v651, %v652
      %v654 = vrot.slane %v653, 2
      %v655 = vadd.f32 %v653, %v654
      %v656 = vrot.slane %v655, 1
      %v657 = vadd.f32 %v655, %v656
      %658 = vmatpush.msra.mxu0 %v282
      %659 = vmatpush.msra.mxu0 %v280
      %660 = vmatpush.msra.mxu0 %v278
      %661 = vmatpush.msra.mxu0 %v276
      %662 = vmatpush.msra.mxu0 %v274
      %663 = vmatpush.msra.mxu0 %v272
      %664 = vmatpush.msra.mxu0 %v270
      %665 = vmatpush.msra.mxu0 %v268
      %666 = vmatpush.msra.mxu0 %v266
      %667 = vmatpush.msra.mxu0 %v264
      %668 = vmatpush.msra.mxu0 %v262
      %669 = vmatpush.msra.mxu0 %v260
      %670 = vmatpush.msra.mxu0 %v258
      %671 = vmatpush.msra.mxu0 %v256
      %672 = vmatpush.msra.mxu0 %v254
      %673 = vmatpush.msra.mxu0 %v252
      %674 = vmatmul.f32.gmra.mxu0 %v650
      %v675 = vpop.f32.mrf.mxu0
      %v676 = vadd.f32 1e-05, %v675
      %677 = vdwg.mxu0
      %678 = vmatpush.msra.mxu0 %v314
      %679 = vmatpush.msra.mxu0 %v312
      %680 = vmatpush.msra.mxu0 %v310
      %681 = vmatpush.msra.mxu0 %v308
      %682 = vmatpush.msra.mxu0 %v306
      %683 = vmatpush.msra.mxu0 %v304
      %684 = vmatpush.msra.mxu0 %v302
      %685 = vmatpush.msra.mxu0 %v300
      %686 = vmatpush.msra.mxu0 %v298
      %687 = vmatpush.msra.mxu0 %v296
      %688 = vmatpush.msra.mxu0 %v294
      %689 = vmatpush.msra.mxu0 %v292
      %690 = vmatpush.msra.mxu0 %v290
      %691 = vmatpush.msra.mxu0 %v288
      %692 = vmatpush.msra.mxu0 %v286
      %693 = vmatpush.msra.mxu0 %v284
      %694 = vmatmul.f32.gmra.mxu0 %v657
      %v695 = vpop.f32.mrf.mxu0
      %v696 = vadd.f32 %v676, %v695
      %697 = vdwg.mxu0
      %698 = vmatpush.msra.mxu0 %v283
      %699 = vmatpush.msra.mxu0 %v281
      %700 = vmatpush.msra.mxu0 %v279
      %701 = vmatpush.msra.mxu0 %v277
      %702 = vmatpush.msra.mxu0 %v275
      %703 = vmatpush.msra.mxu0 %v273
      %704 = vmatpush.msra.mxu0 %v271
      %705 = vmatpush.msra.mxu0 %v269
      %706 = vmatpush.msra.mxu0 %v267
      %707 = vmatpush.msra.mxu0 %v265
      %708 = vmatpush.msra.mxu0 %v263
      %709 = vmatpush.msra.mxu0 %v261
      %710 = vmatpush.msra.mxu0 %v259
      %711 = vmatpush.msra.mxu0 %v257
      %712 = vmatpush.msra.mxu0 %v255
      %713 = vmatpush.msra.mxu0 %v253
      %714 = vmatmul.f32.gmra.mxu0 %v650
      %v715 = vpop.f32.mrf.mxu0
      %v716 = vadd.f32 1e-05, %v715
      %717 = vdwg.mxu0
      %718 = vmatpush.msra.mxu0 %v315
      %719 = vmatpush.msra.mxu0 %v313
      %720 = vmatpush.msra.mxu0 %v311
      %721 = vmatpush.msra.mxu0 %v309
      %722 = vmatpush.msra.mxu0 %v307
      %723 = vmatpush.msra.mxu0 %v305
      %724 = vmatpush.msra.mxu0 %v303
      %725 = vmatpush.msra.mxu0 %v301
      %726 = vmatpush.msra.mxu0 %v299
      %727 = vmatpush.msra.mxu0 %v297
      %728 = vmatpush.msra.mxu0 %v295
      %729 = vmatpush.msra.mxu0 %v293
      %730 = vmatpush.msra.mxu0 %v291
      %731 = vmatpush.msra.mxu0 %v289
      %732 = vmatpush.msra.mxu0 %v287
      %733 = vmatpush.msra.mxu0 %v285
      %734 = vmatmul.f32.gmra.mxu0 %v657
      %v735 = vpop.f32.mrf.mxu0
      %v736 = vadd.f32 %v716, %v735
      %737 = vdwg.mxu0
      %v738 = vrsqrt.pop %v696
      %v739 = vmul.f32 %v738, %v696
      %v740 = vmul.f32 %v739, %v738
      %v741 = vmul.f32 0.5, %v740
      %v742 = vsub.f32 1.5, %v741
      %v743 = vmul.f32 %v738, %v742
      %vm744 = vweird.f32 %v696
      %vm745 = vweird.f32 %v738
      %vm746 = vmor %vm744, %vm745
      %v747 = vsel %vm746, %v738, %v743
      %v748 = vrsqrt.pop %v736
      %v749 = vmul.f32 %v748, %v736
      %v750 = vmul.f32 %v749, %v748
      %v751 = vmul.f32 0.5, %v750
      %v752 = vsub.f32 1.5, %v751
      %v753 = vmul.f32 %v748, %v752
      %vm754 = vweird.f32 %v736
      %vm755 = vweird.f32 %v748
      %vm756 = vmor %vm754, %vm755
      %v757 = vsel %vm756, %v748, %v753
      %v758 = vperm.slane %v747, 0
      %v759 = vperm.slane %v757, 0
      %v760 = vmul.f32 %v636, %v758
      %v761 = vmul.f32 %v637, %v759
      %v762 = vmul.f32 %v638, %v758
      %v763 = vmul.f32 %v639, %v759
      %v764 = vperm.slane %v528, 1
      %v765 = vperm.slane %v528, 5
      %v768 = vperm.slane %v764, 1
      %v769 = vperm.slane %v765, 1
      %v770 = vmul.f32 %v760, %v768
      %v771 = vmul.f32 %v761, %v769
      %v772 = vmul.f32 %v762, %v768
      %v773 = vmul.f32 %v763, %v769
      %v774 = vperm.slane %v528, 2
      %v775 = vperm.slane %v528, 6
      %v778 = vperm.slane %v774, 2
      %v779 = vperm.slane %v775, 2
      %v780 = vadd.f32 %v770, %v778
      %v781 = vadd.f32 %v771, %v779
      %v782 = vadd.f32 %v772, %v778
      %v783 = vadd.f32 %v773, %v779
      %v784 = vmax.f32 %v780, 0.0
      %v785 = vmax.f32 %v781, 0.0
      %v786 = vmax.f32 %v782, 0.0
      %v787 = vmax.f32 %v783, 0.0
      %v788 = vlaneseq
      %vm789 = vcmp.ge.s32.totalorder %v788, 0
      %vm790 = vcmp.lt.s32.totalorder %v788, 256
      %vm791 = vmand %vm789, %vm790
      %792 = vst.msk [vmem:[#allocation3] ss:$8 sm:$0x3] %vm791, 0.0
      %793 = vst.msk [vmem:[#allocation3] ss:$8 sm:$0x0] %vm791, 0.0
      %s794 = scalar_lea.vmem [#allocation3], 33
      %795 = vst.msk [vmem:[%s794] ss:$8 sm:$0x3] %vm791, 0.0
      %796 = vst.msk [vmem:[%s794] ss:$8 sm:$0x0] %vm791, 0.0
      %vm801 = vcmask 1040384
      %v802 = vrot.slane %v784, 7
      %v803 = vrot.slane %v785, 7
      %v804 = vrot.slane %v786, 7
      %v805 = vsel %vm801, %v802, %v804
      %v806 = vrot.slane %v787, 7
      %v807 = vsel %vm801, %v803, %v806
      %814 = vst [vmem:[#allocation3] sm:$0xfe] %v802
      %815 = vst [vmem:[#allocation3 + $0x8] sm:$0xfe] %v803
      %816 = vst [vmem:[#allocation3 + $0x10] sm:$0xff] %v805
      %817 = vst [vmem:[#allocation3 + $0x18] sm:$0xff] %v807
      %818 = vst [vmem:[#allocation3 + $0x20] sm:$0x1] %v804
      %819 = vst [vmem:[#allocation3 + $0x28] sm:$0x1] %v806
      %v820 = vld [vmem:[#allocation3] sm:$0xff]
      %v821 = vld [vmem:[#allocation3 + $0x8] sm:$0xff]
      %v822 = vld [vmem:[#allocation3 + $0x10] sm:$0xff]
      %v823 = vld [vmem:[#allocation3 + $0x18] sm:$0xff]
      %v824 = vld [vmem:[%s2] sm:$0xff]
      %v825 = vld [vmem:[%s2 + $0x8] sm:$0xff]
      %v826 = vld [vmem:[%s2 + $0x10] sm:$0xff]
      %v827 = vld [vmem:[%s2 + $0x18] sm:$0xff]
      %v828 = vld [vmem:[%s2 + $0x20] sm:$0xff]
      %v829 = vld [vmem:[%s2 + $0x28] sm:$0xff]
      %v830 = vld [vmem:[%s2 + $0x30] sm:$0xff]
      %v831 = vld [vmem:[%s2 + $0x38] sm:$0xff]
      %v832 = vld [vmem:[%s2 + $0x40] sm:$0xff]
      %v833 = vld [vmem:[%s2 + $0x48] sm:$0xff]
      %v834 = vld [vmem:[%s2 + $0x50] sm:$0xff]
      %v835 = vld [vmem:[%s2 + $0x58] sm:$0xff]
      %v836 = vld [vmem:[%s2 + $0x60] sm:$0xff]
      %v837 = vld [vmem:[%s2 + $0x68] sm:$0xff]
      %v838 = vld [vmem:[%s2 + $0x70] sm:$0xff]
      %v839 = vld [vmem:[%s2 + $0x78] sm:$0xff]
      %v840 = vld [vmem:[%s2 + $0x80] sm:$0xff]
      %v841 = vld [vmem:[%s2 + $0x88] sm:$0xff]
      %v842 = vld [vmem:[%s2 + $0x90] sm:$0xff]
      %v843 = vld [vmem:[%s2 + $0x98] sm:$0xff]
      %v844 = vld [vmem:[%s2 + $0xa0] sm:$0xff]
      %v845 = vld [vmem:[%s2 + $0xa8] sm:$0xff]
      %v846 = vld [vmem:[%s2 + $0xb0] sm:$0xff]
      %v847 = vld [vmem:[%s2 + $0xb8] sm:$0xff]
      %v848 = vld [vmem:[%s2 + $0xc0] sm:$0xff]
      %v849 = vld [vmem:[%s2 + $0xc8] sm:$0xff]
      %v850 = vld [vmem:[%s2 + $0xd0] sm:$0xff]
      %v851 = vld [vmem:[%s2 + $0xd8] sm:$0xff]
      %v852 = vld [vmem:[%s2 + $0xe0] sm:$0xff]
      %v853 = vld [vmem:[%s2 + $0xe8] sm:$0xff]
      %v854 = vld [vmem:[%s2 + $0xf0] sm:$0xff]
      %v855 = vld [vmem:[%s2 + $0xf8] sm:$0xff]
      %v856 = vld [vmem:[%s2 + $0x100] sm:$0xff]
      %v857 = vld [vmem:[%s2 + $0x108] sm:$0xff]
      %v858 = vld [vmem:[%s2 + $0x110] sm:$0xff]
      %v859 = vld [vmem:[%s2 + $0x118] sm:$0xff]
      %v860 = vld [vmem:[%s2 + $0x120] sm:$0xff]
      %v861 = vld [vmem:[%s2 + $0x128] sm:$0xff]
      %v862 = vld [vmem:[%s2 + $0x130] sm:$0xff]
      %v863 = vld [vmem:[%s2 + $0x138] sm:$0xff]
      %v864 = vld [vmem:[%s2 + $0x140] sm:$0xff]
      %v865 = vld [vmem:[%s2 + $0x148] sm:$0xff]
      %v866 = vld [vmem:[%s2 + $0x150] sm:$0xff]
      %v867 = vld [vmem:[%s2 + $0x158] sm:$0xff]
      %v868 = vld [vmem:[%s2 + $0x160] sm:$0xff]
      %v869 = vld [vmem:[%s2 + $0x168] sm:$0xff]
      %v870 = vld [vmem:[%s2 + $0x170] sm:$0xff]
      %v871 = vld [vmem:[%s2 + $0x178] sm:$0xff]
      %v872 = vld [vmem:[%s2 + $0x180] sm:$0xff]
      %v873 = vld [vmem:[%s2 + $0x188] sm:$0xff]
      %v874 = vld [vmem:[%s2 + $0x190] sm:$0xff]
      %v875 = vld [vmem:[%s2 + $0x198] sm:$0xff]
      %v876 = vld [vmem:[%s2 + $0x1a0] sm:$0xff]
      %v877 = vld [vmem:[%s2 + $0x1a8] sm:$0xff]
      %v878 = vld [vmem:[%s2 + $0x1b0] sm:$0xff]
      %v879 = vld [vmem:[%s2 + $0x1b8] sm:$0xff]
      %v880 = vld [vmem:[%s2 + $0x1c0] sm:$0xff]
      %v881 = vld [vmem:[%s2 + $0x1c8] sm:$0xff]
      %v882 = vld [vmem:[%s2 + $0x1d0] sm:$0xff]
      %v883 = vld [vmem:[%s2 + $0x1d8] sm:$0xff]
      %v884 = vld [vmem:[%s2 + $0x1e0] sm:$0xff]
      %v885 = vld [vmem:[%s2 + $0x1e8] sm:$0xff]
      %v886 = vld [vmem:[%s2 + $0x1f0] sm:$0xff]
      %v887 = vld [vmem:[%s2 + $0x1f8] sm:$0xff]
      %v888 = vld [vmem:[#allocation3] sm:$0xfe]
      %v889 = vld [vmem:[#allocation3 + $0x8] sm:$0xfe]
      %v890 = vld [vmem:[#allocation3 + $0x20] sm:$0x1]
      %v891 = vld [vmem:[#allocation3 + $0x28] sm:$0x1]
      %s892 = scalar_lea.vmem %s2, 512
      %v893 = vld [vmem:[%s892] sm:$0xff]
      %v894 = vld [vmem:[%s892 + $0x8] sm:$0xff]
      %v895 = vld [vmem:[%s892 + $0x10] sm:$0xff]
      %v896 = vld [vmem:[%s892 + $0x18] sm:$0xff]
      %v897 = vld [vmem:[%s892 + $0x20] sm:$0xff]
      %v898 = vld [vmem:[%s892 + $0x28] sm:$0xff]
      %v899 = vld [vmem:[%s892 + $0x30] sm:$0xff]
      %v900 = vld [vmem:[%s892 + $0x38] sm:$0xff]
      %v901 = vld [vmem:[%s892 + $0x40] sm:$0xff]
      %v902 = vld [vmem:[%s892 + $0x48] sm:$0xff]
      %v903 = vld [vmem:[%s892 + $0x50] sm:$0xff]
      %v904 = vld [vmem:[%s892 + $0x58] sm:$0xff]
      %v905 = vld [vmem:[%s892 + $0x60] sm:$0xff]
      %v906 = vld [vmem:[%s892 + $0x68] sm:$0xff]
      %v907 = vld [vmem:[%s892 + $0x70] sm:$0xff]
      %v908 = vld [vmem:[%s892 + $0x78] sm:$0xff]
      %v909 = vld [vmem:[%s892 + $0x80] sm:$0xff]
      %v910 = vld [vmem:[%s892 + $0x88] sm:$0xff]
      %v911 = vld [vmem:[%s892 + $0x90] sm:$0xff]
      %v912 = vld [vmem:[%s892 + $0x98] sm:$0xff]
      %v913 = vld [vmem:[%s892 + $0xa0] sm:$0xff]
      %v914 = vld [vmem:[%s892 + $0xa8] sm:$0xff]
      %v915 = vld [vmem:[%s892 + $0xb0] sm:$0xff]
      %v916 = vld [vmem:[%s892 + $0xb8] sm:$0xff]
      %v917 = vld [vmem:[%s892 + $0xc0] sm:$0xff]
      %v918 = vld [vmem:[%s892 + $0xc8] sm:$0xff]
      %v919 = vld [vmem:[%s892 + $0xd0] sm:$0xff]
      %v920 = vld [vmem:[%s892 + $0xd8] sm:$0xff]
      %v921 = vld [vmem:[%s892 + $0xe0] sm:$0xff]
      %v922 = vld [vmem:[%s892 + $0xe8] sm:$0xff]
      %v923 = vld [vmem:[%s892 + $0xf0] sm:$0xff]
      %v924 = vld [vmem:[%s892 + $0xf8] sm:$0xff]
      %v925 = vld [vmem:[%s892 + $0x100] sm:$0xff]
      %v926 = vld [vmem:[%s892 + $0x108] sm:$0xff]
      %v927 = vld [vmem:[%s892 + $0x110] sm:$0xff]
      %v928 = vld [vmem:[%s892 + $0x118] sm:$0xff]
      %v929 = vld [vmem:[%s892 + $0x120] sm:$0xff]
      %v930 = vld [vmem:[%s892 + $0x128] sm:$0xff]
      %v931 = vld [vmem:[%s892 + $0x130] sm:$0xff]
      %v932 = vld [vmem:[%s892 + $0x138] sm:$0xff]
      %v933 = vld [vmem:[%s892 + $0x140] sm:$0xff]
      %v934 = vld [vmem:[%s892 + $0x148] sm:$0xff]
      %v935 = vld [vmem:[%s892 + $0x150] sm:$0xff]
      %v936 = vld [vmem:[%s892 + $0x158] sm:$0xff]
      %v937 = vld [vmem:[%s892 + $0x160] sm:$0xff]
      %v938 = vld [vmem:[%s892 + $0x168] sm:$0xff]
      %v939 = vld [vmem:[%s892 + $0x170] sm:$0xff]
      %v940 = vld [vmem:[%s892 + $0x178] sm:$0xff]
      %v941 = vld [vmem:[%s892 + $0x180] sm:$0xff]
      %v942 = vld [vmem:[%s892 + $0x188] sm:$0xff]
      %v943 = vld [vmem:[%s892 + $0x190] sm:$0xff]
      %v944 = vld [vmem:[%s892 + $0x198] sm:$0xff]
      %v945 = vld [vmem:[%s892 + $0x1a0] sm:$0xff]
      %v946 = vld [vmem:[%s892 + $0x1a8] sm:$0xff]
      %v947 = vld [vmem:[%s892 + $0x1b0] sm:$0xff]
      %v948 = vld [vmem:[%s892 + $0x1b8] sm:$0xff]
      %v949 = vld [vmem:[%s892 + $0x1c0] sm:$0xff]
      %v950 = vld [vmem:[%s892 + $0x1c8] sm:$0xff]
      %v951 = vld [vmem:[%s892 + $0x1d0] sm:$0xff]
      %v952 = vld [vmem:[%s892 + $0x1d8] sm:$0xff]
      %v953 = vld [vmem:[%s892 + $0x1e0] sm:$0xff]
      %v954 = vld [vmem:[%s892 + $0x1e8] sm:$0xff]
      %v955 = vld [vmem:[%s892 + $0x1f0] sm:$0xff]
      %v956 = vld [vmem:[%s892 + $0x1f8] sm:$0xff]
      %vm963 = vcmask 1046528
      %v964 = vrot.slane %v888, 1
      %v965 = vrot.slane %v822, 1
      %v966 = vsel %vm963, %v964, %v965
      %v967 = vrot.slane %v889, 1
      %v968 = vrot.slane %v823, 1
      %v969 = vsel %vm963, %v967, %v968
      %v970 = vrot.slane %v890, 1
      %v971 = vsel %vm963, %v965, %v970
      %v972 = vrot.slane %v891, 1
      %v973 = vsel %vm963, %v968, %v972
      %978 = vmatpush.msra.mxu0 %v923
      %979 = vmatpush.msra.mxu0 %v921
      %980 = vmatpush.msra.mxu0 %v919
      %981 = vmatpush.msra.mxu0 %v917
      %982 = vmatpush.msra.mxu0 %v915
      %983 = vmatpush.msra.mxu0 %v913
      %984 = vmatpush.msra.mxu0 %v911
      %985 = vmatpush.msra.mxu0 %v909
      %986 = vmatpush.msra.mxu0 %v907
      %987 = vmatpush.msra.mxu0 %v905
      %988 = vmatpush.msra.mxu0 %v903
      %989 = vmatpush.msra.mxu0 %v901
      %990 = vmatpush.msra.mxu0 %v899
      %991 = vmatpush.msra.mxu0 %v897
      %992 = vmatpush.msra.mxu0 %v895
      %993 = vmatpush.msra.mxu0 %v893
      %994 = vmatmul.f32.gmra.mxu0 %v966
      %v995 = vpop.f32.mrf.mxu0
      %v996 = vadd.f32 0.0, %v995
      %997 = vmatmul.f32.gmra.mxu0 %v971
      %v998 = vpop.f32.mrf.mxu0
      %v999 = vadd.f32 0.0, %v998
      %1000 = vdwg.mxu0
      %1001 = vmatpush.msra.mxu0 %v955
      %1002 = vmatpush.msra.mxu0 %v953
      %1003 = vmatpush.msra.mxu0 %v951
      %1004 = vmatpush.msra.mxu0 %v949
      %1005 = vmatpush.msra.mxu0 %v947
      %1006 = vmatpush.msra.mxu0 %v945
      %1007 = vmatpush.msra.mxu0 %v943
      %1008 = vmatpush.msra.mxu0 %v941
      %1009 = vmatpush.msra.mxu0 %v939
      %1010 = vmatpush.msra.mxu0 %v937
      %1011 = vmatpush.msra.mxu0 %v935
      %1012 = vmatpush.msra.mxu0 %v933
      %1013 = vmatpush.msra.mxu0 %v931
      %1014 = vmatpush.msra.mxu0 %v929
      %1015 = vmatpush.msra.mxu0 %v927
      %1016 = vmatpush.msra.mxu0 %v925
      %1017 = vmatmul.f32.gmra.mxu0 %v969
      %v1018 = vpop.f32.mrf.mxu0
      %v1019 = vadd.f32 %v996, %v1018
      %1020 = vmatmul.f32.gmra.mxu0 %v973
      %v1021 = vpop.f32.mrf.mxu0
      %v1022 = vadd.f32 %v999, %v1021
      %1023 = vdwg.mxu0
      %1024 = vmatpush.msra.mxu0 %v924
      %1025 = vmatpush.msra.mxu0 %v922
      %1026 = vmatpush.msra.mxu0 %v920
      %1027 = vmatpush.msra.mxu0 %v918
      %1028 = vmatpush.msra.mxu0 %v916
      %1029 = vmatpush.msra.mxu0 %v914
      %1030 = vmatpush.msra.mxu0 %v912
      %1031 = vmatpush.msra.mxu0 %v910
      %1032 = vmatpush.msra.mxu0 %v908
      %1033 = vmatpush.msra.mxu0 %v906
      %1034 = vmatpush.msra.mxu0 %v904
      %1035 = vmatpush.msra.mxu0 %v902
      %1036 = vmatpush.msra.mxu0 %v900
      %1037 = vmatpush.msra.mxu0 %v898
      %1038 = vmatpush.msra.mxu0 %v896
      %1039 = vmatpush.msra.mxu0 %v894
      %1040 = vmatmul.f32.gmra.mxu0 %v966
      %v1041 = vpop.f32.mrf.mxu0
      %v1042 = vadd.f32 0.0, %v1041
      %1043 = vmatmul.f32.gmra.mxu0 %v971
      %v1044 = vpop.f32.mrf.mxu0
      %v1045 = vadd.f32 0.0, %v1044
      %1046 = vdwg.mxu0
      %1047 = vmatpush.msra.mxu0 %v956
      %1048 = vmatpush.msra.mxu0 %v954
      %1049 = vmatpush.msra.mxu0 %v952
      %1050 = vmatpush.msra.mxu0 %v950
      %1051 = vmatpush.msra.mxu0 %v948
      %1052 = vmatpush.msra.mxu0 %v946
      %1053 = vmatpush.msra.mxu0 %v944
      %1054 = vmatpush.msra.mxu0 %v942
      %1055 = vmatpush.msra.mxu0 %v940
      %1056 = vmatpush.msra.mxu0 %v938
      %1057 = vmatpush.msra.mxu0 %v936
      %1058 = vmatpush.msra.mxu0 %v934
      %1059 = vmatpush.msra.mxu0 %v932
      %1060 = vmatpush.msra.mxu0 %v930
      %1061 = vmatpush.msra.mxu0 %v928
      %1062 = vmatpush.msra.mxu0 %v926
      %1063 = vmatmul.f32.gmra.mxu0 %v969
      %v1064 = vpop.f32.mrf.mxu0
      %v1065 = vadd.f32 %v1042, %v1064
      %1066 = vmatmul.f32.gmra.mxu0 %v973
      %v1067 = vpop.f32.mrf.mxu0
      %v1068 = vadd.f32 %v1045, %v1067
      %1069 = vdwg.mxu0
      %1070 = vmatpush.msra.mxu0 %v854
      %1071 = vmatpush.msra.mxu0 %v852
      %1072 = vmatpush.msra.mxu0 %v850
      %1073 = vmatpush.msra.mxu0 %v848
      %1074 = vmatpush.msra.mxu0 %v846
      %1075 = vmatpush.msra.mxu0 %v844
      %1076 = vmatpush.msra.mxu0 %v842
      %1077 = vmatpush.msra.mxu0 %v840
      %1078 = vmatpush.msra.mxu0 %v838
      %1079 = vmatpush.msra.mxu0 %v836
      %1080 = vmatpush.msra.mxu0 %v834
      %1081 = vmatpush.msra.mxu0 %v832
      %1082 = vmatpush.msra.mxu0 %v830
      %1083 = vmatpush.msra.mxu0 %v828
      %1084 = vmatpush.msra.mxu0 %v826
      %1085 = vmatpush.msra.mxu0 %v824
      %1086 = vmatmul.f32.gmra.mxu0 %v820
      %v1087 = vpop.f32.mrf.mxu0
      %v1088 = vadd.f32 %v1019, %v1087
      %1089 = vmatmul.f32.gmra.mxu0 %v822
      %v1090 = vpop.f32.mrf.mxu0
      %v1091 = vadd.f32 %v1022, %v1090
      %1092 = vdwg.mxu0
      %1093 = vmatpush.msra.mxu0 %v886
      %1094 = vmatpush.msra.mxu0 %v884
      %1095 = vmatpush.msra.mxu0 %v882
      %1096 = vmatpush.msra.mxu0 %v880
      %1097 = vmatpush.msra.mxu0 %v878
      %1098 = vmatpush.msra.mxu0 %v876
      %1099 = vmatpush.msra.mxu0 %v874
      %1100 = vmatpush.msra.mxu0 %v872
      %1101 = vmatpush.msra.mxu0 %v870
      %1102 = vmatpush.msra.mxu0 %v868
      %1103 = vmatpush.msra.mxu0 %v866
      %1104 = vmatpush.msra.mxu0 %v864
      %1105 = vmatpush.msra.mxu0 %v862
      %1106 = vmatpush.msra.mxu0 %v860
      %1107 = vmatpush.msra.mxu0 %v858
      %1108 = vmatpush.msra.mxu0 %v856
      %1109 = vmatmul.f32.gmra.mxu0 %v821
      %v1110 = vpop.f32.mrf.mxu0
      %v1111 = vadd.f32 %v1088, %v1110
      %1112 = vmatmul.f32.gmra.mxu0 %v823
      %v1113 = vpop.f32.mrf.mxu0
      %v1114 = vadd.f32 %v1091, %v1113
      %1115 = vdwg.mxu0
      %1116 = vmatpush.msra.mxu0 %v855
      %1117 = vmatpush.msra.mxu0 %v853
      %1118 = vmatpush.msra.mxu0 %v851
      %1119 = vmatpush.msra.mxu0 %v849
      %1120 = vmatpush.msra.mxu0 %v847
      %1121 = vmatpush.msra.mxu0 %v845
      %1122 = vmatpush.msra.mxu0 %v843
      %1123 = vmatpush.msra.mxu0 %v841
      %1124 = vmatpush.msra.mxu0 %v839
      %1125 = vmatpush.msra.mxu0 %v837
      %1126 = vmatpush.msra.mxu0 %v835
      %1127 = vmatpush.msra.mxu0 %v833
      %1128 = vmatpush.msra.mxu0 %v831
      %1129 = vmatpush.msra.mxu0 %v829
      %1130 = vmatpush.msra.mxu0 %v827
      %1131 = vmatpush.msra.mxu0 %v825
      %1132 = vmatmul.f32.gmra.mxu0 %v820
      %v1133 = vpop.f32.mrf.mxu0
      %v1134 = vadd.f32 %v1065, %v1133
      %1135 = vmatmul.f32.gmra.mxu0 %v822
      %v1136 = vpop.f32.mrf.mxu0
      %v1137 = vadd.f32 %v1068, %v1136
      %1138 = vdwg.mxu0
      %1139 = vmatpush.msra.mxu0 %v887
      %1140 = vmatpush.msra.mxu0 %v885
      %1141 = vmatpush.msra.mxu0 %v883
      %1142 = vmatpush.msra.mxu0 %v881
      %1143 = vmatpush.msra.mxu0 %v879
      %1144 = vmatpush.msra.mxu0 %v877
      %1145 = vmatpush.msra.mxu0 %v875
      %1146 = vmatpush.msra.mxu0 %v873
      %1147 = vmatpush.msra.mxu0 %v871
      %1148 = vmatpush.msra.mxu0 %v869
      %1149 = vmatpush.msra.mxu0 %v867
      %1150 = vmatpush.msra.mxu0 %v865
      %1151 = vmatpush.msra.mxu0 %v863
      %1152 = vmatpush.msra.mxu0 %v861
      %1153 = vmatpush.msra.mxu0 %v859
      %1154 = vmatpush.msra.mxu0 %v857
      %1155 = vmatmul.f32.gmra.mxu0 %v821
      %v1156 = vpop.f32.mrf.mxu0
      %v1157 = vadd.f32 %v1134, %v1156
      %1158 = vmatmul.f32.gmra.mxu0 %v823
      %v1159 = vpop.f32.mrf.mxu0
      %v1160 = vadd.f32 %v1137, %v1159
      %1161 = vdwg.mxu0
      %v1162 = vld [vmem:[#allocation3] sm:$0xfc]
      %v1163 = vld [vmem:[#allocation3 + $0x8] sm:$0xfc]
      %v1164 = vld [vmem:[#allocation3 + $0x20] sm:$0x3]
      %v1165 = vld [vmem:[#allocation3 + $0x28] sm:$0x3]
      %s1166 = scalar_lea.vmem %s2, 1024
      %v1167 = vld [vmem:[%s1166] sm:$0xff]
      %v1168 = vld [vmem:[%s1166 + $0x8] sm:$0xff]
      %v1169 = vld [vmem:[%s1166 + $0x10] sm:$0xff]
      %v1170 = vld [vmem:[%s1166 + $0x18] sm:$0xff]
      %v1171 = vld [vmem:[%s1166 + $0x20] sm:$0xff]
      %v1172 = vld [vmem:[%s1166 + $0x28] sm:$0xff]
      %v1173 = vld [vmem:[%s1166 + $0x30] sm:$0xff]
      %v1174 = vld [vmem:[%s1166 + $0x38] sm:$0xff]
      %v1175 = vld [vmem:[%s1166 + $0x40] sm:$0xff]
      %v1176 = vld [vmem:[%s1166 + $0x48] sm:$0xff]
      %v1177 = vld [vmem:[%s1166 + $0x50] sm:$0xff]
      %v1178 = vld [vmem:[%s1166 + $0x58] sm:$0xff]
      %v1179 = vld [vmem:[%s1166 + $0x60] sm:$0xff]
      %v1180 = vld [vmem:[%s1166 + $0x68] sm:$0xff]
      %v1181 = vld [vmem:[%s1166 + $0x70] sm:$0xff]
      %v1182 = vld [vmem:[%s1166 + $0x78] sm:$0xff]
      %v1183 = vld [vmem:[%s1166 + $0x80] sm:$0xff]
      %v1184 = vld [vmem:[%s1166 + $0x88] sm:$0xff]
      %v1185 = vld [vmem:[%s1166 + $0x90] sm:$0xff]
      %v1186 = vld [vmem:[%s1166 + $0x98] sm:$0xff]
      %v1187 = vld [vmem:[%s1166 + $0xa0] sm:$0xff]
      %v1188 = vld [vmem:[%s1166 + $0xa8] sm:$0xff]
      %v1189 = vld [vmem:[%s1166 + $0xb0] sm:$0xff]
      %v1190 = vld [vmem:[%s1166 + $0xb8] sm:$0xff]
      %v1191 = vld [vmem:[%s1166 + $0xc0] sm:$0xff]
      %v1192 = vld [vmem:[%s1166 + $0xc8] sm:$0xff]
      %v1193 = vld [vmem:[%s1166 + $0xd0] sm:$0xff]
      %v1194 = vld [vmem:[%s1166 + $0xd8] sm:$0xff]
      %v1195 = vld [vmem:[%s1166 + $0xe0] sm:$0xff]
      %v1196 = vld [vmem:[%s1166 + $0xe8] sm:$0xff]
      %v1197 = vld [vmem:[%s1166 + $0xf0] sm:$0xff]
      %v1198 = vld [vmem:[%s1166 + $0xf8] sm:$0xff]
      %v1199 = vld [vmem:[%s1166 + $0x100] sm:$0xff]
      %v1200 = vld [vmem:[%s1166 + $0x108] sm:$0xff]
      %v1201 = vld [vmem:[%s1166 + $0x110] sm:$0xff]
      %v1202 = vld [vmem:[%s1166 + $0x118] sm:$0xff]
      %v1203 = vld [vmem:[%s1166 + $0x120] sm:$0xff]
      %v1204 = vld [vmem:[%s1166 + $0x128] sm:$0xff]
      %v1205 = vld [vmem:[%s1166 + $0x130] sm:$0xff]
      %v1206 = vld [vmem:[%s1166 + $0x138] sm:$0xff]
      %v1207 = vld [vmem:[%s1166 + $0x140] sm:$0xff]
      %v1208 = vld [vmem:[%s1166 + $0x148] sm:$0xff]
      %v1209 = vld [vmem:[%s1166 + $0x150] sm:$0xff]
      %v1210 = vld [vmem:[%s1166 + $0x158] sm:$0xff]
      %v1211 = vld [vmem:[%s1166 + $0x160] sm:$0xff]
      %v1212 = vld [vmem:[%s1166 + $0x168] sm:$0xff]
      %v1213 = vld [vmem:[%s1166 + $0x170] sm:$0xff]
      %v1214 = vld [vmem:[%s1166 + $0x178] sm:$0xff]
      %v1215 = vld [vmem:[%s1166 + $0x180] sm:$0xff]
      %v1216 = vld [vmem:[%s1166 + $0x188] sm:$0xff]
      %v1217 = vld [vmem:[%s1166 + $0x190] sm:$0xff]
      %v1218 = vld [vmem:[%s1166 + $0x198] sm:$0xff]
      %v1219 = vld [vmem:[%s1166 + $0x1a0] sm:$0xff]
      %v1220 = vld [vmem:[%s1166 + $0x1a8] sm:$0xff]
      %v1221 = vld [vmem:[%s1166 + $0x1b0] sm:$0xff]
      %v1222 = vld [vmem:[%s1166 + $0x1b8] sm:$0xff]
      %v1223 = vld [vmem:[%s1166 + $0x1c0] sm:$0xff]
      %v1224 = vld [vmem:[%s1166 + $0x1c8] sm:$0xff]
      %v1225 = vld [vmem:[%s1166 + $0x1d0] sm:$0xff]
      %v1226 = vld [vmem:[%s1166 + $0x1d8] sm:$0xff]
      %v1227 = vld [vmem:[%s1166 + $0x1e0] sm:$0xff]
      %v1228 = vld [vmem:[%s1166 + $0x1e8] sm:$0xff]
      %v1229 = vld [vmem:[%s1166 + $0x1f0] sm:$0xff]
      %v1230 = vld [vmem:[%s1166 + $0x1f8] sm:$0xff]
      %vm1235 = vcmask 1045504
      %v1236 = vrot.slane %v1162, 2
      %v1237 = vrot.slane %v822, 2
      %v1238 = vsel %vm1235, %v1236, %v1237
      %v1239 = vrot.slane %v1163, 2
      %v1240 = vrot.slane %v823, 2
      %v1241 = vsel %vm1235, %v1239, %v1240
      %v1242 = vrot.slane %v1164, 2
      %v1243 = vsel %vm1235, %v1237, %v1242
      %v1244 = vrot.slane %v1165, 2
      %v1245 = vsel %vm1235, %v1240, %v1244
      %1250 = vmatpush.msra.mxu0 %v1197
      %1251 = vmatpush.msra.mxu0 %v1195
      %1252 = vmatpush.msra.mxu0 %v1193
      %1253 = vmatpush.msra.mxu0 %v1191
      %1254 = vmatpush.msra.mxu0 %v1189
      %1255 = vmatpush.msra.mxu0 %v1187
      %1256 = vmatpush.msra.mxu0 %v1185
      %1257 = vmatpush.msra.mxu0 %v1183
      %1258 = vmatpush.msra.mxu0 %v1181
      %1259 = vmatpush.msra.mxu0 %v1179
      %1260 = vmatpush.msra.mxu0 %v1177
      %1261 = vmatpush.msra.mxu0 %v1175
      %1262 = vmatpush.msra.mxu0 %v1173
      %1263 = vmatpush.msra.mxu0 %v1171
      %1264 = vmatpush.msra.mxu0 %v1169
      %1265 = vmatpush.msra.mxu0 %v1167
      %1266 = vmatmul.f32.gmra.mxu0 %v1238
      %v1267 = vpop.f32.mrf.mxu0
      %v1268 = vadd.f32 0.0, %v1267
      %1269 = vmatmul.f32.gmra.mxu0 %v1243
      %v1270 = vpop.f32.mrf.mxu0
      %v1271 = vadd.f32 0.0, %v1270
      %1272 = vdwg.mxu0
      %1273 = vmatpush.msra.mxu0 %v1229
      %1274 = vmatpush.msra.mxu0 %v1227
      %1275 = vmatpush.msra.mxu0 %v1225
      %1276 = vmatpush.msra.mxu0 %v1223
      %1277 = vmatpush.msra.mxu0 %v1221
      %1278 = vmatpush.msra.mxu0 %v1219
      %1279 = vmatpush.msra.mxu0 %v1217
      %1280 = vmatpush.msra.mxu0 %v1215
      %1281 = vmatpush.msra.mxu0 %v1213
      %1282 = vmatpush.msra.mxu0 %v1211
      %1283 = vmatpush.msra.mxu0 %v1209
      %1284 = vmatpush.msra.mxu0 %v1207
      %1285 = vmatpush.msra.mxu0 %v1205
      %1286 = vmatpush.msra.mxu0 %v1203
      %1287 = vmatpush.msra.mxu0 %v1201
      %1288 = vmatpush.msra.mxu0 %v1199
      %1289 = vmatmul.f32.gmra.mxu0 %v1241
      %v1290 = vpop.f32.mrf.mxu0
      %v1291 = vadd.f32 %v1268, %v1290
      %1292 = vmatmul.f32.gmra.mxu0 %v1245
      %v1293 = vpop.f32.mrf.mxu0
      %v1294 = vadd.f32 %v1271, %v1293
      %1295 = vdwg.mxu0
      %1296 = vmatpush.msra.mxu0 %v1198
      %1297 = vmatpush.msra.mxu0 %v1196
      %1298 = vmatpush.msra.mxu0 %v1194
      %1299 = vmatpush.msra.mxu0 %v1192
      %1300 = vmatpush.msra.mxu0 %v1190
      %1301 = vmatpush.msra.mxu0 %v1188
      %1302 = vmatpush.msra.mxu0 %v1186
      %1303 = vmatpush.msra.mxu0 %v1184
      %1304 = vmatpush.msra.mxu0 %v1182
      %1305 = vmatpush.msra.mxu0 %v1180
      %1306 = vmatpush.msra.mxu0 %v1178
      %1307 = vmatpush.msra.mxu0 %v1176
      %1308 = vmatpush.msra.mxu0 %v1174
      %1309 = vmatpush.msra.mxu0 %v1172
      %1310 = vmatpush.msra.mxu0 %v1170
      %1311 = vmatpush.msra.mxu0 %v1168
      %1312 = vmatmul.f32.gmra.mxu0 %v1238
      %v1313 = vpop.f32.mrf.mxu0
      %v1314 = vadd.f32 0.0, %v1313
      %1315 = vmatmul.f32.gmra.mxu0 %v1243
      %v1316 = vpop.f32.mrf.mxu0
      %v1317 = vadd.f32 0.0, %v1316
      %1318 = vdwg.mxu0
      %1319 = vmatpush.msra.mxu0 %v1230
      %1320 = vmatpush.msra.mxu0 %v1228
      %1321 = vmatpush.msra.mxu0 %v1226
      %1322 = vmatpush.msra.mxu0 %v1224
      %1323 = vmatpush.msra.mxu0 %v1222
      %1324 = vmatpush.msra.mxu0 %v1220
      %1325 = vmatpush.msra.mxu0 %v1218
      %1326 = vmatpush.msra.mxu0 %v1216
      %1327 = vmatpush.msra.mxu0 %v1214
      %1328 = vmatpush.msra.mxu0 %v1212
      %1329 = vmatpush.msra.mxu0 %v1210
      %1330 = vmatpush.msra.mxu0 %v1208
      %1331 = vmatpush.msra.mxu0 %v1206
      %1332 = vmatpush.msra.mxu0 %v1204
      %1333 = vmatpush.msra.mxu0 %v1202
      %1334 = vmatpush.msra.mxu0 %v1200
      %1335 = vmatmul.f32.gmra.mxu0 %v1241
      %v1336 = vpop.f32.mrf.mxu0
      %v1337 = vadd.f32 %v1314, %v1336
      %1338 = vmatmul.f32.gmra.mxu0 %v1245
      %v1339 = vpop.f32.mrf.mxu0
      %v1340 = vadd.f32 %v1317, %v1339
      %1341 = vdwg.mxu0
      %v1342 = vadd.f32 %v1111, %v1291
      %v1343 = vadd.f32 %v1157, %v1337
      %v1344 = vadd.f32 %v1114, %v1294
      %v1345 = vadd.f32 %v1160, %v1340
      %s1346 = scalar_lea.vmem %s4, 8
      %v1347 = vld [vmem:[%s1346] sm:$0x77]
      %v1349 = vperm.slane %v1347, 0
      %v1350 = vperm.slane %v1347, 4
      %v1353 = vperm.slane %v1349, 0
      %v1354 = vperm.slane %v1350, 0
      %v1355 = vadd.f32 %v1342, %v1353
      %v1356 = vadd.f32 %v1343, %v1354
      %v1357 = vadd.f32 %v1344, %v1353
      %v1358 = vadd.f32 %v1345, %v1354
      %v1359 = vadd.f32 %v1355, %v1357
      %v1360 = vrot.slane %v1359, 4
      %v1361 = vadd.f32 %v1359, %v1360
      %v1362 = vrot.slane %v1361, 2
      %v1363 = vadd.f32 %v1361, %v1362
      %v1364 = vrot.slane %v1363, 1
      %v1365 = vadd.f32 %v1363, %v1364
      %v1366 = vadd.f32 %v1356, %v1358
      %v1367 = vrot.slane %v1366, 4
      %v1368 = vadd.f32 %v1366, %v1367
      %v1369 = vrot.slane %v1368, 2
      %v1370 = vadd.f32 %v1368, %v1369
      %v1371 = vrot.slane %v1370, 1
      %v1372 = vadd.f32 %v1370, %v1371
      %1373 = vmatpush.msra.mxu0 %v282
      %1374 = vmatpush.msra.mxu0 %v280
      %1375 = vmatpush.msra.mxu0 %v278
      %1376 = vmatpush.msra.mxu0 %v276
      %1377 = vmatpush.msra.mxu0 %v274
      %1378 = vmatpush.msra.mxu0 %v272
      %1379 = vmatpush.msra.mxu0 %v270
      %1380 = vmatpush.msra.mxu0 %v268
      %1381 = vmatpush.msra.mxu0 %v266
      %1382 = vmatpush.msra.mxu0 %v264
      %1383 = vmatpush.msra.mxu0 %v262
      %1384 = vmatpush.msra.mxu0 %v260
      %1385 = vmatpush.msra.mxu0 %v258
      %1386 = vmatpush.msra.mxu0 %v256
      %1387 = vmatpush.msra.mxu0 %v254
      %1388 = vmatpush.msra.mxu0 %v252
      %1389 = vmatmul.f32.gmra.mxu0 %v1365
      %v1390 = vpop.f32.mrf.mxu0
      %v1391 = vadd.f32 0.0, %v1390
      %1392 = vdwg.mxu0
      %1393 = vmatpush.msra.mxu0 %v314
      %1394 = vmatpush.msra.mxu0 %v312
      %1395 = vmatpush.msra.mxu0 %v310
      %1396 = vmatpush.msra.mxu0 %v308
      %1397 = vmatpush.msra.mxu0 %v306
      %1398 = vmatpush.msra.mxu0 %v304
      %1399 = vmatpush.msra.mxu0 %v302
      %1400 = vmatpush.msra.mxu0 %v300
      %1401 = vmatpush.msra.mxu0 %v298
      %1402 = vmatpush.msra.mxu0 %v296
      %1403 = vmatpush.msra.mxu0 %v294
      %1404 = vmatpush.msra.mxu0 %v292
      %1405 = vmatpush.msra.mxu0 %v290
      %1406 = vmatpush.msra.mxu0 %v288
      %1407 = vmatpush.msra.mxu0 %v286
      %1408 = vmatpush.msra.mxu0 %v284
      %1409 = vmatmul.f32.gmra.mxu0 %v1372
      %v1410 = vpop.f32.mrf.mxu0
      %v1411 = vadd.f32 %v1391, %v1410
      %1412 = vdwg.mxu0
      %1413 = vmatpush.msra.mxu0 %v283
      %1414 = vmatpush.msra.mxu0 %v281
      %1415 = vmatpush.msra.mxu0 %v279
      %1416 = vmatpush.msra.mxu0 %v277
      %1417 = vmatpush.msra.mxu0 %v275
      %1418 = vmatpush.msra.mxu0 %v273
      %1419 = vmatpush.msra.mxu0 %v271
      %1420 = vmatpush.msra.mxu0 %v269
      %1421 = vmatpush.msra.mxu0 %v267
      %1422 = vmatpush.msra.mxu0 %v265
      %1423 = vmatpush.msra.mxu0 %v263
      %1424 = vmatpush.msra.mxu0 %v261
      %1425 = vmatpush.msra.mxu0 %v259
      %1426 = vmatpush.msra.mxu0 %v257
      %1427 = vmatpush.msra.mxu0 %v255
      %1428 = vmatpush.msra.mxu0 %v253
      %1429 = vmatmul.f32.gmra.mxu0 %v1365
      %v1430 = vpop.f32.mrf.mxu0
      %v1431 = vadd.f32 0.0, %v1430
      %1432 = vdwg.mxu0
      %1433 = vmatpush.msra.mxu0 %v315
      %1434 = vmatpush.msra.mxu0 %v313
      %1435 = vmatpush.msra.mxu0 %v311
      %1436 = vmatpush.msra.mxu0 %v309
      %1437 = vmatpush.msra.mxu0 %v307
      %1438 = vmatpush.msra.mxu0 %v305
      %1439 = vmatpush.msra.mxu0 %v303
      %1440 = vmatpush.msra.mxu0 %v301
      %1441 = vmatpush.msra.mxu0 %v299
      %1442 = vmatpush.msra.mxu0 %v297
      %1443 = vmatpush.msra.mxu0 %v295
      %1444 = vmatpush.msra.mxu0 %v293
      %1445 = vmatpush.msra.mxu0 %v291
      %1446 = vmatpush.msra.mxu0 %v289
      %1447 = vmatpush.msra.mxu0 %v287
      %1448 = vmatpush.msra.mxu0 %v285
      %1449 = vmatmul.f32.gmra.mxu0 %v1372
      %v1450 = vpop.f32.mrf.mxu0
      %v1451 = vadd.f32 %v1431, %v1450
      %1452 = vdwg.mxu0
      %v1453 = vperm.slane %v1411, 0
      %v1454 = vperm.slane %v1451, 0
      %v1455 = vsub.f32 %v1355, %v1453
      %v1456 = vsub.f32 %v1356, %v1454
      %v1457 = vsub.f32 %v1357, %v1453
      %v1458 = vsub.f32 %v1358, %v1454
      %v1459 = vmul.f32 %v1455, %v1455
      %v1460 = vmul.f32 %v1456, %v1456
      %v1461 = vmul.f32 %v1457, %v1457
      %v1462 = vmul.f32 %v1458, %v1458
      %v1463 = vadd.f32 %v1459, %v1461
      %v1464 = vrot.slane %v1463, 4
      %v1465 = vadd.f32 %v1463, %v1464
      %v1466 = vrot.slane %v1465, 2
      %v1467 = vadd.f32 %v1465, %v1466
      %v1468 = vrot.slane %v1467, 1
      %v1469 = vadd.f32 %v1467, %v1468
      %v1470 = vadd.f32 %v1460, %v1462
      %v1471 = vrot.slane %v1470, 4
      %v1472 = vadd.f32 %v1470, %v1471
      %v1473 = vrot.slane %v1472, 2
      %v1474 = vadd.f32 %v1472, %v1473
      %v1475 = vrot.slane %v1474, 1
      %v1476 = vadd.f32 %v1474, %v1475
      %1477 = vmatpush.msra.mxu0 %v282
      %1478 = vmatpush.msra.mxu0 %v280
      %1479 = vmatpush.msra.mxu0 %v278
      %1480 = vmatpush.msra.mxu0 %v276
      %1481 = vmatpush.msra.mxu0 %v274
      %1482 = vmatpush.msra.mxu0 %v272
      %1483 = vmatpush.msra.mxu0 %v270
      %1484 = vmatpush.msra.mxu0 %v268
      %1485 = vmatpush.msra.mxu0 %v266
      %1486 = vmatpush.msra.mxu0 %v264
      %1487 = vmatpush.msra.mxu0 %v262
      %1488 = vmatpush.msra.mxu0 %v260
      %1489 = vmatpush.msra.mxu0 %v258
      %1490 = vmatpush.msra.mxu0 %v256
      %1491 = vmatpush.msra.mxu0 %v254
      %1492 = vmatpush.msra.mxu0 %v252
      %1493 = vmatmul.f32.gmra.mxu0 %v1469
      %v1494 = vpop.f32.mrf.mxu0
      %v1495 = vadd.f32 1e-05, %v1494
      %1496 = vdwg.mxu0
      %1497 = vmatpush.msra.mxu0 %v314
      %1498 = vmatpush.msra.mxu0 %v312
      %1499 = vmatpush.msra.mxu0 %v310
      %1500 = vmatpush.msra.mxu0 %v308
      %1501 = vmatpush.msra.mxu0 %v306
      %1502 = vmatpush.msra.mxu0 %v304
      %1503 = vmatpush.msra.mxu0 %v302
      %1504 = vmatpush.msra.mxu0 %v300
      %1505 = vmatpush.msra.mxu0 %v298
      %1506 = vmatpush.msra.mxu0 %v296
      %1507 = vmatpush.msra.mxu0 %v294
      %1508 = vmatpush.msra.mxu0 %v292
      %1509 = vmatpush.msra.mxu0 %v290
      %1510 = vmatpush.msra.mxu0 %v288
      %1511 = vmatpush.msra.mxu0 %v286
      %1512 = vmatpush.msra.mxu0 %v284
      %1513 = vmatmul.f32.gmra.mxu0 %v1476
      %v1514 = vpop.f32.mrf.mxu0
      %v1515 = vadd.f32 %v1495, %v1514
      %1516 = vdwg.mxu0
      %1517 = vmatpush.msra.mxu0 %v283
      %1518 = vmatpush.msra.mxu0 %v281
      %1519 = vmatpush.msra.mxu0 %v279
      %1520 = vmatpush.msra.mxu0 %v277
      %1521 = vmatpush.msra.mxu0 %v275
      %1522 = vmatpush.msra.mxu0 %v273
      %1523 = vmatpush.msra.mxu0 %v271
      %1524 = vmatpush.msra.mxu0 %v269
      %1525 = vmatpush.msra.mxu0 %v267
      %1526 = vmatpush.msra.mxu0 %v265
      %1527 = vmatpush.msra.mxu0 %v263
      %1528 = vmatpush.msra.mxu0 %v261
      %1529 = vmatpush.msra.mxu0 %v259
      %1530 = vmatpush.msra.mxu0 %v257
      %1531 = vmatpush.msra.mxu0 %v255
      %1532 = vmatpush.msra.mxu0 %v253
      %1533 = vmatmul.f32.gmra.mxu0 %v1469
      %v1534 = vpop.f32.mrf.mxu0
      %v1535 = vadd.f32 1e-05, %v1534
      %1536 = vdwg.mxu0
      %1537 = vmatpush.msra.mxu0 %v315
      %1538 = vmatpush.msra.mxu0 %v313
      %1539 = vmatpush.msra.mxu0 %v311
      %1540 = vmatpush.msra.mxu0 %v309
      %1541 = vmatpush.msra.mxu0 %v307
      %1542 = vmatpush.msra.mxu0 %v305
      %1543 = vmatpush.msra.mxu0 %v303
      %1544 = vmatpush.msra.mxu0 %v301
      %1545 = vmatpush.msra.mxu0 %v299
      %1546 = vmatpush.msra.mxu0 %v297
      %1547 = vmatpush.msra.mxu0 %v295
      %1548 = vmatpush.msra.mxu0 %v293
      %1549 = vmatpush.msra.mxu0 %v291
      %1550 = vmatpush.msra.mxu0 %v289
      %1551 = vmatpush.msra.mxu0 %v287
      %1552 = vmatpush.msra.mxu0 %v285
      %1553 = vmatmul.f32.gmra.mxu0 %v1476
      %v1554 = vpop.f32.mrf.mxu0
      %v1555 = vadd.f32 %v1535, %v1554
      %1556 = vdwg.mxu0
      %v1557 = vrsqrt.pop %v1515
      %v1558 = vmul.f32 %v1557, %v1515
      %v1559 = vmul.f32 %v1558, %v1557
      %v1560 = vmul.f32 0.5, %v1559
      %v1561 = vsub.f32 1.5, %v1560
      %v1562 = vmul.f32 %v1557, %v1561
      %vm1563 = vweird.f32 %v1515
      %vm1564 = vweird.f32 %v1557
      %vm1565 = vmor %vm1563, %vm1564
      %v1566 = vsel %vm1565, %v1557, %v1562
      %v1567 = vrsqrt.pop %v1555
      %v1568 = vmul.f32 %v1567, %v1555
      %v1569 = vmul.f32 %v1568, %v1567
      %v1570 = vmul.f32 0.5, %v1569
      %v1571 = vsub.f32 1.5, %v1570
      %v1572 = vmul.f32 %v1567, %v1571
      %vm1573 = vweird.f32 %v1555
      %vm1574 = vweird.f32 %v1567
      %vm1575 = vmor %vm1573, %vm1574
      %v1576 = vsel %vm1575, %v1567, %v1572
      %v1577 = vperm.slane %v1566, 0
      %v1578 = vperm.slane %v1576, 0
      %v1579 = vmul.f32 %v1455, %v1577
      %v1580 = vmul.f32 %v1456, %v1578
      %v1581 = vmul.f32 %v1457, %v1577
      %v1582 = vmul.f32 %v1458, %v1578
      %v1583 = vperm.slane %v1347, 1
      %v1584 = vperm.slane %v1347, 5
      %v1587 = vperm.slane %v1583, 1
      %v1588 = vperm.slane %v1584, 1
      %v1589 = vmul.f32 %v1579, %v1587
      %v1590 = vmul.f32 %v1580, %v1588
      %v1591 = vmul.f32 %v1581, %v1587
      %v1592 = vmul.f32 %v1582, %v1588
      %v1593 = vperm.slane %v1347, 2
      %v1594 = vperm.slane %v1347, 6
      %v1597 = vperm.slane %v1593, 2
      %v1598 = vperm.slane %v1594, 2
      %v1599 = vadd.f32 %v1589, %v1597
      %v1600 = vadd.f32 %v1590, %v1598
      %v1601 = vadd.f32 %v1591, %v1597
      %v1602 = vadd.f32 %v1592, %v1598
      %v1603 = vmax.f32 %v1599, 0.0
      %v1604 = vmax.f32 %v1600, 0.0
      %v1605 = vmax.f32 %v1601, 0.0
      %v1606 = vmax.f32 %v1602, 0.0
      %1607 = vst.msk [vmem:[#allocation4] ss:$8 sm:$0x3] %vm791, 0.0
      %1608 = vst.msk [vmem:[#allocation4] ss:$8 sm:$0x0] %vm791, 0.0
      %s1609 = scalar_lea.vmem [#allocation4], 33
      %1610 = vst.msk [vmem:[%s1609] ss:$8 sm:$0x3] %vm791, 0.0
      %1611 = vst.msk [vmem:[%s1609] ss:$8 sm:$0x0] %vm791, 0.0
      %v1616 = vrot.slane %v1603, 7
      %v1617 = vrot.slane %v1604, 7
      %v1618 = vrot.slane %v1605, 7
      %v1619 = vsel %vm801, %v1616, %v1618
      %v1620 = vrot.slane %v1606, 7
      %v1621 = vsel %vm801, %v1617, %v1620
      %1628 = vst [vmem:[#allocation4] sm:$0xfe] %v1616
      %1629 = vst [vmem:[#allocation4 + $0x8] sm:$0xfe] %v1617
      %1630 = vst [vmem:[#allocation4 + $0x10] sm:$0xff] %v1619
      %1631 = vst [vmem:[#allocation4 + $0x18] sm:$0xff] %v1621
      %1632 = vst [vmem:[#allocation4 + $0x20] sm:$0x1] %v1618
      %1633 = vst [vmem:[#allocation4 + $0x28] sm:$0x1] %v1620
      %v1634 = vld [vmem:[#allocation4] sm:$0xff]
      %v1635 = vld [vmem:[#allocation4 + $0x8] sm:$0xff]
      %v1636 = vld [vmem:[#allocation4 + $0x10] sm:$0xff]
      %v1637 = vld [vmem:[#allocation4 + $0x18] sm:$0xff]
      %v1638 = vld [vmem:[%s3] sm:$0xff]
      %v1639 = vld [vmem:[%s3 + $0x8] sm:$0xff]
      %v1640 = vld [vmem:[%s3 + $0x10] sm:$0xff]
      %v1641 = vld [vmem:[%s3 + $0x18] sm:$0xff]
      %v1642 = vld [vmem:[%s3 + $0x20] sm:$0xff]
      %v1643 = vld [vmem:[%s3 + $0x28] sm:$0xff]
      %v1644 = vld [vmem:[%s3 + $0x30] sm:$0xff]
      %v1645 = vld [vmem:[%s3 + $0x38] sm:$0xff]
      %v1646 = vld [vmem:[%s3 + $0x40] sm:$0xff]
      %v1647 = vld [vmem:[%s3 + $0x48] sm:$0xff]
      %v1648 = vld [vmem:[%s3 + $0x50] sm:$0xff]
      %v1649 = vld [vmem:[%s3 + $0x58] sm:$0xff]
      %v1650 = vld [vmem:[%s3 + $0x60] sm:$0xff]
      %v1651 = vld [vmem:[%s3 + $0x68] sm:$0xff]
      %v1652 = vld [vmem:[%s3 + $0x70] sm:$0xff]
      %v1653 = vld [vmem:[%s3 + $0x78] sm:$0xff]
      %v1654 = vld [vmem:[%s3 + $0x80] sm:$0xff]
      %v1655 = vld [vmem:[%s3 + $0x88] sm:$0xff]
      %v1656 = vld [vmem:[%s3 + $0x90] sm:$0xff]
      %v1657 = vld [vmem:[%s3 + $0x98] sm:$0xff]
      %v1658 = vld [vmem:[%s3 + $0xa0] sm:$0xff]
      %v1659 = vld [vmem:[%s3 + $0xa8] sm:$0xff]
      %v1660 = vld [vmem:[%s3 + $0xb0] sm:$0xff]
      %v1661 = vld [vmem:[%s3 + $0xb8] sm:$0xff]
      %v1662 = vld [vmem:[%s3 + $0xc0] sm:$0xff]
      %v1663 = vld [vmem:[%s3 + $0xc8] sm:$0xff]
      %v1664 = vld [vmem:[%s3 + $0xd0] sm:$0xff]
      %v1665 = vld [vmem:[%s3 + $0xd8] sm:$0xff]
      %v1666 = vld [vmem:[%s3 + $0xe0] sm:$0xff]
      %v1667 = vld [vmem:[%s3 + $0xe8] sm:$0xff]
      %v1668 = vld [vmem:[%s3 + $0xf0] sm:$0xff]
      %v1669 = vld [vmem:[%s3 + $0xf8] sm:$0xff]
      %v1670 = vld [vmem:[%s3 + $0x100] sm:$0xff]
      %v1671 = vld [vmem:[%s3 + $0x108] sm:$0xff]
      %v1672 = vld [vmem:[%s3 + $0x110] sm:$0xff]
      %v1673 = vld [vmem:[%s3 + $0x118] sm:$0xff]
      %v1674 = vld [vmem:[%s3 + $0x120] sm:$0xff]
      %v1675 = vld [vmem:[%s3 + $0x128] sm:$0xff]
      %v1676 = vld [vmem:[%s3 + $0x130] sm:$0xff]
      %v1677 = vld [vmem:[%s3 + $0x138] sm:$0xff]
      %v1678 = vld [vmem:[%s3 + $0x140] sm:$0xff]
      %v1679 = vld [vmem:[%s3 + $0x148] sm:$0xff]
      %v1680 = vld [vmem:[%s3 + $0x150] sm:$0xff]
      %v1681 = vld [vmem:[%s3 + $0x158] sm:$0xff]
      %v1682 = vld [vmem:[%s3 + $0x160] sm:$0xff]
      %v1683 = vld [vmem:[%s3 + $0x168] sm:$0xff]
      %v1684 = vld [vmem:[%s3 + $0x170] sm:$0xff]
      %v1685 = vld [vmem:[%s3 + $0x178] sm:$0xff]
      %v1686 = vld [vmem:[%s3 + $0x180] sm:$0xff]
      %v1687 = vld [vmem:[%s3 + $0x188] sm:$0xff]
      %v1688 = vld [vmem:[%s3 + $0x190] sm:$0xff]
      %v1689 = vld [vmem:[%s3 + $0x198] sm:$0xff]
      %v1690 = vld [vmem:[%s3 + $0x1a0] sm:$0xff]
      %v1691 = vld [vmem:[%s3 + $0x1a8] sm:$0xff]
      %v1692 = vld [vmem:[%s3 + $0x1b0] sm:$0xff]
      %v1693 = vld [vmem:[%s3 + $0x1b8] sm:$0xff]
      %v1694 = vld [vmem:[%s3 + $0x1c0] sm:$0xff]
      %v1695 = vld [vmem:[%s3 + $0x1c8] sm:$0xff]
      %v1696 = vld [vmem:[%s3 + $0x1d0] sm:$0xff]
      %v1697 = vld [vmem:[%s3 + $0x1d8] sm:$0xff]
      %v1698 = vld [vmem:[%s3 + $0x1e0] sm:$0xff]
      %v1699 = vld [vmem:[%s3 + $0x1e8] sm:$0xff]
      %v1700 = vld [vmem:[%s3 + $0x1f0] sm:$0xff]
      %v1701 = vld [vmem:[%s3 + $0x1f8] sm:$0xff]
      %v1702 = vld [vmem:[#allocation4] sm:$0xfe]
      %v1703 = vld [vmem:[#allocation4 + $0x8] sm:$0xfe]
      %v1704 = vld [vmem:[#allocation4 + $0x20] sm:$0x1]
      %v1705 = vld [vmem:[#allocation4 + $0x28] sm:$0x1]
      %s1706 = scalar_lea.vmem %s3, 512
      %v1707 = vld [vmem:[%s1706] sm:$0xff]
      %v1708 = vld [vmem:[%s1706 + $0x8] sm:$0xff]
      %v1709 = vld [vmem:[%s1706 + $0x10] sm:$0xff]
      %v1710 = vld [vmem:[%s1706 + $0x18] sm:$0xff]
      %v1711 = vld [vmem:[%s1706 + $0x20] sm:$0xff]
      %v1712 = vld [vmem:[%s1706 + $0x28] sm:$0xff]
      %v1713 = vld [vmem:[%s1706 + $0x30] sm:$0xff]
      %v1714 = vld [vmem:[%s1706 + $0x38] sm:$0xff]
      %v1715 = vld [vmem:[%s1706 + $0x40] sm:$0xff]
      %v1716 = vld [vmem:[%s1706 + $0x48] sm:$0xff]
      %v1717 = vld [vmem:[%s1706 + $0x50] sm:$0xff]
      %v1718 = vld [vmem:[%s1706 + $0x58] sm:$0xff]
      %v1719 = vld [vmem:[%s1706 + $0x60] sm:$0xff]
      %v1720 = vld [vmem:[%s1706 + $0x68] sm:$0xff]
      %v1721 = vld [vmem:[%s1706 + $0x70] sm:$0xff]
      %v1722 = vld [vmem:[%s1706 + $0x78] sm:$0xff]
      %v1723 = vld [vmem:[%s1706 + $0x80] sm:$0xff]
      %v1724 = vld [vmem:[%s1706 + $0x88] sm:$0xff]
      %v1725 = vld [vmem:[%s1706 + $0x90] sm:$0xff]
      %v1726 = vld [vmem:[%s1706 + $0x98] sm:$0xff]
      %v1727 = vld [vmem:[%s1706 + $0xa0] sm:$0xff]
      %v1728 = vld [vmem:[%s1706 + $0xa8] sm:$0xff]
      %v1729 = vld [vmem:[%s1706 + $0xb0] sm:$0xff]
      %v1730 = vld [vmem:[%s1706 + $0xb8] sm:$0xff]
      %v1731 = vld [vmem:[%s1706 + $0xc0] sm:$0xff]
      %v1732 = vld [vmem:[%s1706 + $0xc8] sm:$0xff]
      %v1733 = vld [vmem:[%s1706 + $0xd0] sm:$0xff]
      %v1734 = vld [vmem:[%s1706 + $0xd8] sm:$0xff]
      %v1735 = vld [vmem:[%s1706 + $0xe0] sm:$0xff]
      %v1736 = vld [vmem:[%s1706 + $0xe8] sm:$0xff]
      %v1737 = vld [vmem:[%s1706 + $0xf0] sm:$0xff]
      %v1738 = vld [vmem:[%s1706 + $0xf8] sm:$0xff]
      %v1739 = vld [vmem:[%s1706 + $0x100] sm:$0xff]
      %v1740 = vld [vmem:[%s1706 + $0x108] sm:$0xff]
      %v1741 = vld [vmem:[%s1706 + $0x110] sm:$0xff]
      %v1742 = vld [vmem:[%s1706 + $0x118] sm:$0xff]
      %v1743 = vld [vmem:[%s1706 + $0x120] sm:$0xff]
      %v1744 = vld [vmem:[%s1706 + $0x128] sm:$0xff]
      %v1745 = vld [vmem:[%s1706 + $0x130] sm:$0xff]
      %v1746 = vld [vmem:[%s1706 + $0x138] sm:$0xff]
      %v1747 = vld [vmem:[%s1706 + $0x140] sm:$0xff]
      %v1748 = vld [vmem:[%s1706 + $0x148] sm:$0xff]
      %v1749 = vld [vmem:[%s1706 + $0x150] sm:$0xff]
      %v1750 = vld [vmem:[%s1706 + $0x158] sm:$0xff]
      %v1751 = vld [vmem:[%s1706 + $0x160] sm:$0xff]
      %v1752 = vld [vmem:[%s1706 + $0x168] sm:$0xff]
      %v1753 = vld [vmem:[%s1706 + $0x170] sm:$0xff]
      %v1754 = vld [vmem:[%s1706 + $0x178] sm:$0xff]
      %v1755 = vld [vmem:[%s1706 + $0x180] sm:$0xff]
      %v1756 = vld [vmem:[%s1706 + $0x188] sm:$0xff]
      %v1757 = vld [vmem:[%s1706 + $0x190] sm:$0xff]
      %v1758 = vld [vmem:[%s1706 + $0x198] sm:$0xff]
      %v1759 = vld [vmem:[%s1706 + $0x1a0] sm:$0xff]
      %v1760 = vld [vmem:[%s1706 + $0x1a8] sm:$0xff]
      %v1761 = vld [vmem:[%s1706 + $0x1b0] sm:$0xff]
      %v1762 = vld [vmem:[%s1706 + $0x1b8] sm:$0xff]
      %v1763 = vld [vmem:[%s1706 + $0x1c0] sm:$0xff]
      %v1764 = vld [vmem:[%s1706 + $0x1c8] sm:$0xff]
      %v1765 = vld [vmem:[%s1706 + $0x1d0] sm:$0xff]
      %v1766 = vld [vmem:[%s1706 + $0x1d8] sm:$0xff]
      %v1767 = vld [vmem:[%s1706 + $0x1e0] sm:$0xff]
      %v1768 = vld [vmem:[%s1706 + $0x1e8] sm:$0xff]
      %v1769 = vld [vmem:[%s1706 + $0x1f0] sm:$0xff]
      %v1770 = vld [vmem:[%s1706 + $0x1f8] sm:$0xff]
      %v1777 = vrot.slane %v1702, 1
      %v1778 = vrot.slane %v1636, 1
      %v1779 = vsel %vm963, %v1777, %v1778
      %v1780 = vrot.slane %v1703, 1
      %v1781 = vrot.slane %v1637, 1
      %v1782 = vsel %vm963, %v1780, %v1781
      %v1783 = vrot.slane %v1704, 1
      %v1784 = vsel %vm963, %v1778, %v1783
      %v1785 = vrot.slane %v1705, 1
      %v1786 = vsel %vm963, %v1781, %v1785
      %1791 = vmatpush.msra.mxu0 %v1737
      %1792 = vmatpush.msra.mxu0 %v1735
      %1793 = vmatpush.msra.mxu0 %v1733
      %1794 = vmatpush.msra.mxu0 %v1731
      %1795 = vmatpush.msra.mxu0 %v1729
      %1796 = vmatpush.msra.mxu0 %v1727
      %1797 = vmatpush.msra.mxu0 %v1725
      %1798 = vmatpush.msra.mxu0 %v1723
      %1799 = vmatpush.msra.mxu0 %v1721
      %1800 = vmatpush.msra.mxu0 %v1719
      %1801 = vmatpush.msra.mxu0 %v1717
      %1802 = vmatpush.msra.mxu0 %v1715
      %1803 = vmatpush.msra.mxu0 %v1713
      %1804 = vmatpush.msra.mxu0 %v1711
      %1805 = vmatpush.msra.mxu0 %v1709
      %1806 = vmatpush.msra.mxu0 %v1707
      %1807 = vmatmul.f32.gmra.mxu0 %v1779
      %v1808 = vpop.f32.mrf.mxu0
      %v1809 = vadd.f32 0.0, %v1808
      %1810 = vmatmul.f32.gmra.mxu0 %v1784
      %v1811 = vpop.f32.mrf.mxu0
      %v1812 = vadd.f32 0.0, %v1811
      %1813 = vdwg.mxu0
      %1814 = vmatpush.msra.mxu0 %v1769
      %1815 = vmatpush.msra.mxu0 %v1767
      %1816 = vmatpush.msra.mxu0 %v1765
      %1817 = vmatpush.msra.mxu0 %v1763
      %1818 = vmatpush.msra.mxu0 %v1761
      %1819 = vmatpush.msra.mxu0 %v1759
      %1820 = vmatpush.msra.mxu0 %v1757
      %1821 = vmatpush.msra.mxu0 %v1755
      %1822 = vmatpush.msra.mxu0 %v1753
      %1823 = vmatpush.msra.mxu0 %v1751
      %1824 = vmatpush.msra.mxu0 %v1749
      %1825 = vmatpush.msra.mxu0 %v1747
      %1826 = vmatpush.msra.mxu0 %v1745
      %1827 = vmatpush.msra.mxu0 %v1743
      %1828 = vmatpush.msra.mxu0 %v1741
      %1829 = vmatpush.msra.mxu0 %v1739
      %1830 = vmatmul.f32.gmra.mxu0 %v1782
      %v1831 = vpop.f32.mrf.mxu0
      %v1832 = vadd.f32 %v1809, %v1831
      %1833 = vmatmul.f32.gmra.mxu0 %v1786
      %v1834 = vpop.f32.mrf.mxu0
      %v1835 = vadd.f32 %v1812, %v1834
      %1836 = vdwg.mxu0
      %1837 = vmatpush.msra.mxu0 %v1738
      %1838 = vmatpush.msra.mxu0 %v1736
      %1839 = vmatpush.msra.mxu0 %v1734
      %1840 = vmatpush.msra.mxu0 %v1732
      %1841 = vmatpush.msra.mxu0 %v1730
      %1842 = vmatpush.msra.mxu0 %v1728
      %1843 = vmatpush.msra.mxu0 %v1726
      %1844 = vmatpush.msra.mxu0 %v1724
      %1845 = vmatpush.msra.mxu0 %v1722
      %1846 = vmatpush.msra.mxu0 %v1720
      %1847 = vmatpush.msra.mxu0 %v1718
      %1848 = vmatpush.msra.mxu0 %v1716
      %1849 = vmatpush.msra.mxu0 %v1714
      %1850 = vmatpush.msra.mxu0 %v1712
      %1851 = vmatpush.msra.mxu0 %v1710
      %1852 = vmatpush.msra.mxu0 %v1708
      %1853 = vmatmul.f32.gmra.mxu0 %v1779
      %v1854 = vpop.f32.mrf.mxu0
      %v1855 = vadd.f32 0.0, %v1854
      %1856 = vmatmul.f32.gmra.mxu0 %v1784
      %v1857 = vpop.f32.mrf.mxu0
      %v1858 = vadd.f32 0.0, %v1857
      %1859 = vdwg.mxu0
      %1860 = vmatpush.msra.mxu0 %v1770
      %1861 = vmatpush.msra.mxu0 %v1768
      %1862 = vmatpush.msra.mxu0 %v1766
      %1863 = vmatpush.msra.mxu0 %v1764
      %1864 = vmatpush.msra.mxu0 %v1762
      %1865 = vmatpush.msra.mxu0 %v1760
      %1866 = vmatpush.msra.mxu0 %v1758
      %1867 = vmatpush.msra.mxu0 %v1756
      %1868 = vmatpush.msra.mxu0 %v1754
      %1869 = vmatpush.msra.mxu0 %v1752
      %1870 = vmatpush.msra.mxu0 %v1750
      %1871 = vmatpush.msra.mxu0 %v1748
      %1872 = vmatpush.msra.mxu0 %v1746
      %1873 = vmatpush.msra.mxu0 %v1744
      %1874 = vmatpush.msra.mxu0 %v1742
      %1875 = vmatpush.msra.mxu0 %v1740
      %1876 = vmatmul.f32.gmra.mxu0 %v1782
      %v1877 = vpop.f32.mrf.mxu0
      %v1878 = vadd.f32 %v1855, %v1877
      %1879 = vmatmul.f32.gmra.mxu0 %v1786
      %v1880 = vpop.f32.mrf.mxu0
      %v1881 = vadd.f32 %v1858, %v1880
      %1882 = vdwg.mxu0
      %1883 = vmatpush.msra.mxu0 %v1668
      %1884 = vmatpush.msra.mxu0 %v1666
      %1885 = vmatpush.msra.mxu0 %v1664
      %1886 = vmatpush.msra.mxu0 %v1662
      %1887 = vmatpush.msra.mxu0 %v1660
      %1888 = vmatpush.msra.mxu0 %v1658
      %1889 = vmatpush.msra.mxu0 %v1656
      %1890 = vmatpush.msra.mxu0 %v1654
      %1891 = vmatpush.msra.mxu0 %v1652
      %1892 = vmatpush.msra.mxu0 %v1650
      %1893 = vmatpush.msra.mxu0 %v1648
      %1894 = vmatpush.msra.mxu0 %v1646
      %1895 = vmatpush.msra.mxu0 %v1644
      %1896 = vmatpush.msra.mxu0 %v1642
      %1897 = vmatpush.msra.mxu0 %v1640
      %1898 = vmatpush.msra.mxu0 %v1638
      %1899 = vmatmul.f32.gmra.mxu0 %v1634
      %v1900 = vpop.f32.mrf.mxu0
      %v1901 = vadd.f32 %v1832, %v1900
      %1902 = vmatmul.f32.gmra.mxu0 %v1636
      %v1903 = vpop.f32.mrf.mxu0
      %v1904 = vadd.f32 %v1835, %v1903
      %1905 = vdwg.mxu0
      %1906 = vmatpush.msra.mxu0 %v1700
      %1907 = vmatpush.msra.mxu0 %v1698
      %1908 = vmatpush.msra.mxu0 %v1696
      %1909 = vmatpush.msra.mxu0 %v1694
      %1910 = vmatpush.msra.mxu0 %v1692
      %1911 = vmatpush.msra.mxu0 %v1690
      %1912 = vmatpush.msra.mxu0 %v1688
      %1913 = vmatpush.msra.mxu0 %v1686
      %1914 = vmatpush.msra.mxu0 %v1684
      %1915 = vmatpush.msra.mxu0 %v1682
      %1916 = vmatpush.msra.mxu0 %v1680
      %1917 = vmatpush.msra.mxu0 %v1678
      %1918 = vmatpush.msra.mxu0 %v1676
      %1919 = vmatpush.msra.mxu0 %v1674
      %1920 = vmatpush.msra.mxu0 %v1672
      %1921 = vmatpush.msra.mxu0 %v1670
      %1922 = vmatmul.f32.gmra.mxu0 %v1635
      %v1923 = vpop.f32.mrf.mxu0
      %v1924 = vadd.f32 %v1901, %v1923
      %1925 = vmatmul.f32.gmra.mxu0 %v1637
      %v1926 = vpop.f32.mrf.mxu0
      %v1927 = vadd.f32 %v1904, %v1926
      %1928 = vdwg.mxu0
      %1929 = vmatpush.msra.mxu0 %v1669
      %1930 = vmatpush.msra.mxu0 %v1667
      %1931 = vmatpush.msra.mxu0 %v1665
      %1932 = vmatpush.msra.mxu0 %v1663
      %1933 = vmatpush.msra.mxu0 %v1661
      %1934 = vmatpush.msra.mxu0 %v1659
      %1935 = vmatpush.msra.mxu0 %v1657
      %1936 = vmatpush.msra.mxu0 %v1655
      %1937 = vmatpush.msra.mxu0 %v1653
      %1938 = vmatpush.msra.mxu0 %v1651
      %1939 = vmatpush.msra.mxu0 %v1649
      %1940 = vmatpush.msra.mxu0 %v1647
      %1941 = vmatpush.msra.mxu0 %v1645
      %1942 = vmatpush.msra.mxu0 %v1643
      %1943 = vmatpush.msra.mxu0 %v1641
      %1944 = vmatpush.msra.mxu0 %v1639
      %1945 = vmatmul.f32.gmra.mxu0 %v1634
      %v1946 = vpop.f32.mrf.mxu0
      %v1947 = vadd.f32 %v1878, %v1946
      %1948 = vmatmul.f32.gmra.mxu0 %v1636
      %v1949 = vpop.f32.mrf.mxu0
      %v1950 = vadd.f32 %v1881, %v1949
      %1951 = vdwg.mxu0
      %1952 = vmatpush.msra.mxu0 %v1701
      %1953 = vmatpush.msra.mxu0 %v1699
      %1954 = vmatpush.msra.mxu0 %v1697
      %1955 = vmatpush.msra.mxu0 %v1695
      %1956 = vmatpush.msra.mxu0 %v1693
      %1957 = vmatpush.msra.mxu0 %v1691
      %1958 = vmatpush.msra.mxu0 %v1689
      %1959 = vmatpush.msra.mxu0 %v1687
      %1960 = vmatpush.msra.mxu0 %v1685
      %1961 = vmatpush.msra.mxu0 %v1683
      %1962 = vmatpush.msra.mxu0 %v1681
      %1963 = vmatpush.msra.mxu0 %v1679
      %1964 = vmatpush.msra.mxu0 %v1677
      %1965 = vmatpush.msra.mxu0 %v1675
      %1966 = vmatpush.msra.mxu0 %v1673
      %1967 = vmatpush.msra.mxu0 %v1671
      %1968 = vmatmul.f32.gmra.mxu0 %v1635
      %v1969 = vpop.f32.mrf.mxu0
      %v1970 = vadd.f32 %v1947, %v1969
      %1971 = vmatmul.f32.gmra.mxu0 %v1637
      %v1972 = vpop.f32.mrf.mxu0
      %v1973 = vadd.f32 %v1950, %v1972
      %1974 = vdwg.mxu0
      %v1975 = vld [vmem:[#allocation4] sm:$0xfc]
      %v1976 = vld [vmem:[#allocation4 + $0x8] sm:$0xfc]
      %v1977 = vld [vmem:[#allocation4 + $0x20] sm:$0x3]
      %v1978 = vld [vmem:[#allocation4 + $0x28] sm:$0x3]
      %s1979 = scalar_lea.vmem %s3, 1024
      %v1980 = vld [vmem:[%s1979] sm:$0xff]
      %v1981 = vld [vmem:[%s1979 + $0x8] sm:$0xff]
      %v1982 = vld [vmem:[%s1979 + $0x10] sm:$0xff]
      %v1983 = vld [vmem:[%s1979 + $0x18] sm:$0xff]
      %v1984 = vld [vmem:[%s1979 + $0x20] sm:$0xff]
      %v1985 = vld [vmem:[%s1979 + $0x28] sm:$0xff]
      %v1986 = vld [vmem:[%s1979 + $0x30] sm:$0xff]
      %v1987 = vld [vmem:[%s1979 + $0x38] sm:$0xff]
      %v1988 = vld [vmem:[%s1979 + $0x40] sm:$0xff]
      %v1989 = vld [vmem:[%s1979 + $0x48] sm:$0xff]
      %v1990 = vld [vmem:[%s1979 + $0x50] sm:$0xff]
      %v1991 = vld [vmem:[%s1979 + $0x58] sm:$0xff]
      %v1992 = vld [vmem:[%s1979 + $0x60] sm:$0xff]
      %v1993 = vld [vmem:[%s1979 + $0x68] sm:$0xff]
      %v1994 = vld [vmem:[%s1979 + $0x70] sm:$0xff]
      %v1995 = vld [vmem:[%s1979 + $0x78] sm:$0xff]
      %v1996 = vld [vmem:[%s1979 + $0x80] sm:$0xff]
      %v1997 = vld [vmem:[%s1979 + $0x88] sm:$0xff]
      %v1998 = vld [vmem:[%s1979 + $0x90] sm:$0xff]
      %v1999 = vld [vmem:[%s1979 + $0x98] sm:$0xff]
      %v2000 = vld [vmem:[%s1979 + $0xa0] sm:$0xff]
      %v2001 = vld [vmem:[%s1979 + $0xa8] sm:$0xff]
      %v2002 = vld [vmem:[%s1979 + $0xb0] sm:$0xff]
      %v2003 = vld [vmem:[%s1979 + $0xb8] sm:$0xff]
      %v2004 = vld [vmem:[%s1979 + $0xc0] sm:$0xff]
      %v2005 = vld [vmem:[%s1979 + $0xc8] sm:$0xff]
      %v2006 = vld [vmem:[%s1979 + $0xd0] sm:$0xff]
      %v2007 = vld [vmem:[%s1979 + $0xd8] sm:$0xff]
      %v2008 = vld [vmem:[%s1979 + $0xe0] sm:$0xff]
      %v2009 = vld [vmem:[%s1979 + $0xe8] sm:$0xff]
      %v2010 = vld [vmem:[%s1979 + $0xf0] sm:$0xff]
      %v2011 = vld [vmem:[%s1979 + $0xf8] sm:$0xff]
      %v2012 = vld [vmem:[%s1979 + $0x100] sm:$0xff]
      %v2013 = vld [vmem:[%s1979 + $0x108] sm:$0xff]
      %v2014 = vld [vmem:[%s1979 + $0x110] sm:$0xff]
      %v2015 = vld [vmem:[%s1979 + $0x118] sm:$0xff]
      %v2016 = vld [vmem:[%s1979 + $0x120] sm:$0xff]
      %v2017 = vld [vmem:[%s1979 + $0x128] sm:$0xff]
      %v2018 = vld [vmem:[%s1979 + $0x130] sm:$0xff]
      %v2019 = vld [vmem:[%s1979 + $0x138] sm:$0xff]
      %v2020 = vld [vmem:[%s1979 + $0x140] sm:$0xff]
      %v2021 = vld [vmem:[%s1979 + $0x148] sm:$0xff]
      %v2022 = vld [vmem:[%s1979 + $0x150] sm:$0xff]
      %v2023 = vld [vmem:[%s1979 + $0x158] sm:$0xff]
      %v2024 = vld [vmem:[%s1979 + $0x160] sm:$0xff]
      %v2025 = vld [vmem:[%s1979 + $0x168] sm:$0xff]
      %v2026 = vld [vmem:[%s1979 + $0x170] sm:$0xff]
      %v2027 = vld [vmem:[%s1979 + $0x178] sm:$0xff]
      %v2028 = vld [vmem:[%s1979 + $0x180] sm:$0xff]
      %v2029 = vld [vmem:[%s1979 + $0x188] sm:$0xff]
      %v2030 = vld [vmem:[%s1979 + $0x190] sm:$0xff]
      %v2031 = vld [vmem:[%s1979 + $0x198] sm:$0xff]
      %v2032 = vld [vmem:[%s1979 + $0x1a0] sm:$0xff]
      %v2033 = vld [vmem:[%s1979 + $0x1a8] sm:$0xff]
      %v2034 = vld [vmem:[%s1979 + $0x1b0] sm:$0xff]
      %v2035 = vld [vmem:[%s1979 + $0x1b8] sm:$0xff]
      %v2036 = vld [vmem:[%s1979 + $0x1c0] sm:$0xff]
      %v2037 = vld [vmem:[%s1979 + $0x1c8] sm:$0xff]
      %v2038 = vld [vmem:[%s1979 + $0x1d0] sm:$0xff]
      %v2039 = vld [vmem:[%s1979 + $0x1d8] sm:$0xff]
      %v2040 = vld [vmem:[%s1979 + $0x1e0] sm:$0xff]
      %v2041 = vld [vmem:[%s1979 + $0x1e8] sm:$0xff]
      %v2042 = vld [vmem:[%s1979 + $0x1f0] sm:$0xff]
      %v2043 = vld [vmem:[%s1979 + $0x1f8] sm:$0xff]
      %v2048 = vrot.slane %v1975, 2
      %v2049 = vrot.slane %v1636, 2
      %v2050 = vsel %vm1235, %v2048, %v2049
      %v2051 = vrot.slane %v1976, 2
      %v2052 = vrot.slane %v1637, 2
      %v2053 = vsel %vm1235, %v2051, %v2052
      %v2054 = vrot.slane %v1977, 2
      %v2055 = vsel %vm1235, %v2049, %v2054
      %v2056 = vrot.slane %v1978, 2
      %v2057 = vsel %vm1235, %v2052, %v2056
      %2062 = vmatpush.msra.mxu0 %v2010
      %2063 = vmatpush.msra.mxu0 %v2008
      %2064 = vmatpush.msra.mxu0 %v2006
      %2065 = vmatpush.msra.mxu0 %v2004
      %2066 = vmatpush.msra.mxu0 %v2002
      %2067 = vmatpush.msra.mxu0 %v2000
      %2068 = vmatpush.msra.mxu0 %v1998
      %2069 = vmatpush.msra.mxu0 %v1996
      %2070 = vmatpush.msra.mxu0 %v1994
      %2071 = vmatpush.msra.mxu0 %v1992
      %2072 = vmatpush.msra.mxu0 %v1990
      %2073 = vmatpush.msra.mxu0 %v1988
      %2074 = vmatpush.msra.mxu0 %v1986
      %2075 = vmatpush.msra.mxu0 %v1984
      %2076 = vmatpush.msra.mxu0 %v1982
      %2077 = vmatpush.msra.mxu0 %v1980
      %2078 = vmatmul.f32.gmra.mxu0 %v2050
      %v2079 = vpop.f32.mrf.mxu0
      %v2080 = vadd.f32 0.0, %v2079
      %2081 = vmatmul.f32.gmra.mxu0 %v2055
      %v2082 = vpop.f32.mrf.mxu0
      %v2083 = vadd.f32 0.0, %v2082
      %2084 = vdwg.mxu0
      %2085 = vmatpush.msra.mxu0 %v2042
      %2086 = vmatpush.msra.mxu0 %v2040
      %2087 = vmatpush.msra.mxu0 %v2038
      %2088 = vmatpush.msra.mxu0 %v2036
      %2089 = vmatpush.msra.mxu0 %v2034
      %2090 = vmatpush.msra.mxu0 %v2032
      %2091 = vmatpush.msra.mxu0 %v2030
      %2092 = vmatpush.msra.mxu0 %v2028
      %2093 = vmatpush.msra.mxu0 %v2026
      %2094 = vmatpush.msra.mxu0 %v2024
      %2095 = vmatpush.msra.mxu0 %v2022
      %2096 = vmatpush.msra.mxu0 %v2020
      %2097 = vmatpush.msra.mxu0 %v2018
      %2098 = vmatpush.msra.mxu0 %v2016
      %2099 = vmatpush.msra.mxu0 %v2014
      %2100 = vmatpush.msra.mxu0 %v2012
      %2101 = vmatmul.f32.gmra.mxu0 %v2053
      %v2102 = vpop.f32.mrf.mxu0
      %v2103 = vadd.f32 %v2080, %v2102
      %2104 = vmatmul.f32.gmra.mxu0 %v2057
      %v2105 = vpop.f32.mrf.mxu0
      %v2106 = vadd.f32 %v2083, %v2105
      %2107 = vdwg.mxu0
      %2108 = vmatpush.msra.mxu0 %v2011
      %2109 = vmatpush.msra.mxu0 %v2009
      %2110 = vmatpush.msra.mxu0 %v2007
      %2111 = vmatpush.msra.mxu0 %v2005
      %2112 = vmatpush.msra.mxu0 %v2003
      %2113 = vmatpush.msra.mxu0 %v2001
      %2114 = vmatpush.msra.mxu0 %v1999
      %2115 = vmatpush.msra.mxu0 %v1997
      %2116 = vmatpush.msra.mxu0 %v1995
      %2117 = vmatpush.msra.mxu0 %v1993
      %2118 = vmatpush.msra.mxu0 %v1991
      %2119 = vmatpush.msra.mxu0 %v1989
      %2120 = vmatpush.msra.mxu0 %v1987
      %2121 = vmatpush.msra.mxu0 %v1985
      %2122 = vmatpush.msra.mxu0 %v1983
      %2123 = vmatpush.msra.mxu0 %v1981
      %2124 = vmatmul.f32.gmra.mxu0 %v2050
      %v2125 = vpop.f32.mrf.mxu0
      %v2126 = vadd.f32 0.0, %v2125
      %2127 = vmatmul.f32.gmra.mxu0 %v2055
      %v2128 = vpop.f32.mrf.mxu0
      %v2129 = vadd.f32 0.0, %v2128
      %2130 = vdwg.mxu0
      %2131 = vmatpush.msra.mxu0 %v2043
      %2132 = vmatpush.msra.mxu0 %v2041
      %2133 = vmatpush.msra.mxu0 %v2039
      %2134 = vmatpush.msra.mxu0 %v2037
      %2135 = vmatpush.msra.mxu0 %v2035
      %2136 = vmatpush.msra.mxu0 %v2033
      %2137 = vmatpush.msra.mxu0 %v2031
      %2138 = vmatpush.msra.mxu0 %v2029
      %2139 = vmatpush.msra.mxu0 %v2027
      %2140 = vmatpush.msra.mxu0 %v2025
      %2141 = vmatpush.msra.mxu0 %v2023
      %2142 = vmatpush.msra.mxu0 %v2021
      %2143 = vmatpush.msra.mxu0 %v2019
      %2144 = vmatpush.msra.mxu0 %v2017
      %2145 = vmatpush.msra.mxu0 %v2015
      %2146 = vmatpush.msra.mxu0 %v2013
      %2147 = vmatmul.f32.gmra.mxu0 %v2053
      %v2148 = vpop.f32.mrf.mxu0
      %v2149 = vadd.f32 %v2126, %v2148
      %2150 = vmatmul.f32.gmra.mxu0 %v2057
      %v2151 = vpop.f32.mrf.mxu0
      %v2152 = vadd.f32 %v2129, %v2151
      %2153 = vdwg.mxu0
      %v2154 = vadd.f32 %v1924, %v2103
      %v2155 = vadd.f32 %v1970, %v2149
      %v2156 = vadd.f32 %v1927, %v2106
      %v2157 = vadd.f32 %v1973, %v2152
      %s2158 = scalar_lea.vmem %s4, 16
      %v2159 = vld [vmem:[%s2158] sm:$0x77]
      %v2161 = vperm.slane %v2159, 0
      %v2162 = vperm.slane %v2159, 4
      %v2165 = vperm.slane %v2161, 0
      %v2166 = vperm.slane %v2162, 0
      %v2167 = vadd.f32 %v2154, %v2165
      %v2168 = vadd.f32 %v2155, %v2166
      %v2169 = vadd.f32 %v2156, %v2165
      %v2170 = vadd.f32 %v2157, %v2166
      %v2171 = vadd.f32 %v2167, %v2169
      %v2172 = vrot.slane %v2171, 4
      %v2173 = vadd.f32 %v2171, %v2172
      %v2174 = vrot.slane %v2173, 2
      %v2175 = vadd.f32 %v2173, %v2174
      %v2176 = vrot.slane %v2175, 1
      %v2177 = vadd.f32 %v2175, %v2176
      %v2178 = vadd.f32 %v2168, %v2170
      %v2179 = vrot.slane %v2178, 4
      %v2180 = vadd.f32 %v2178, %v2179
      %v2181 = vrot.slane %v2180, 2
      %v2182 = vadd.f32 %v2180, %v2181
      %v2183 = vrot.slane %v2182, 1
      %v2184 = vadd.f32 %v2182, %v2183
      %2185 = vmatpush.msra.mxu0 %v282
      %2186 = vmatpush.msra.mxu0 %v280
      %2187 = vmatpush.msra.mxu0 %v278
      %2188 = vmatpush.msra.mxu0 %v276
      %2189 = vmatpush.msra.mxu0 %v274
      %2190 = vmatpush.msra.mxu0 %v272
      %2191 = vmatpush.msra.mxu0 %v270
      %2192 = vmatpush.msra.mxu0 %v268
      %2193 = vmatpush.msra.mxu0 %v266
      %2194 = vmatpush.msra.mxu0 %v264
      %2195 = vmatpush.msra.mxu0 %v262
      %2196 = vmatpush.msra.mxu0 %v260
      %2197 = vmatpush.msra.mxu0 %v258
      %2198 = vmatpush.msra.mxu0 %v256
      %2199 = vmatpush.msra.mxu0 %v254
      %2200 = vmatpush.msra.mxu0 %v252
      %2201 = vmatmul.f32.gmra.mxu0 %v2177
      %v2202 = vpop.f32.mrf.mxu0
      %v2203 = vadd.f32 0.0, %v2202
      %2204 = vdwg.mxu0
      %2205 = vmatpush.msra.mxu0 %v314
      %2206 = vmatpush.msra.mxu0 %v312
      %2207 = vmatpush.msra.mxu0 %v310
      %2208 = vmatpush.msra.mxu0 %v308
      %2209 = vmatpush.msra.mxu0 %v306
      %2210 = vmatpush.msra.mxu0 %v304
      %2211 = vmatpush.msra.mxu0 %v302
      %2212 = vmatpush.msra.mxu0 %v300
      %2213 = vmatpush.msra.mxu0 %v298
      %2214 = vmatpush.msra.mxu0 %v296
      %2215 = vmatpush.msra.mxu0 %v294
      %2216 = vmatpush.msra.mxu0 %v292
      %2217 = vmatpush.msra.mxu0 %v290
      %2218 = vmatpush.msra.mxu0 %v288
      %2219 = vmatpush.msra.mxu0 %v286
      %2220 = vmatpush.msra.mxu0 %v284
      %2221 = vmatmul.f32.gmra.mxu0 %v2184
      %v2222 = vpop.f32.mrf.mxu0
      %v2223 = vadd.f32 %v2203, %v2222
      %2224 = vdwg.mxu0
      %2225 = vmatpush.msra.mxu0 %v283
      %2226 = vmatpush.msra.mxu0 %v281
      %2227 = vmatpush.msra.mxu0 %v279
      %2228 = vmatpush.msra.mxu0 %v277
      %2229 = vmatpush.msra.mxu0 %v275
      %2230 = vmatpush.msra.mxu0 %v273
      %2231 = vmatpush.msra.mxu0 %v271
      %2232 = vmatpush.msra.mxu0 %v269
      %2233 = vmatpush.msra.mxu0 %v267
      %2234 = vmatpush.msra.mxu0 %v265
      %2235 = vmatpush.msra.mxu0 %v263
      %2236 = vmatpush.msra.mxu0 %v261
      %2237 = vmatpush.msra.mxu0 %v259
      %2238 = vmatpush.msra.mxu0 %v257
      %2239 = vmatpush.msra.mxu0 %v255
      %2240 = vmatpush.msra.mxu0 %v253
      %2241 = vmatmul.f32.gmra.mxu0 %v2177
      %v2242 = vpop.f32.mrf.mxu0
      %v2243 = vadd.f32 0.0, %v2242
      %2244 = vdwg.mxu0
      %2245 = vmatpush.msra.mxu0 %v315
      %2246 = vmatpush.msra.mxu0 %v313
      %2247 = vmatpush.msra.mxu0 %v311
      %2248 = vmatpush.msra.mxu0 %v309
      %2249 = vmatpush.msra.mxu0 %v307
      %2250 = vmatpush.msra.mxu0 %v305
      %2251 = vmatpush.msra.mxu0 %v303
      %2252 = vmatpush.msra.mxu0 %v301
      %2253 = vmatpush.msra.mxu0 %v299
      %2254 = vmatpush.msra.mxu0 %v297
      %2255 = vmatpush.msra.mxu0 %v295
      %2256 = vmatpush.msra.mxu0 %v293
      %2257 = vmatpush.msra.mxu0 %v291
      %2258 = vmatpush.msra.mxu0 %v289
      %2259 = vmatpush.msra.mxu0 %v287
      %2260 = vmatpush.msra.mxu0 %v285
      %2261 = vmatmul.f32.gmra.mxu0 %v2184
      %v2262 = vpop.f32.mrf.mxu0
      %v2263 = vadd.f32 %v2243, %v2262
      %2264 = vdwg.mxu0
      %v2265 = vperm.slane %v2223, 0
      %v2266 = vperm.slane %v2263, 0
      %v2267 = vsub.f32 %v2167, %v2265
      %v2268 = vsub.f32 %v2168, %v2266
      %v2269 = vsub.f32 %v2169, %v2265
      %v2270 = vsub.f32 %v2170, %v2266
      %v2271 = vmul.f32 %v2267, %v2267
      %v2272 = vmul.f32 %v2268, %v2268
      %v2273 = vmul.f32 %v2269, %v2269
      %v2274 = vmul.f32 %v2270, %v2270
      %v2275 = vadd.f32 %v2271, %v2273
      %v2276 = vrot.slane %v2275, 4
      %v2277 = vadd.f32 %v2275, %v2276
      %v2278 = vrot.slane %v2277, 2
      %v2279 = vadd.f32 %v2277, %v2278
      %v2280 = vrot.slane %v2279, 1
      %v2281 = vadd.f32 %v2279, %v2280
      %v2282 = vadd.f32 %v2272, %v2274
      %v2283 = vrot.slane %v2282, 4
      %v2284 = vadd.f32 %v2282, %v2283
      %v2285 = vrot.slane %v2284, 2
      %v2286 = vadd.f32 %v2284, %v2285
      %v2287 = vrot.slane %v2286, 1
      %v2288 = vadd.f32 %v2286, %v2287
      %2289 = vmatpush.msra.mxu0 %v282
      %2290 = vmatpush.msra.mxu0 %v280
      %2291 = vmatpush.msra.mxu0 %v278
      %2292 = vmatpush.msra.mxu0 %v276
      %2293 = vmatpush.msra.mxu0 %v274
      %2294 = vmatpush.msra.mxu0 %v272
      %2295 = vmatpush.msra.mxu0 %v270
      %2296 = vmatpush.msra.mxu0 %v268
      %2297 = vmatpush.msra.mxu0 %v266
      %2298 = vmatpush.msra.mxu0 %v264
      %2299 = vmatpush.msra.mxu0 %v262
      %2300 = vmatpush.msra.mxu0 %v260
      %2301 = vmatpush.msra.mxu0 %v258
      %2302 = vmatpush.msra.mxu0 %v256
      %2303 = vmatpush.msra.mxu0 %v254
      %2304 = vmatpush.msra.mxu0 %v252
      %2305 = vmatmul.f32.gmra.mxu0 %v2281
      %v2306 = vpop.f32.mrf.mxu0
      %v2307 = vadd.f32 1e-05, %v2306
      %2308 = vdwg.mxu0
      %2309 = vmatpush.msra.mxu0 %v314
      %2310 = vmatpush.msra.mxu0 %v312
      %2311 = vmatpush.msra.mxu0 %v310
      %2312 = vmatpush.msra.mxu0 %v308
      %2313 = vmatpush.msra.mxu0 %v306
      %2314 = vmatpush.msra.mxu0 %v304
      %2315 = vmatpush.msra.mxu0 %v302
      %2316 = vmatpush.msra.mxu0 %v300
      %2317 = vmatpush.msra.mxu0 %v298
      %2318 = vmatpush.msra.mxu0 %v296
      %2319 = vmatpush.msra.mxu0 %v294
      %2320 = vmatpush.msra.mxu0 %v292
      %2321 = vmatpush.msra.mxu0 %v290
      %2322 = vmatpush.msra.mxu0 %v288
      %2323 = vmatpush.msra.mxu0 %v286
      %2324 = vmatpush.msra.mxu0 %v284
      %2325 = vmatmul.f32.gmra.mxu0 %v2288
      %v2326 = vpop.f32.mrf.mxu0
      %v2327 = vadd.f32 %v2307, %v2326
      %2328 = vdwg.mxu0
      %2329 = vmatpush.msra.mxu0 %v283
      %2330 = vmatpush.msra.mxu0 %v281
      %2331 = vmatpush.msra.mxu0 %v279
      %2332 = vmatpush.msra.mxu0 %v277
      %2333 = vmatpush.msra.mxu0 %v275
      %2334 = vmatpush.msra.mxu0 %v273
      %2335 = vmatpush.msra.mxu0 %v271
      %2336 = vmatpush.msra.mxu0 %v269
      %2337 = vmatpush.msra.mxu0 %v267
      %2338 = vmatpush.msra.mxu0 %v265
      %2339 = vmatpush.msra.mxu0 %v263
      %2340 = vmatpush.msra.mxu0 %v261
      %2341 = vmatpush.msra.mxu0 %v259
      %2342 = vmatpush.msra.mxu0 %v257
      %2343 = vmatpush.msra.mxu0 %v255
      %2344 = vmatpush.msra.mxu0 %v253
      %2345 = vmatmul.f32.gmra.mxu0 %v2281
      %v2346 = vpop.f32.mrf.mxu0
      %v2347 = vadd.f32 1e-05, %v2346
      %2348 = vdwg.mxu0
      %2349 = vmatpush.msra.mxu0 %v315
      %2350 = vmatpush.msra.mxu0 %v313
      %2351 = vmatpush.msra.mxu0 %v311
      %2352 = vmatpush.msra.mxu0 %v309
      %2353 = vmatpush.msra.mxu0 %v307
      %2354 = vmatpush.msra.mxu0 %v305
      %2355 = vmatpush.msra.mxu0 %v303
      %2356 = vmatpush.msra.mxu0 %v301
      %2357 = vmatpush.msra.mxu0 %v299
      %2358 = vmatpush.msra.mxu0 %v297
      %2359 = vmatpush.msra.mxu0 %v295
      %2360 = vmatpush.msra.mxu0 %v293
      %2361 = vmatpush.msra.mxu0 %v291
      %2362 = vmatpush.msra.mxu0 %v289
      %2363 = vmatpush.msra.mxu0 %v287
      %2364 = vmatpush.msra.mxu0 %v285
      %2365 = vmatmul.f32.gmra.mxu0 %v2288
      %v2366 = vpop.f32.mrf.mxu0
      %v2367 = vadd.f32 %v2347, %v2366
      %2368 = vdwg.mxu0
      %v2369 = vrsqrt.pop %v2327
      %v2370 = vmul.f32 %v2369, %v2327
      %v2371 = vmul.f32 %v2370, %v2369
      %v2372 = vmul.f32 0.5, %v2371
      %v2373 = vsub.f32 1.5, %v2372
      %v2374 = vmul.f32 %v2369, %v2373
      %vm2375 = vweird.f32 %v2327
      %vm2376 = vweird.f32 %v2369
      %vm2377 = vmor %vm2375, %vm2376
      %v2378 = vsel %vm2377, %v2369, %v2374
      %v2379 = vrsqrt.pop %v2367
      %v2380 = vmul.f32 %v2379, %v2367
      %v2381 = vmul.f32 %v2380, %v2379
      %v2382 = vmul.f32 0.5, %v2381
      %v2383 = vsub.f32 1.5, %v2382
      %v2384 = vmul.f32 %v2379, %v2383
      %vm2385 = vweird.f32 %v2367
      %vm2386 = vweird.f32 %v2379
      %vm2387 = vmor %vm2385, %vm2386
      %v2388 = vsel %vm2387, %v2379, %v2384
      %v2389 = vperm.slane %v2378, 0
      %v2390 = vperm.slane %v2388, 0
      %v2391 = vmul.f32 %v2267, %v2389
      %v2392 = vmul.f32 %v2268, %v2390
      %v2393 = vmul.f32 %v2269, %v2389
      %v2394 = vmul.f32 %v2270, %v2390
      %v2395 = vperm.slane %v2159, 1
      %v2396 = vperm.slane %v2159, 5
      %v2399 = vperm.slane %v2395, 1
      %v2400 = vperm.slane %v2396, 1
      %v2401 = vmul.f32 %v2391, %v2399
      %v2402 = vmul.f32 %v2392, %v2400
      %v2403 = vmul.f32 %v2393, %v2399
      %v2404 = vmul.f32 %v2394, %v2400
      %v2405 = vperm.slane %v2159, 2
      %v2406 = vperm.slane %v2159, 6
      %v2409 = vperm.slane %v2405, 2
      %v2410 = vperm.slane %v2406, 2
      %v2411 = vadd.f32 %v2401, %v2409
      %v2412 = vadd.f32 %v2402, %v2410
      %v2413 = vadd.f32 %v2403, %v2409
      %v2414 = vadd.f32 %v2404, %v2410
      %v2415 = vmax.f32 %v2411, 0.0
      %v2416 = vmax.f32 %v2412, 0.0
      %v2417 = vmax.f32 %v2413, 0.0
      %v2418 = vmax.f32 %v2414, 0.0
      %v2419 = vadd.f32 %v784, %v2415
      %v2420 = vadd.f32 %v785, %v2416
      %v2421 = vadd.f32 %v786, %v2417
      %v2422 = vadd.f32 %v787, %v2418
      %v2423 = vmul.f32 %v2419, 0.7072136
      %v2424 = vmul.f32 %v2420, 0.7072136
      %v2425 = vmul.f32 %v2421, 0.7072136
      %v2426 = vmul.f32 %v2422, 0.7072136
      %2427 = vst [vmem:[%s251] sm:$0xff] %v2423
      %2428 = vst [vmem:[%s251 + $0x8] sm:$0xff] %v2424
      %2429 = vst [vmem:[%s251 + $0x10] sm:$0xff] %v2425
      %2430 = vst [vmem:[%s251 + $0x18] sm:$0xff] %v2426
      %p2431 = scmp.lt.s32.totalorder %s17, 1
      %s2432 = scalar_select %p2431, %s17, 1
      %s2433 = smul.addr %s2432, 4
      %s2434 = smul.addr %s2433, 8
      %s2435 = scalar_lea.vmem %s6, %s2434
      // Predicated region
      $region45: #{conv3_forward.1} parent=43 // pred_check
        %p2436 = pneg %p166
      $region46: #{conv3_forward.1} parent=43 // pred_check_branch
        %2438 = sbr.rel (%p2436) target = $region48
      $region47: #{conv3_forward.1} parent=43 // pred_region
        _
      $region48: #{conv3_forward.1} parent=43 // pred_fallthru
        _
    $region44: #{conv3_forward.1} parent=5 // pred_fallthru
      _
    %p2439 = scmp.le.s32.totalorder 2, %s12
    // Predicated region
    $region49: #{conv3_forward.1} parent=5 // pred_check
      %p2440 = pneg %p2439
    $region50: #{conv3_forward.1} parent=5 // pred_check_branch
      %2442 = sbr.rel (%p2440) target = $region52
    $region51: #{conv3_forward.1} parent=5 // pred_region
      %s2443 = ssub.s32 %s12, 2
      // Predicated region
      $region53: #{conv3_forward.1} parent=51 // pred_check
        %p2444 = pneg %p172
      $region54: #{conv3_forward.1} parent=51 // pred_check_branch
        %2446 = sbr.rel (%p2444) target = $region56
      $region55: #{conv3_forward.1} parent=51 // pred_region
        %p2447 = scmp.lt.s32.totalorder %s18, 1
        %s2448 = scalar_select %p2447, %s18, 1
        %s2449 = smul.addr %s2448, 4
        %s2450 = smul.addr %s2449, 8
        %s2451 = scalar_lea.vmem %s6, %s2450
      $region56: #{conv3_forward.1} parent=51 // pred_fallthru
        _
    $region52: #{conv3_forward.1} parent=5 // pred_fallthru
      _
  $region6: #{conv3_forward.1} parent=0 // loop_footer
    %s16 = sadd.s32 1, %s12
  $region7: #{conv3_forward.1} parent=0 // loop_footer_branch
    %11 = sbr.rel target = $region3
  $region8: #{conv3_forward.1} parent=0 // loop_exit
    _

</llo_original>
